<compile_context>
chip_gen: v7x
topology: tpu7x:2x2x1
jax: 0.10.0
libtpu: 0.0.40
codegen_flags: <defaults>
</compile_context>

<pallas_src>
import functools

import jax
import jax.numpy as jnp
from jax.experimental import pallas as pl
from jax.experimental.pallas import tpu as pltpu


def _plastic_hebb_rollout_kernel(
    n_actions, n_steps,
    # inputs
    xs_ref, hid0_ref, hebb0_ref,
    i2h_w_ref, i2h_b_ref, w_ref, alpha_ref,
    head_w_ref, head_b_ref, eta_ref,
    # outputs
    head_out_ref, hid_out_ref, hebb_out_ref,
):
    # ---- hoist all loop-invariant loads / constants out of the time loop ----
    eta = eta_ref[0]                      # scalar from SMEM
    one_minus_eta = 1.0 - eta
    i2h_w = i2h_w_ref[...]                # (I, H)
    i2h_b = i2h_b_ref[...]                # (1, H)
    w = w_ref[...]                        # (H, H)
    alpha = alpha_ref[...]                # (H, H)
    head_w = head_w_ref[...]              # (H, P) fused [h2o | h2v | 0...]
    head_b = head_b_ref[...]              # (1, P)

    P = head_b.shape[-1]
    out_lane = jax.lax.broadcasted_iota(jnp.int32, (1, P), 1)
    act_mask = out_lane < n_actions       # lanes [0, A): softmax logits
    val_mask = out_lane == n_actions      # lane A: raw value passthrough

    hid = hid0_ref[...]                   # (1, H)
    hebb = hebb0_ref[...]                 # (H, H)

    # Fully-unrolled time loop (T is small & static) so the scheduler can
    # overlap independent work across adjacent steps.  State (hid, hebb) is a
    # handful of vregs, so live-range growth from unrolling is negligible.
    for t in range(n_steps):
        x = xs_ref[t]                     # (1, I) static slice, already in VMEM

        # Effective plastic recurrent weight: w + alpha * hebb (elementwise).
        w_eff = w + alpha * hebb
        pre = (
            jnp.dot(x, i2h_w, preferred_element_type=jnp.float32)
            + i2h_b
            + jnp.dot(hid, w_eff, preferred_element_type=jnp.float32)
        )
        h = jnp.tanh(pre)                 # (1, H)

        # Hebbian update: (1 - eta)*hebb + eta * outer(hidden_pre, h).
        # Single XLU transpose builds the (H, 1) column of the pre-update
        # hidden state; the outer product is then a VPU broadcast-multiply.
        hid_col = jnp.transpose(hid)      # (H, 1)
        hebb = one_minus_eta * hebb + eta * (hid_col * h)
        hid = h

        # Fused heads: one lane-dense matmul + one 128-lane store per step
        # into the VMEM-resident (T, 1, P) output (written back to HBM once).
        head = jnp.dot(h, head_w, preferred_element_type=jnp.float32) + head_b
        logits = jnp.where(act_mask, head, jnp.float32(-1e30))
        m = jnp.max(logits, axis=-1, keepdims=True)
        e = jnp.exp(logits - m)           # masked lanes underflow to 0
        # approx=False keeps the softmax row-sum exact to ~1e-7 (test at 1e-5).
        act = e * pl.reciprocal(jnp.sum(e, axis=-1, keepdims=True), approx=False)
        # lanes [0, A): softmax probs; lane A: raw value; lanes > A: zeros.
        head_out_ref[t] = jnp.where(val_mask, head, act)

    hid_out_ref[...] = hid
    hebb_out_ref[...] = hebb


def network_rollout(xs, hidden0, hebb0, params):
    """Run T steps of Network.forward (type='plastic', rule='hebb') in one kernel.

    xs: (T, 1, I); hidden0: (1, H); hebb0: (H, H). Weights pre-transposed (in, out).
    Returns (act_seq (T, A), val_seq (T, 1), hidden_T (1, H), hebb_T (H, H)).
    """
    T, _, I = xs.shape
    H = hidden0.shape[1]
    A = params["h2o_w"].shape[1]

    # Fuse the two heads into one lane-dense (H, 128) weight / (1, 128) bias.
    P = 128
    head_w = jnp.zeros((H, P), jnp.float32)
    head_w = head_w.at[:, :A].set(params["h2o_w"]).at[:, A:A + 1].set(params["h2v_w"])
    head_b = jnp.zeros((1, P), jnp.float32)
    head_b = head_b.at[:, :A].set(params["h2o_b"]).at[:, A:A + 1].set(params["h2v_b"])
    eta = jnp.reshape(params["eta"], (1,)).astype(jnp.float32)

    vmem = pl.BlockSpec(memory_space=pltpu.MemorySpace.VMEM)
    smem = pl.BlockSpec(memory_space=pltpu.MemorySpace.SMEM)

    in_specs = [
        vmem,   # xs         (T, 1, I) -- full rollout resident in VMEM
        vmem,   # hidden0    (1, H)
        vmem,   # hebb0      (H, H)
        vmem,   # i2h_w      (I, H)
        vmem,   # i2h_b      (1, H)
        vmem,   # w          (H, H)
        vmem,   # alpha      (H, H)
        vmem,   # head_w     (H, P)
        vmem,   # head_b     (1, P)
        smem,   # eta        (1,) scalar
    ]
    out_specs = (vmem, vmem, vmem)
    out_shape = (
        jax.ShapeDtypeStruct((T, 1, P), jnp.float32),   # per-step fused head out
        jax.ShapeDtypeStruct((1, H), jnp.float32),      # final hidden
        jax.ShapeDtypeStruct((H, H), jnp.float32),      # final hebb
    )

    head_seq, hid_T, hebb_T = pl.pallas_call(
        functools.partial(_plastic_hebb_rollout_kernel, A, T),
        in_specs=in_specs,
        out_specs=out_specs,
        out_shape=out_shape,
    )(xs, hidden0, hebb0,
      params["i2h_w"], params["i2h_b"], params["w"], params["alpha"],
      head_w, head_b, eta)

    act_seq = head_seq[:, 0, :A]
    val_seq = head_seq[:, 0, A:A + 1]
    return act_seq, val_seq, hid_T, hebb_T


def reference_step(x, hidden, hebb, p):
    """Pure-JAX single-step reference mirroring the PyTorch forward."""
    eta = p["eta"][0]
    h = jnp.tanh(x @ p["i2h_w"] + p["i2h_b"] + hidden @ (p["w"] + p["alpha"] * hebb))
    hebb_new = (1.0 - eta) * hebb + eta * (hidden.T @ h)
    act = jax.nn.softmax(h @ p["h2o_w"] + p["h2o_b"], axis=-1)
    val = h @ p["h2v_w"] + p["h2v_b"]
    return act, val, h, hebb_new


def reference_rollout(xs, hidden, hebb, p):
    acts, vals = [], []
    for t in range(xs.shape[0]):
        act, val, hidden, hebb = reference_step(xs[t], hidden, hebb, p)
        acts.append(act)
        vals.append(val)
    return jnp.concatenate(acts, 0), jnp.concatenate(vals, 0), hidden, hebb


if __name__ == "__main__":
    INPUT_SIZE = 16
    HIDDEN = 32
    N_ACTIONS = 4
    T_STEPS = 8

    key = jax.random.PRNGKey(0)
    keys = jax.random.split(key, 10)

    # Linear(in, out) in torch has weight (out, in); we store the transpose (in, out).
    params = {
        "i2h_w": jax.random.normal(keys[0], (INPUT_SIZE, HIDDEN), jnp.float32) * 0.1,
        "i2h_b": jax.random.normal(keys[1], (1, HIDDEN), jnp.float32) * 0.1,
        "w":     0.01 * jax.random.uniform(keys[2], (HIDDEN, HIDDEN), jnp.float32),
        "alpha": 0.01 * jax.random.uniform(keys[3], (HIDDEN, HIDDEN), jnp.float32),
        "eta":   jnp.full((1,), 0.01, jnp.float32),
        "h2o_w": jax.random.normal(keys[4], (HIDDEN, N_ACTIONS), jnp.float32) * 0.1,
        "h2o_b": jax.random.normal(keys[5], (1, N_ACTIONS), jnp.float32) * 0.1,
        "h2v_w": jax.random.normal(keys[6], (HIDDEN, 1), jnp.float32) * 0.1,
        "h2v_b": jax.random.normal(keys[7], (1, 1), jnp.float32) * 0.1,
    }

    # Rollout inputs: T steps of batch-1 row vectors; zero initial Hebbian trace.
    xs = jax.random.normal(keys[8], (T_STEPS, 1, INPUT_SIZE), jnp.float32)
    hidden0 = jax.random.normal(keys[9], (1, HIDDEN), jnp.float32) * 0.5
    hebb0 = jnp.zeros((HIDDEN, HIDDEN), jnp.float32)   # initialZeroHebb()

    act_seq, val_seq, hid_T, hebb_T = network_rollout(xs, hidden0, hebb0, params)
    jax.block_until_ready((act_seq, val_seq, hid_T, hebb_T))

    r_act, r_val, r_hid, r_hebb = reference_rollout(xs, hidden0, hebb0, params)
    assert jnp.allclose(act_seq, r_act, atol=1e-5), "activout mismatch"
    assert jnp.allclose(val_seq, r_val, atol=1e-5), "valueout mismatch"
    assert jnp.allclose(hid_T, r_hid, atol=1e-5), "hidden mismatch"
    assert jnp.allclose(hebb_T, r_hebb, atol=1e-5), "hebb mismatch"
    assert jnp.allclose(jnp.sum(act_seq, axis=-1), 1.0, atol=1e-5), "softmax rows must sum to 1"

    print("KERNEL_OK")
</pallas_src>

<mosaic_0001>
module attributes {stable_mosaic.version = 11 : i64} {
  func.func @_plastic_hebb_rollout_kernel(%arg0: memref<8x1x16xf32, #tpu.memory_space<vmem>>, %arg1: memref<1x32xf32, #tpu.memory_space<vmem>>, %arg2: memref<32x32xf32, #tpu.memory_space<vmem>>, %arg3: memref<16x32xf32, #tpu.memory_space<vmem>>, %arg4: memref<1x32xf32, #tpu.memory_space<vmem>>, %arg5: memref<32x32xf32, #tpu.memory_space<vmem>>, %arg6: memref<32x32xf32, #tpu.memory_space<vmem>>, %arg7: memref<32x128xf32, #tpu.memory_space<vmem>>, %arg8: memref<1x128xf32, #tpu.memory_space<vmem>>, %arg9: memref<1xf32, #tpu.memory_space<smem>>, %arg10: memref<8x1x128xf32, #tpu.memory_space<vmem>>, %arg11: memref<1x32xf32, #tpu.memory_space<vmem>>, %arg12: memref<32x32xf32, #tpu.memory_space<vmem>>) attributes {dimension_semantics = [], scalar_prefetch = 0 : i64, scratch_operands = 0 : i64, tpu.core_type = #tpu.core_type<tc>} {
    %c0 = arith.constant 0 : index
    %0 = memref.load %arg9[%c0] : memref<1xf32, #tpu.memory_space<smem>>
    %cst = arith.constant 1.000000e+00 : f32
    %1 = arith.subf %cst, %0 : f32
    %c0_0 = arith.constant 0 : index
    %c0_1 = arith.constant 0 : index
    %2 = vector.load %arg3[%c0_0, %c0_1] : memref<16x32xf32, #tpu.memory_space<vmem>>, vector<16x32xf32>
    %c0_2 = arith.constant 0 : index
    %c0_3 = arith.constant 0 : index
    %3 = vector.load %arg4[%c0_2, %c0_3] : memref<1x32xf32, #tpu.memory_space<vmem>>, vector<1x32xf32>
    %c0_4 = arith.constant 0 : index
    %c0_5 = arith.constant 0 : index
    %4 = vector.load %arg5[%c0_4, %c0_5] : memref<32x32xf32, #tpu.memory_space<vmem>>, vector<32x32xf32>
    %c0_6 = arith.constant 0 : index
    %c0_7 = arith.constant 0 : index
    %5 = vector.load %arg6[%c0_6, %c0_7] : memref<32x32xf32, #tpu.memory_space<vmem>>, vector<32x32xf32>
    %c0_8 = arith.constant 0 : index
    %c0_9 = arith.constant 0 : index
    %6 = vector.load %arg7[%c0_8, %c0_9] : memref<32x128xf32, #tpu.memory_space<vmem>>, vector<32x128xf32>
    %c0_10 = arith.constant 0 : index
    %c0_11 = arith.constant 0 : index
    %7 = vector.load %arg8[%c0_10, %c0_11] : memref<1x128xf32, #tpu.memory_space<vmem>>, vector<1x128xf32>
    %8 = tpu.iota {dimensions = array<i32: 1>} : vector<1x128xi32>
    %c4_i32 = arith.constant 4 : i32
    %9 = vector.broadcast %c4_i32 : i32 to vector<1x128xi32>
    %10 = arith.cmpi slt, %8, %9 : vector<1x128xi32>
    %c4_i32_12 = arith.constant 4 : i32
    %11 = vector.broadcast %c4_i32_12 : i32 to vector<1x128xi32>
    %12 = arith.cmpi eq, %8, %11 : vector<1x128xi32>
    %c0_13 = arith.constant 0 : index
    %c0_14 = arith.constant 0 : index
    %13 = vector.load %arg1[%c0_13, %c0_14] : memref<1x32xf32, #tpu.memory_space<vmem>>, vector<1x32xf32>
    %c0_15 = arith.constant 0 : index
    %c0_16 = arith.constant 0 : index
    %14 = vector.load %arg2[%c0_15, %c0_16] : memref<32x32xf32, #tpu.memory_space<vmem>>, vector<32x32xf32>
    %c0_17 = arith.constant 0 : index
    %c0_18 = arith.constant 0 : index
    %c0_19 = arith.constant 0 : index
    %15 = vector.load %arg0[%c0_17, %c0_18, %c0_19] : memref<8x1x16xf32, #tpu.memory_space<vmem>>, vector<1x1x16xf32>
    %16 = vector.shape_cast %15 : vector<1x1x16xf32> to vector<1x16xf32>
    %17 = arith.mulf %5, %14 : vector<32x32xf32>
    %18 = arith.addf %4, %17 : vector<32x32xf32>
    %cst_20 = arith.constant dense<0.000000e+00> : vector<1x32xf32>
    %19 = tpu.matmul %16, %2, %cst_20 {dimension_numbers = #tpu.dot_dimension_numbers<[1], [0], [0], [1], [0, 0, 1, 1], [], []>} : vector<1x16xf32>, vector<16x32xf32>, vector<1x32xf32> -> vector<1x32xf32>
    %20 = arith.addf %19, %3 : vector<1x32xf32>
    %cst_21 = arith.constant dense<0.000000e+00> : vector<1x32xf32>
    %21 = tpu.matmul %13, %18, %cst_21 {dimension_numbers = #tpu.dot_dimension_numbers<[1], [0], [0], [1], [0, 0, 1, 1], [], []>} : vector<1x32xf32>, vector<32x32xf32>, vector<1x32xf32> -> vector<1x32xf32>
    %22 = arith.addf %20, %21 : vector<1x32xf32>
    %23 = math.tanh %22 : vector<1x32xf32>
    %24 = tpu.transpose %13, [1, 0] : vector<1x32xf32> -> vector<32x1xf32>
    %25 = vector.broadcast %1 : f32 to vector<32x32xf32>
    %26 = arith.mulf %25, %14 : vector<32x32xf32>
    %27 = vector.broadcast %24 : vector<32x1xf32> to vector<32x32xf32>
    %28 = vector.broadcast %23 : vector<1x32xf32> to vector<32x32xf32>
    %29 = arith.mulf %27, %28 : vector<32x32xf32>
    %30 = vector.broadcast %0 : f32 to vector<32x32xf32>
    %31 = arith.mulf %30, %29 : vector<32x32xf32>
    %32 = arith.addf %26, %31 : vector<32x32xf32>
    %cst_22 = arith.constant dense<0.000000e+00> : vector<1x128xf32>
    %33 = tpu.matmul %23, %6, %cst_22 {dimension_numbers = #tpu.dot_dimension_numbers<[1], [0], [0], [1], [0, 0, 1, 1], [], []>} : vector<1x32xf32>, vector<32x128xf32>, vector<1x128xf32> -> vector<1x128xf32>
    %34 = arith.addf %33, %7 : vector<1x128xf32>
    %cst_23 = arith.constant -1.000000e+30 : f32
    %35 = vector.broadcast %cst_23 : f32 to vector<1x128xf32>
    %36 = arith.select %10, %34, %35 : vector<1x128xi1>, vector<1x128xf32>
    %cst_24 = arith.constant dense<0xFF800000> : vector<1xf32>
    %37 = vector.multi_reduction <maximumf>, %36, %cst_24 [1] : vector<1x128xf32> to vector<1xf32>
    %38 = vector.shape_cast %37 : vector<1xf32> to vector<1x1xf32>
    %39 = vector.broadcast %38 : vector<1x1xf32> to vector<1x128xf32>
    %40 = arith.subf %36, %39 : vector<1x128xf32>
    %41 = math.exp %40 : vector<1x128xf32>
    %cst_25 = arith.constant dense<0.000000e+00> : vector<1xf32>
    %42 = vector.multi_reduction <add>, %41, %cst_25 [1] : vector<1x128xf32> to vector<1xf32>
    %43 = vector.shape_cast %42 : vector<1xf32> to vector<1x1xf32>
    %44 = tpu.reciprocal %43 : vector<1x1xf32> -> vector<1x1xf32>
    %45 = vector.broadcast %44 : vector<1x1xf32> to vector<1x128xf32>
    %46 = arith.mulf %41, %45 : vector<1x128xf32>
    %47 = arith.select %12, %34, %46 : vector<1x128xi1>, vector<1x128xf32>
    %c0_26 = arith.constant 0 : index
    %c0_27 = arith.constant 0 : index
    %c0_28 = arith.constant 0 : index
    %48 = vector.load %arg10[%c0_26, %c0_27, %c0_28] : memref<8x1x128xf32, #tpu.memory_space<vmem>>, vector<1x1x128xf32>
    %49 = vector.shape_cast %48 : vector<1x1x128xf32> to vector<1x128xf32>
    %50 = vector.shape_cast %47 : vector<1x128xf32> to vector<1x1x128xf32>
    tpu.vector_store %arg10[%c0_26, %c0_27, %c0_28], %50 {strides = array<i32>} : memref<8x1x128xf32, #tpu.memory_space<vmem>>, vector<1x1x128xf32>,
    %c1 = arith.constant 1 : index
    %c0_29 = arith.constant 0 : index
    %c0_30 = arith.constant 0 : index
    %51 = vector.load %arg0[%c1, %c0_29, %c0_30] : memref<8x1x16xf32, #tpu.memory_space<vmem>>, vector<1x1x16xf32>
    %52 = vector.shape_cast %51 : vector<1x1x16xf32> to vector<1x16xf32>
    %53 = arith.mulf %5, %32 : vector<32x32xf32>
    %54 = arith.addf %4, %53 : vector<32x32xf32>
    %cst_31 = arith.constant dense<0.000000e+00> : vector<1x32xf32>
    %55 = tpu.matmul %52, %2, %cst_31 {dimension_numbers = #tpu.dot_dimension_numbers<[1], [0], [0], [1], [0, 0, 1, 1], [], []>} : vector<1x16xf32>, vector<16x32xf32>, vector<1x32xf32> -> vector<1x32xf32>
    %56 = arith.addf %55, %3 : vector<1x32xf32>
    %cst_32 = arith.constant dense<0.000000e+00> : vector<1x32xf32>
    %57 = tpu.matmul %23, %54, %cst_32 {dimension_numbers = #tpu.dot_dimension_numbers<[1], [0], [0], [1], [0, 0, 1, 1], [], []>} : vector<1x32xf32>, vector<32x32xf32>, vector<1x32xf32> -> vector<1x32xf32>
    %58 = arith.addf %56, %57 : vector<1x32xf32>
    %59 = math.tanh %58 : vector<1x32xf32>
    %60 = tpu.transpose %23, [1, 0] : vector<1x32xf32> -> vector<32x1xf32>
    %61 = vector.broadcast %1 : f32 to vector<32x32xf32>
    %62 = arith.mulf %61, %32 : vector<32x32xf32>
    %63 = vector.broadcast %60 : vector<32x1xf32> to vector<32x32xf32>
    %64 = vector.broadcast %59 : vector<1x32xf32> to vector<32x32xf32>
    %65 = arith.mulf %63, %64 : vector<32x32xf32>
    %66 = vector.broadcast %0 : f32 to vector<32x32xf32>
    %67 = arith.mulf %66, %65 : vector<32x32xf32>
    %68 = arith.addf %62, %67 : vector<32x32xf32>
    %cst_33 = arith.constant dense<0.000000e+00> : vector<1x128xf32>
    %69 = tpu.matmul %59, %6, %cst_33 {dimension_numbers = #tpu.dot_dimension_numbers<[1], [0], [0], [1], [0, 0, 1, 1], [], []>} : vector<1x32xf32>, vector<32x128xf32>, vector<1x128xf32> -> vector<1x128xf32>
    %70 = arith.addf %69, %7 : vector<1x128xf32>
    %cst_34 = arith.constant -1.000000e+30 : f32
    %71 = vector.broadcast %cst_34 : f32 to vector<1x128xf32>
    %72 = arith.select %10, %70, %71 : vector<1x128xi1>, vector<1x128xf32>
    %cst_35 = arith.constant dense<0xFF800000> : vector<1xf32>
    %73 = vector.multi_reduction <maximumf>, %72, %cst_35 [1] : vector<1x128xf32> to vector<1xf32>
    %74 = vector.shape_cast %73 : vector<1xf32> to vector<1x1xf32>
    %75 = vector.broadcast %74 : vector<1x1xf32> to vector<1x128xf32>
    %76 = arith.subf %72, %75 : vector<1x128xf32>
    %77 = math.exp %76 : vector<1x128xf32>
    %cst_36 = arith.constant dense<0.000000e+00> : vector<1xf32>
    %78 = vector.multi_reduction <add>, %77, %cst_36 [1] : vector<1x128xf32> to vector<1xf32>
    %79 = vector.shape_cast %78 : vector<1xf32> to vector<1x1xf32>
    %80 = tpu.reciprocal %79 : vector<1x1xf32> -> vector<1x1xf32>
    %81 = vector.broadcast %80 : vector<1x1xf32> to vector<1x128xf32>
    %82 = arith.mulf %77, %81 : vector<1x128xf32>
    %83 = arith.select %12, %70, %82 : vector<1x128xi1>, vector<1x128xf32>
    %c1_37 = arith.constant 1 : index
    %c0_38 = arith.constant 0 : index
    %c0_39 = arith.constant 0 : index
    %84 = vector.load %arg10[%c1_37, %c0_38, %c0_39] : memref<8x1x128xf32, #tpu.memory_space<vmem>>, vector<1x1x128xf32>
    %85 = vector.shape_cast %84 : vector<1x1x128xf32> to vector<1x128xf32>
    %86 = vector.shape_cast %83 : vector<1x128xf32> to vector<1x1x128xf32>
    tpu.vector_store %arg10[%c1_37, %c0_38, %c0_39], %86 {strides = array<i32>} : memref<8x1x128xf32, #tpu.memory_space<vmem>>, vector<1x1x128xf32>,
    %c2 = arith.constant 2 : index
    %c0_40 = arith.constant 0 : index
    %c0_41 = arith.constant 0 : index
    %87 = vector.load %arg0[%c2, %c0_40, %c0_41] : memref<8x1x16xf32, #tpu.memory_space<vmem>>, vector<1x1x16xf32>
    %88 = vector.shape_cast %87 : vector<1x1x16xf32> to vector<1x16xf32>
    %89 = arith.mulf %5, %68 : vector<32x32xf32>
    %90 = arith.addf %4, %89 : vector<32x32xf32>
    %cst_42 = arith.constant dense<0.000000e+00> : vector<1x32xf32>
    %91 = tpu.matmul %88, %2, %cst_42 {dimension_numbers = #tpu.dot_dimension_numbers<[1], [0], [0], [1], [0, 0, 1, 1], [], []>} : vector<1x16xf32>, vector<16x32xf32>, vector<1x32xf32> -> vector<1x32xf32>
    %92 = arith.addf %91, %3 : vector<1x32xf32>
    %cst_43 = arith.constant dense<0.000000e+00> : vector<1x32xf32>
    %93 = tpu.matmul %59, %90, %cst_43 {dimension_numbers = #tpu.dot_dimension_numbers<[1], [0], [0], [1], [0, 0, 1, 1], [], []>} : vector<1x32xf32>, vector<32x32xf32>, vector<1x32xf32> -> vector<1x32xf32>
    %94 = arith.addf %92, %93 : vector<1x32xf32>
    %95 = math.tanh %94 : vector<1x32xf32>
    %96 = tpu.transpose %59, [1, 0] : vector<1x32xf32> -> vector<32x1xf32>
    %97 = vector.broadcast %1 : f32 to vector<32x32xf32>
    %98 = arith.mulf %97, %68 : vector<32x32xf32>
    %99 = vector.broadcast %96 : vector<32x1xf32> to vector<32x32xf32>
    %100 = vector.broadcast %95 : vector<1x32xf32> to vector<32x32xf32>
    %101 = arith.mulf %99, %100 : vector<32x32xf32>
    %102 = vector.broadcast %0 : f32 to vector<32x32xf32>
    %103 = arith.mulf %102, %101 : vector<32x32xf32>
    %104 = arith.addf %98, %103 : vector<32x32xf32>
    %cst_44 = arith.constant dense<0.000000e+00> : vector<1x128xf32>
    %105 = tpu.matmul %95, %6, %cst_44 {dimension_numbers = #tpu.dot_dimension_numbers<[1], [0], [0], [1], [0, 0, 1, 1], [], []>} : vector<1x32xf32>, vector<32x128xf32>, vector<1x128xf32> -> vector<1x128xf32>
    %106 = arith.addf %105, %7 : vector<1x128xf32>
    %cst_45 = arith.constant -1.000000e+30 : f32
    %107 = vector.broadcast %cst_45 : f32 to vector<1x128xf32>
    %108 = arith.select %10, %106, %107 : vector<1x128xi1>, vector<1x128xf32>
    %cst_46 = arith.constant dense<0xFF800000> : vector<1xf32>
    %109 = vector.multi_reduction <maximumf>, %108, %cst_46 [1] : vector<1x128xf32> to vector<1xf32>
    %110 = vector.shape_cast %109 : vector<1xf32> to vector<1x1xf32>
    %111 = vector.broadcast %110 : vector<1x1xf32> to vector<1x128xf32>
    %112 = arith.subf %108, %111 : vector<1x128xf32>
    %113 = math.exp %112 : vector<1x128xf32>
    %cst_47 = arith.constant dense<0.000000e+00> : vector<1xf32>
    %114 = vector.multi_reduction <add>, %113, %cst_47 [1] : vector<1x128xf32> to vector<1xf32>
    %115 = vector.shape_cast %114 : vector<1xf32> to vector<1x1xf32>
    %116 = tpu.reciprocal %115 : vector<1x1xf32> -> vector<1x1xf32>
    %117 = vector.broadcast %116 : vector<1x1xf32> to vector<1x128xf32>
    %118 = arith.mulf %113, %117 : vector<1x128xf32>
    %119 = arith.select %12, %106, %118 : vector<1x128xi1>, vector<1x128xf32>
    %c2_48 = arith.constant 2 : index
    %c0_49 = arith.constant 0 : index
    %c0_50 = arith.constant 0 : index
    %120 = vector.load %arg10[%c2_48, %c0_49, %c0_50] : memref<8x1x128xf32, #tpu.memory_space<vmem>>, vector<1x1x128xf32>
    %121 = vector.shape_cast %120 : vector<1x1x128xf32> to vector<1x128xf32>
    %122 = vector.shape_cast %119 : vector<1x128xf32> to vector<1x1x128xf32>
    tpu.vector_store %arg10[%c2_48, %c0_49, %c0_50], %122 {strides = array<i32>} : memref<8x1x128xf32, #tpu.memory_space<vmem>>, vector<1x1x128xf32>,
    %c3 = arith.constant 3 : index
    %c0_51 = arith.constant 0 : index
    %c0_52 = arith.constant 0 : index
    %123 = vector.load %arg0[%c3, %c0_51, %c0_52] : memref<8x1x16xf32, #tpu.memory_space<vmem>>, vector<1x1x16xf32>
    %124 = vector.shape_cast %123 : vector<1x1x16xf32> to vector<1x16xf32>
    %125 = arith.mulf %5, %104 : vector<32x32xf32>
    %126 = arith.addf %4, %125 : vector<32x32xf32>
    %cst_53 = arith.constant dense<0.000000e+00> : vector<1x32xf32>
    %127 = tpu.matmul %124, %2, %cst_53 {dimension_numbers = #tpu.dot_dimension_numbers<[1], [0], [0], [1], [0, 0, 1, 1], [], []>} : vector<1x16xf32>, vector<16x32xf32>, vector<1x32xf32> -> vector<1x32xf32>
    %128 = arith.addf %127, %3 : vector<1x32xf32>
    %cst_54 = arith.constant dense<0.000000e+00> : vector<1x32xf32>
    %129 = tpu.matmul %95, %126, %cst_54 {dimension_numbers = #tpu.dot_dimension_numbers<[1], [0], [0], [1], [0, 0, 1, 1], [], []>} : vector<1x32xf32>, vector<32x32xf32>, vector<1x32xf32> -> vector<1x32xf32>
    %130 = arith.addf %128, %129 : vector<1x32xf32>
    %131 = math.tanh %130 : vector<1x32xf32>
    %132 = tpu.transpose %95, [1, 0] : vector<1x32xf32> -> vector<32x1xf32>
    %133 = vector.broadcast %1 : f32 to vector<32x32xf32>
    %134 = arith.mulf %133, %104 : vector<32x32xf32>
    %135 = vector.broadcast %132 : vector<32x1xf32> to vector<32x32xf32>
    %136 = vector.broadcast %131 : vector<1x32xf32> to vector<32x32xf32>
    %137 = arith.mulf %135, %136 : vector<32x32xf32>
    %138 = vector.broadcast %0 : f32 to vector<32x32xf32>
    %139 = arith.mulf %138, %137 : vector<32x32xf32>
    %140 = arith.addf %134, %139 : vector<32x32xf32>
    %cst_55 = arith.constant dense<0.000000e+00> : vector<1x128xf32>
    %141 = tpu.matmul %131, %6, %cst_55 {dimension_numbers = #tpu.dot_dimension_numbers<[1], [0], [0], [1], [0, 0, 1, 1], [], []>} : vector<1x32xf32>, vector<32x128xf32>, vector<1x128xf32> -> vector<1x128xf32>
    %142 = arith.addf %141, %7 : vector<1x128xf32>
    %cst_56 = arith.constant -1.000000e+30 : f32
    %143 = vector.broadcast %cst_56 : f32 to vector<1x128xf32>
    %144 = arith.select %10, %142, %143 : vector<1x128xi1>, vector<1x128xf32>
    %cst_57 = arith.constant dense<0xFF800000> : vector<1xf32>
    %145 = vector.multi_reduction <maximumf>, %144, %cst_57 [1] : vector<1x128xf32> to vector<1xf32>
    %146 = vector.shape_cast %145 : vector<1xf32> to vector<1x1xf32>
    %147 = vector.broadcast %146 : vector<1x1xf32> to vector<1x128xf32>
    %148 = arith.subf %144, %147 : vector<1x128xf32>
    %149 = math.exp %148 : vector<1x128xf32>
    %cst_58 = arith.constant dense<0.000000e+00> : vector<1xf32>
    %150 = vector.multi_reduction <add>, %149, %cst_58 [1] : vector<1x128xf32> to vector<1xf32>
    %151 = vector.shape_cast %150 : vector<1xf32> to vector<1x1xf32>
    %152 = tpu.reciprocal %151 : vector<1x1xf32> -> vector<1x1xf32>
    %153 = vector.broadcast %152 : vector<1x1xf32> to vector<1x128xf32>
    %154 = arith.mulf %149, %153 : vector<1x128xf32>
    %155 = arith.select %12, %142, %154 : vector<1x128xi1>, vector<1x128xf32>
    %c3_59 = arith.constant 3 : index
    %c0_60 = arith.constant 0 : index
    %c0_61 = arith.constant 0 : index
    %156 = vector.load %arg10[%c3_59, %c0_60, %c0_61] : memref<8x1x128xf32, #tpu.memory_space<vmem>>, vector<1x1x128xf32>
    %157 = vector.shape_cast %156 : vector<1x1x128xf32> to vector<1x128xf32>
    %158 = vector.shape_cast %155 : vector<1x128xf32> to vector<1x1x128xf32>
    tpu.vector_store %arg10[%c3_59, %c0_60, %c0_61], %158 {strides = array<i32>} : memref<8x1x128xf32, #tpu.memory_space<vmem>>, vector<1x1x128xf32>,
    %c4 = arith.constant 4 : index
    %c0_62 = arith.constant 0 : index
    %c0_63 = arith.constant 0 : index
    %159 = vector.load %arg0[%c4, %c0_62, %c0_63] : memref<8x1x16xf32, #tpu.memory_space<vmem>>, vector<1x1x16xf32>
    %160 = vector.shape_cast %159 : vector<1x1x16xf32> to vector<1x16xf32>
    %161 = arith.mulf %5, %140 : vector<32x32xf32>
    %162 = arith.addf %4, %161 : vector<32x32xf32>
    %cst_64 = arith.constant dense<0.000000e+00> : vector<1x32xf32>
    %163 = tpu.matmul %160, %2, %cst_64 {dimension_numbers = #tpu.dot_dimension_numbers<[1], [0], [0], [1], [0, 0, 1, 1], [], []>} : vector<1x16xf32>, vector<16x32xf32>, vector<1x32xf32> -> vector<1x32xf32>
    %164 = arith.addf %163, %3 : vector<1x32xf32>
    %cst_65 = arith.constant dense<0.000000e+00> : vector<1x32xf32>
    %165 = tpu.matmul %131, %162, %cst_65 {dimension_numbers = #tpu.dot_dimension_numbers<[1], [0], [0], [1], [0, 0, 1, 1], [], []>} : vector<1x32xf32>, vector<32x32xf32>, vector<1x32xf32> -> vector<1x32xf32>
    %166 = arith.addf %164, %165 : vector<1x32xf32>
    %167 = math.tanh %166 : vector<1x32xf32>
    %168 = tpu.transpose %131, [1, 0] : vector<1x32xf32> -> vector<32x1xf32>
    %169 = vector.broadcast %1 : f32 to vector<32x32xf32>
    %170 = arith.mulf %169, %140 : vector<32x32xf32>
    %171 = vector.broadcast %168 : vector<32x1xf32> to vector<32x32xf32>
    %172 = vector.broadcast %167 : vector<1x32xf32> to vector<32x32xf32>
    %173 = arith.mulf %171, %172 : vector<32x32xf32>
    %174 = vector.broadcast %0 : f32 to vector<32x32xf32>
    %175 = arith.mulf %174, %173 : vector<32x32xf32>
    %176 = arith.addf %170, %175 : vector<32x32xf32>
    %cst_66 = arith.constant dense<0.000000e+00> : vector<1x128xf32>
    %177 = tpu.matmul %167, %6, %cst_66 {dimension_numbers = #tpu.dot_dimension_numbers<[1], [0], [0], [1], [0, 0, 1, 1], [], []>} : vector<1x32xf32>, vector<32x128xf32>, vector<1x128xf32> -> vector<1x128xf32>
    %178 = arith.addf %177, %7 : vector<1x128xf32>
    %cst_67 = arith.constant -1.000000e+30 : f32
    %179 = vector.broadcast %cst_67 : f32 to vector<1x128xf32>
    %180 = arith.select %10, %178, %179 : vector<1x128xi1>, vector<1x128xf32>
    %cst_68 = arith.constant dense<0xFF800000> : vector<1xf32>
    %181 = vector.multi_reduction <maximumf>, %180, %cst_68 [1] : vector<1x128xf32> to vector<1xf32>
    %182 = vector.shape_cast %181 : vector<1xf32> to vector<1x1xf32>
    %183 = vector.broadcast %182 : vector<1x1xf32> to vector<1x128xf32>
    %184 = arith.subf %180, %183 : vector<1x128xf32>
    %185 = math.exp %184 : vector<1x128xf32>
    %cst_69 = arith.constant dense<0.000000e+00> : vector<1xf32>
    %186 = vector.multi_reduction <add>, %185, %cst_69 [1] : vector<1x128xf32> to vector<1xf32>
    %187 = vector.shape_cast %186 : vector<1xf32> to vector<1x1xf32>
    %188 = tpu.reciprocal %187 : vector<1x1xf32> -> vector<1x1xf32>
    %189 = vector.broadcast %188 : vector<1x1xf32> to vector<1x128xf32>
    %190 = arith.mulf %185, %189 : vector<1x128xf32>
    %191 = arith.select %12, %178, %190 : vector<1x128xi1>, vector<1x128xf32>
    %c4_70 = arith.constant 4 : index
    %c0_71 = arith.constant 0 : index
    %c0_72 = arith.constant 0 : index
    %192 = vector.load %arg10[%c4_70, %c0_71, %c0_72] : memref<8x1x128xf32, #tpu.memory_space<vmem>>, vector<1x1x128xf32>
    %193 = vector.shape_cast %192 : vector<1x1x128xf32> to vector<1x128xf32>
    %194 = vector.shape_cast %191 : vector<1x128xf32> to vector<1x1x128xf32>
    tpu.vector_store %arg10[%c4_70, %c0_71, %c0_72], %194 {strides = array<i32>} : memref<8x1x128xf32, #tpu.memory_space<vmem>>, vector<1x1x128xf32>,
    %c5 = arith.constant 5 : index
    %c0_73 = arith.constant 0 : index
    %c0_74 = arith.constant 0 : index
    %195 = vector.load %arg0[%c5, %c0_73, %c0_74] : memref<8x1x16xf32, #tpu.memory_space<vmem>>, vector<1x1x16xf32>
    %196 = vector.shape_cast %195 : vector<1x1x16xf32> to vector<1x16xf32>
    %197 = arith.mulf %5, %176 : vector<32x32xf32>
    %198 = arith.addf %4, %197 : vector<32x32xf32>
    %cst_75 = arith.constant dense<0.000000e+00> : vector<1x32xf32>
    %199 = tpu.matmul %196, %2, %cst_75 {dimension_numbers = #tpu.dot_dimension_numbers<[1], [0], [0], [1], [0, 0, 1, 1], [], []>} : vector<1x16xf32>, vector<16x32xf32>, vector<1x32xf32> -> vector<1x32xf32>
    %200 = arith.addf %199, %3 : vector<1x32xf32>
    %cst_76 = arith.constant dense<0.000000e+00> : vector<1x32xf32>
    %201 = tpu.matmul %167, %198, %cst_76 {dimension_numbers = #tpu.dot_dimension_numbers<[1], [0], [0], [1], [0, 0, 1, 1], [], []>} : vector<1x32xf32>, vector<32x32xf32>, vector<1x32xf32> -> vector<1x32xf32>
    %202 = arith.addf %200, %201 : vector<1x32xf32>
    %203 = math.tanh %202 : vector<1x32xf32>
    %204 = tpu.transpose %167, [1, 0] : vector<1x32xf32> -> vector<32x1xf32>
    %205 = vector.broadcast %1 : f32 to vector<32x32xf32>
    %206 = arith.mulf %205, %176 : vector<32x32xf32>
    %207 = vector.broadcast %204 : vector<32x1xf32> to vector<32x32xf32>
    %208 = vector.broadcast %203 : vector<1x32xf32> to vector<32x32xf32>
    %209 = arith.mulf %207, %208 : vector<32x32xf32>
    %210 = vector.broadcast %0 : f32 to vector<32x32xf32>
    %211 = arith.mulf %210, %209 : vector<32x32xf32>
    %212 = arith.addf %206, %211 : vector<32x32xf32>
    %cst_77 = arith.constant dense<0.000000e+00> : vector<1x128xf32>
    %213 = tpu.matmul %203, %6, %cst_77 {dimension_numbers = #tpu.dot_dimension_numbers<[1], [0], [0], [1], [0, 0, 1, 1], [], []>} : vector<1x32xf32>, vector<32x128xf32>, vector<1x128xf32> -> vector<1x128xf32>
    %214 = arith.addf %213, %7 : vector<1x128xf32>
    %cst_78 = arith.constant -1.000000e+30 : f32
    %215 = vector.broadcast %cst_78 : f32 to vector<1x128xf32>
    %216 = arith.select %10, %214, %215 : vector<1x128xi1>, vector<1x128xf32>
    %cst_79 = arith.constant dense<0xFF800000> : vector<1xf32>
    %217 = vector.multi_reduction <maximumf>, %216, %cst_79 [1] : vector<1x128xf32> to vector<1xf32>
    %218 = vector.shape_cast %217 : vector<1xf32> to vector<1x1xf32>
    %219 = vector.broadcast %218 : vector<1x1xf32> to vector<1x128xf32>
    %220 = arith.subf %216, %219 : vector<1x128xf32>
    %221 = math.exp %220 : vector<1x128xf32>
    %cst_80 = arith.constant dense<0.000000e+00> : vector<1xf32>
    %222 = vector.multi_reduction <add>, %221, %cst_80 [1] : vector<1x128xf32> to vector<1xf32>
    %223 = vector.shape_cast %222 : vector<1xf32> to vector<1x1xf32>
    %224 = tpu.reciprocal %223 : vector<1x1xf32> -> vector<1x1xf32>
    %225 = vector.broadcast %224 : vector<1x1xf32> to vector<1x128xf32>
    %226 = arith.mulf %221, %225 : vector<1x128xf32>
    %227 = arith.select %12, %214, %226 : vector<1x128xi1>, vector<1x128xf32>
    %c5_81 = arith.constant 5 : index
    %c0_82 = arith.constant 0 : index
    %c0_83 = arith.constant 0 : index
    %228 = vector.load %arg10[%c5_81, %c0_82, %c0_83] : memref<8x1x128xf32, #tpu.memory_space<vmem>>, vector<1x1x128xf32>
    %229 = vector.shape_cast %228 : vector<1x1x128xf32> to vector<1x128xf32>
    %230 = vector.shape_cast %227 : vector<1x128xf32> to vector<1x1x128xf32>
    tpu.vector_store %arg10[%c5_81, %c0_82, %c0_83], %230 {strides = array<i32>} : memref<8x1x128xf32, #tpu.memory_space<vmem>>, vector<1x1x128xf32>,
    %c6 = arith.constant 6 : index
    %c0_84 = arith.constant 0 : index
    %c0_85 = arith.constant 0 : index
    %231 = vector.load %arg0[%c6, %c0_84, %c0_85] : memref<8x1x16xf32, #tpu.memory_space<vmem>>, vector<1x1x16xf32>
    %232 = vector.shape_cast %231 : vector<1x1x16xf32> to vector<1x16xf32>
    %233 = arith.mulf %5, %212 : vector<32x32xf32>
    %234 = arith.addf %4, %233 : vector<32x32xf32>
    %cst_86 = arith.constant dense<0.000000e+00> : vector<1x32xf32>
    %235 = tpu.matmul %232, %2, %cst_86 {dimension_numbers = #tpu.dot_dimension_numbers<[1], [0], [0], [1], [0, 0, 1, 1], [], []>} : vector<1x16xf32>, vector<16x32xf32>, vector<1x32xf32> -> vector<1x32xf32>
    %236 = arith.addf %235, %3 : vector<1x32xf32>
    %cst_87 = arith.constant dense<0.000000e+00> : vector<1x32xf32>
    %237 = tpu.matmul %203, %234, %cst_87 {dimension_numbers = #tpu.dot_dimension_numbers<[1], [0], [0], [1], [0, 0, 1, 1], [], []>} : vector<1x32xf32>, vector<32x32xf32>, vector<1x32xf32> -> vector<1x32xf32>
    %238 = arith.addf %236, %237 : vector<1x32xf32>
    %239 = math.tanh %238 : vector<1x32xf32>
    %240 = tpu.transpose %203, [1, 0] : vector<1x32xf32> -> vector<32x1xf32>
    %241 = vector.broadcast %1 : f32 to vector<32x32xf32>
    %242 = arith.mulf %241, %212 : vector<32x32xf32>
    %243 = vector.broadcast %240 : vector<32x1xf32> to vector<32x32xf32>
    %244 = vector.broadcast %239 : vector<1x32xf32> to vector<32x32xf32>
    %245 = arith.mulf %243, %244 : vector<32x32xf32>
    %246 = vector.broadcast %0 : f32 to vector<32x32xf32>
    %247 = arith.mulf %246, %245 : vector<32x32xf32>
    %248 = arith.addf %242, %247 : vector<32x32xf32>
    %cst_88 = arith.constant dense<0.000000e+00> : vector<1x128xf32>
    %249 = tpu.matmul %239, %6, %cst_88 {dimension_numbers = #tpu.dot_dimension_numbers<[1], [0], [0], [1], [0, 0, 1, 1], [], []>} : vector<1x32xf32>, vector<32x128xf32>, vector<1x128xf32> -> vector<1x128xf32>
    %250 = arith.addf %249, %7 : vector<1x128xf32>
    %cst_89 = arith.constant -1.000000e+30 : f32
    %251 = vector.broadcast %cst_89 : f32 to vector<1x128xf32>
    %252 = arith.select %10, %250, %251 : vector<1x128xi1>, vector<1x128xf32>
    %cst_90 = arith.constant dense<0xFF800000> : vector<1xf32>
    %253 = vector.multi_reduction <maximumf>, %252, %cst_90 [1] : vector<1x128xf32> to vector<1xf32>
    %254 = vector.shape_cast %253 : vector<1xf32> to vector<1x1xf32>
    %255 = vector.broadcast %254 : vector<1x1xf32> to vector<1x128xf32>
    %256 = arith.subf %252, %255 : vector<1x128xf32>
    %257 = math.exp %256 : vector<1x128xf32>
    %cst_91 = arith.constant dense<0.000000e+00> : vector<1xf32>
    %258 = vector.multi_reduction <add>, %257, %cst_91 [1] : vector<1x128xf32> to vector<1xf32>
    %259 = vector.shape_cast %258 : vector<1xf32> to vector<1x1xf32>
    %260 = tpu.reciprocal %259 : vector<1x1xf32> -> vector<1x1xf32>
    %261 = vector.broadcast %260 : vector<1x1xf32> to vector<1x128xf32>
    %262 = arith.mulf %257, %261 : vector<1x128xf32>
    %263 = arith.select %12, %250, %262 : vector<1x128xi1>, vector<1x128xf32>
    %c6_92 = arith.constant 6 : index
    %c0_93 = arith.constant 0 : index
    %c0_94 = arith.constant 0 : index
    %264 = vector.load %arg10[%c6_92, %c0_93, %c0_94] : memref<8x1x128xf32, #tpu.memory_space<vmem>>, vector<1x1x128xf32>
    %265 = vector.shape_cast %264 : vector<1x1x128xf32> to vector<1x128xf32>
    %266 = vector.shape_cast %263 : vector<1x128xf32> to vector<1x1x128xf32>
    tpu.vector_store %arg10[%c6_92, %c0_93, %c0_94], %266 {strides = array<i32>} : memref<8x1x128xf32, #tpu.memory_space<vmem>>, vector<1x1x128xf32>,
    %c7 = arith.constant 7 : index
    %c0_95 = arith.constant 0 : index
    %c0_96 = arith.constant 0 : index
    %267 = vector.load %arg0[%c7, %c0_95, %c0_96] : memref<8x1x16xf32, #tpu.memory_space<vmem>>, vector<1x1x16xf32>
    %268 = vector.shape_cast %267 : vector<1x1x16xf32> to vector<1x16xf32>
    %269 = arith.mulf %5, %248 : vector<32x32xf32>
    %270 = arith.addf %4, %269 : vector<32x32xf32>
    %cst_97 = arith.constant dense<0.000000e+00> : vector<1x32xf32>
    %271 = tpu.matmul %268, %2, %cst_97 {dimension_numbers = #tpu.dot_dimension_numbers<[1], [0], [0], [1], [0, 0, 1, 1], [], []>} : vector<1x16xf32>, vector<16x32xf32>, vector<1x32xf32> -> vector<1x32xf32>
    %272 = arith.addf %271, %3 : vector<1x32xf32>
    %cst_98 = arith.constant dense<0.000000e+00> : vector<1x32xf32>
    %273 = tpu.matmul %239, %270, %cst_98 {dimension_numbers = #tpu.dot_dimension_numbers<[1], [0], [0], [1], [0, 0, 1, 1], [], []>} : vector<1x32xf32>, vector<32x32xf32>, vector<1x32xf32> -> vector<1x32xf32>
    %274 = arith.addf %272, %273 : vector<1x32xf32>
    %275 = math.tanh %274 : vector<1x32xf32>
    %276 = tpu.transpose %239, [1, 0] : vector<1x32xf32> -> vector<32x1xf32>
    %277 = vector.broadcast %1 : f32 to vector<32x32xf32>
    %278 = arith.mulf %277, %248 : vector<32x32xf32>
    %279 = vector.broadcast %276 : vector<32x1xf32> to vector<32x32xf32>
    %280 = vector.broadcast %275 : vector<1x32xf32> to vector<32x32xf32>
    %281 = arith.mulf %279, %280 : vector<32x32xf32>
    %282 = vector.broadcast %0 : f32 to vector<32x32xf32>
    %283 = arith.mulf %282, %281 : vector<32x32xf32>
    %284 = arith.addf %278, %283 : vector<32x32xf32>
    %cst_99 = arith.constant dense<0.000000e+00> : vector<1x128xf32>
    %285 = tpu.matmul %275, %6, %cst_99 {dimension_numbers = #tpu.dot_dimension_numbers<[1], [0], [0], [1], [0, 0, 1, 1], [], []>} : vector<1x32xf32>, vector<32x128xf32>, vector<1x128xf32> -> vector<1x128xf32>
    %286 = arith.addf %285, %7 : vector<1x128xf32>
    %cst_100 = arith.constant -1.000000e+30 : f32
    %287 = vector.broadcast %cst_100 : f32 to vector<1x128xf32>
    %288 = arith.select %10, %286, %287 : vector<1x128xi1>, vector<1x128xf32>
    %cst_101 = arith.constant dense<0xFF800000> : vector<1xf32>
    %289 = vector.multi_reduction <maximumf>, %288, %cst_101 [1] : vector<1x128xf32> to vector<1xf32>
    %290 = vector.shape_cast %289 : vector<1xf32> to vector<1x1xf32>
    %291 = vector.broadcast %290 : vector<1x1xf32> to vector<1x128xf32>
    %292 = arith.subf %288, %291 : vector<1x128xf32>
    %293 = math.exp %292 : vector<1x128xf32>
    %cst_102 = arith.constant dense<0.000000e+00> : vector<1xf32>
    %294 = vector.multi_reduction <add>, %293, %cst_102 [1] : vector<1x128xf32> to vector<1xf32>
    %295 = vector.shape_cast %294 : vector<1xf32> to vector<1x1xf32>
    %296 = tpu.reciprocal %295 : vector<1x1xf32> -> vector<1x1xf32>
    %297 = vector.broadcast %296 : vector<1x1xf32> to vector<1x128xf32>
    %298 = arith.mulf %293, %297 : vector<1x128xf32>
    %299 = arith.select %12, %286, %298 : vector<1x128xi1>, vector<1x128xf32>
    %c7_103 = arith.constant 7 : index
    %c0_104 = arith.constant 0 : index
    %c0_105 = arith.constant 0 : index
    %300 = vector.load %arg10[%c7_103, %c0_104, %c0_105] : memref<8x1x128xf32, #tpu.memory_space<vmem>>, vector<1x1x128xf32>
    %301 = vector.shape_cast %300 : vector<1x1x128xf32> to vector<1x128xf32>
    %302 = vector.shape_cast %299 : vector<1x128xf32> to vector<1x1x128xf32>
    tpu.vector_store %arg10[%c7_103, %c0_104, %c0_105], %302 {strides = array<i32>} : memref<8x1x128xf32, #tpu.memory_space<vmem>>, vector<1x1x128xf32>,
    %c0_106 = arith.constant 0 : index
    %c0_107 = arith.constant 0 : index
    %303 = vector.load %arg11[%c0_106, %c0_107] : memref<1x32xf32, #tpu.memory_space<vmem>>, vector<1x32xf32>
    tpu.vector_store %arg11[%c0_106, %c0_107], %275 {strides = array<i32>} : memref<1x32xf32, #tpu.memory_space<vmem>>, vector<1x32xf32>,
    %c0_108 = arith.constant 0 : index
    %c0_109 = arith.constant 0 : index
    %304 = vector.load %arg12[%c0_108, %c0_109] : memref<32x32xf32, #tpu.memory_space<vmem>>, vector<32x32xf32>
    tpu.vector_store %arg12[%c0_108, %c0_109], %284 {strides = array<i32>} : memref<32x32xf32, #tpu.memory_space<vmem>>, vector<32x32xf32>,
    return
  }
}

</mosaic_0001>

<llo_original>
// kernel: tpu_custom_call.1
$region0: #{tpu_custom_call.1}
  #allocation0 [shape = 'u32[]', space=smem, size = 0x4, offset = 0x4, fixed_abs, tag = 'smem constant byte address 0x4 - core index']
  #allocation1 [shape = 'u32[144,128]{1,0:T(1,128)}', space=vmem, size = 0x12000, scoped, tag = 'internal scratch']
  #allocation2 [shape = 'f32[1]{0:T(128)S(6)}', space=smem, size = 0x200, scoped, tag = 'scoped memory for tpu_custom_call.1']
  %s0 = inlined_call_operand.hbm [shape: f32[8,1,16], index: 0, kind: input, shape index: {}]
  %s1 = inlined_call_operand.vmem [shape: f32[1,32], index: 1, kind: input, shape index: {}]
  %s2 = inlined_call_operand.hbm [shape: f32[32,32], index: 2, kind: input, shape index: {}]
  %s3 = inlined_call_operand.hbm [shape: f32[16,32], index: 3, kind: input, shape index: {}]
  %s4 = inlined_call_operand.vmem [shape: f32[1,32], index: 4, kind: input, shape index: {}]
  %s5 = inlined_call_operand.hbm [shape: f32[32,32], index: 5, kind: input, shape index: {}]
  %s6 = inlined_call_operand.hbm [shape: f32[32,32], index: 6, kind: input, shape index: {}]
  %s7 = inlined_call_operand.hbm [shape: f32[32,128], index: 7, kind: input, shape index: {}]
  %s8 = inlined_call_operand.vmem [shape: f32[1,128], index: 8, kind: input, shape index: {}]
  %s9 = inlined_call_operand.<no memory space> [shape: f32[1], index: 9, kind: input, shape index: {}]
  %s10 = inlined_call_operand.hbm [shape: f32[8,1,128], index: 10, kind: output, shape index: {0}]
  %s11 = inlined_call_operand.hbm [shape: f32[1,32], index: 11, kind: output, shape index: {1}]
  %s12 = inlined_call_operand.hbm [shape: f32[32,32], index: 12, kind: output, shape index: {2}]
  %13 = xla_tuple %s10, %s11, %s12
  %s14 = sld [smem:[#allocation0]]
  $region90: #{tpu_custom_call.1} parent=0
    _
  %s16 = ssub.s32 1, %s14
  %s17 = scalar_select 0, %s16, %s14
  %18 = sst [smem:[#allocation2]] %s9
  $region1: #{tpu_custom_call.1} parent=0
    #allocation3 [shape = 'u8[4096]{0}', space=vmem, size = 0x1000, scoped, tag = 'input window, operand 0, single buffered']
    #allocation4 [shape = 's32[1]{0}', space=sflag, size = 0x4, scoped, tag = 'scoped memory for tpu_custom_call.1']
    #allocation5 [shape = 's32[1]{0}', space=sflag, size = 0x4, scoped, tag = 'scoped memory for tpu_custom_call.1']
    #allocation6 [shape = 'u8[16384]{0}', space=vmem, size = 0x4000, scoped, tag = 'input window, operand 2, single buffered']
    #allocation7 [shape = 's32[1]{0}', space=sflag, size = 0x4, scoped, tag = 'scoped memory for tpu_custom_call.1']
    #allocation8 [shape = 'u8[8192]{0}', space=vmem, size = 0x2000, scoped, tag = 'input window, operand 3, single buffered']
    #allocation9 [shape = 'u8[16384]{0}', space=vmem, size = 0x4000, scoped, tag = 'input window, operand 5, single buffered']
    #allocation10 [shape = 's32[1]{0}', space=sflag, size = 0x4, scoped, tag = 'scoped memory for tpu_custom_call.1']
    #allocation11 [shape = 'u8[16384]{0}', space=vmem, size = 0x4000, scoped, tag = 'input window, operand 6, single buffered']
    #allocation12 [shape = 'u8[16384]{0}', space=vmem, size = 0x4000, scoped, tag = 'input window, operand 7, single buffered']
    #allocation13 [shape = 's32[1]{0}', space=sflag, size = 0x4, scoped, tag = 'scoped memory for tpu_custom_call.1']
    #allocation14 [shape = 'u8[4096]{0}', space=vmem, size = 0x1000, scoped, tag = 'output window, operand 0, single buffered']
    #allocation15 [shape = 'u8[512]{0}', space=vmem, size = 0x400, scoped, tag = 'output window, operand 1, single buffered']
    #allocation16 [shape = 's32[1]{0}', space=sflag, size = 0x4, scoped, tag = 'scoped memory for tpu_custom_call.1']
    #allocation17 [shape = 'u8[16384]{0}', space=vmem, size = 0x4000, scoped, tag = 'output window, operand 2, single buffered']
    %19 = vsyncpa [#allocation4], 0
    %20 = vsyncpa [#allocation7], 0
    %21 = vsyncpa [#allocation10], 0
    %22 = vsyncpa [#allocation13], 0
    %23 = vsyncpa [#allocation5], 0
    %24 = vsyncpa [#allocation16], 0
    // Predicated region
    $region2: #{tpu_custom_call.1} parent=1 // pred_check
      _
    $region3: #{tpu_custom_call.1} parent=1 // pred_check_branch
      %26 = sbr.rel (0) target = $region5
    $region4: #{tpu_custom_call.1} parent=1 // pred_region
      %s28 = ssub.s32 128, 128
      %29 = vsyncadd [#allocation4], %s28
      %s30 = sshll.u32 [#allocation3], 4
      %s31 = int_to_ptr.vmem [resolvable:$true] %s30
      %36 = dma.hbm_to_vmem [thread:$0]  %s0, 128, %s31, [#allocation4], 16, 16, 1
    $region5: #{tpu_custom_call.1} parent=1 // pred_fallthru
      _
    // Predicated region
    $region6: #{tpu_custom_call.1} parent=1 // pred_check
      _
    $region7: #{tpu_custom_call.1} parent=1 // pred_check_branch
      %38 = sbr.rel (0) target = $region9
    $region8: #{tpu_custom_call.1} parent=1 // pred_region
      _
    $region9: #{tpu_custom_call.1} parent=1 // pred_fallthru
      _
    // Predicated region
    $region10: #{tpu_custom_call.1} parent=1 // pred_check
      _
    $region11: #{tpu_custom_call.1} parent=1 // pred_check_branch
      %40 = sbr.rel (0) target = $region13
    $region12: #{tpu_custom_call.1} parent=1 // pred_region
      %s42 = ssub.s32 512, 512
      %43 = vsyncadd [#allocation7], %s42
      %s44 = sshll.u32 [#allocation6], 4
      %s45 = int_to_ptr.vmem [resolvable:$true] %s44
      %50 = dma.hbm_to_vmem [thread:$0]  %s2, 512, %s45, [#allocation7], 128, 128, 8
    $region13: #{tpu_custom_call.1} parent=1 // pred_fallthru
      _
    // Predicated region
    $region14: #{tpu_custom_call.1} parent=1 // pred_check
      _
    $region15: #{tpu_custom_call.1} parent=1 // pred_check_branch
      %52 = sbr.rel (0) target = $region17
    $region16: #{tpu_custom_call.1} parent=1 // pred_region
      %s54 = ssub.s32 256, 256
      %55 = vsyncadd [#allocation7], %s54
      %s56 = sshll.u32 [#allocation8], 4
      %s57 = int_to_ptr.vmem [resolvable:$true] %s56
      %62 = dma.hbm_to_vmem [thread:$0]  %s3, 256, %s57, [#allocation7], 128, 128, 8
    $region17: #{tpu_custom_call.1} parent=1 // pred_fallthru
      _
    // Predicated region
    $region18: #{tpu_custom_call.1} parent=1 // pred_check
      _
    $region19: #{tpu_custom_call.1} parent=1 // pred_check_branch
      %64 = sbr.rel (0) target = $region21
    $region20: #{tpu_custom_call.1} parent=1 // pred_region
      _
    $region21: #{tpu_custom_call.1} parent=1 // pred_fallthru
      _
    // Predicated region
    $region22: #{tpu_custom_call.1} parent=1 // pred_check
      _
    $region23: #{tpu_custom_call.1} parent=1 // pred_check_branch
      %66 = sbr.rel (0) target = $region25
    $region24: #{tpu_custom_call.1} parent=1 // pred_region
      %s68 = ssub.s32 512, 512
      %69 = vsyncadd [#allocation10], %s68
      %s70 = sshll.u32 [#allocation9], 4
      %s71 = int_to_ptr.vmem [resolvable:$true] %s70
      %76 = dma.hbm_to_vmem [thread:$0]  %s5, 512, %s71, [#allocation10], 128, 128, 8
    $region25: #{tpu_custom_call.1} parent=1 // pred_fallthru
      _
    // Predicated region
    $region26: #{tpu_custom_call.1} parent=1 // pred_check
      _
    $region27: #{tpu_custom_call.1} parent=1 // pred_check_branch
      %78 = sbr.rel (0) target = $region29
    $region28: #{tpu_custom_call.1} parent=1 // pred_region
      %s80 = ssub.s32 512, 512
      %81 = vsyncadd [#allocation10], %s80
      %s82 = sshll.u32 [#allocation11], 4
      %s83 = int_to_ptr.vmem [resolvable:$true] %s82
      %88 = dma.hbm_to_vmem [thread:$0]  %s6, 512, %s83, [#allocation10], 128, 128, 8
    $region29: #{tpu_custom_call.1} parent=1 // pred_fallthru
      _
    // Predicated region
    $region30: #{tpu_custom_call.1} parent=1 // pred_check
      _
    $region31: #{tpu_custom_call.1} parent=1 // pred_check_branch
      %90 = sbr.rel (0) target = $region33
    $region32: #{tpu_custom_call.1} parent=1 // pred_region
      %s92 = ssub.s32 512, 512
      %93 = vsyncadd [#allocation13], %s92
      %s94 = sshll.u32 [#allocation12], 4
      %s95 = int_to_ptr.vmem [resolvable:$true] %s94
      %100 = dma.hbm_to_vmem [thread:$0]  %s7, 512, %s95, [#allocation13], 128, 128, 8
    $region33: #{tpu_custom_call.1} parent=1 // pred_fallthru
      _
    // Predicated region
    $region34: #{tpu_custom_call.1} parent=1 // pred_check
      _
    $region35: #{tpu_custom_call.1} parent=1 // pred_check_branch
      %102 = sbr.rel (0) target = $region37
    $region36: #{tpu_custom_call.1} parent=1 // pred_region
      _
    $region37: #{tpu_custom_call.1} parent=1 // pred_fallthru
      _
    // Predicated region
    $region38: #{tpu_custom_call.1} parent=1 // pred_check
      _
    $region39: #{tpu_custom_call.1} parent=1 // pred_check_branch
      %104 = sbr.rel (0) target = $region41
    $region40: #{tpu_custom_call.1} parent=1 // pred_region
      _
    $region41: #{tpu_custom_call.1} parent=1 // pred_fallthru
      _
    // Predicated region
    $region42: #{tpu_custom_call.1} parent=1 // pred_check
      _
    $region43: #{tpu_custom_call.1} parent=1 // pred_check_branch
      %106 = sbr.rel (0) target = $region45
    $region44: #{tpu_custom_call.1} parent=1 // pred_region
      %107 = dma.done [#allocation4], 128
    $region45: #{tpu_custom_call.1} parent=1 // pred_fallthru
      _
    // Predicated region
    $region46: #{tpu_custom_call.1} parent=1 // pred_check
      _
    $region47: #{tpu_custom_call.1} parent=1 // pred_check_branch
      %109 = sbr.rel (0) target = $region49
    $region48: #{tpu_custom_call.1} parent=1 // pred_region
      %110 = dma.done [#allocation7], 512
    $region49: #{tpu_custom_call.1} parent=1 // pred_fallthru
      _
    // Predicated region
    $region50: #{tpu_custom_call.1} parent=1 // pred_check
      _
    $region51: #{tpu_custom_call.1} parent=1 // pred_check_branch
      %112 = sbr.rel (0) target = $region53
    $region52: #{tpu_custom_call.1} parent=1 // pred_region
      %113 = dma.done [#allocation7], 256
    $region53: #{tpu_custom_call.1} parent=1 // pred_fallthru
      _
    // Predicated region
    $region54: #{tpu_custom_call.1} parent=1 // pred_check
      _
    $region55: #{tpu_custom_call.1} parent=1 // pred_check_branch
      %115 = sbr.rel (0) target = $region57
    $region56: #{tpu_custom_call.1} parent=1 // pred_region
      %116 = dma.done [#allocation10], 512
    $region57: #{tpu_custom_call.1} parent=1 // pred_fallthru
      _
    // Predicated region
    $region58: #{tpu_custom_call.1} parent=1 // pred_check
      _
    $region59: #{tpu_custom_call.1} parent=1 // pred_check_branch
      %118 = sbr.rel (0) target = $region61
    $region60: #{tpu_custom_call.1} parent=1 // pred_region
      %119 = dma.done [#allocation10], 512
    $region61: #{tpu_custom_call.1} parent=1 // pred_fallthru
      _
    // Predicated region
    $region62: #{tpu_custom_call.1} parent=1 // pred_check
      _
    $region63: #{tpu_custom_call.1} parent=1 // pred_check_branch
      %121 = sbr.rel (0) target = $region65
    $region64: #{tpu_custom_call.1} parent=1 // pred_region
      %122 = dma.done [#allocation13], 512
    $region65: #{tpu_custom_call.1} parent=1 // pred_fallthru
      _
    %s123 = sld [smem:[#allocation2]]
    %s124 = ssub.f32 1.0, %s123
    %v125 = vld [vmem:[#allocation8] sm:$0xff]
    %v126 = vld [vmem:[#allocation8 + $0x8] sm:$0xff]
    %v127 = vld [vmem:[%s4] sm:$0x1]
    %v128 = vld [vmem:[#allocation9] sm:$0xff]
    %v129 = vld [vmem:[#allocation9 + $0x8] sm:$0xff]
    %v130 = vld [vmem:[#allocation9 + $0x10] sm:$0xff]
    %v131 = vld [vmem:[#allocation9 + $0x18] sm:$0xff]
    %v132 = vld [vmem:[#allocation11] sm:$0xff]
    %v133 = vld [vmem:[#allocation11 + $0x8] sm:$0xff]
    %v134 = vld [vmem:[#allocation11 + $0x10] sm:$0xff]
    %v135 = vld [vmem:[#allocation11 + $0x18] sm:$0xff]
    %v136 = vld [vmem:[#allocation12] sm:$0xff]
    %v137 = vld [vmem:[#allocation12 + $0x8] sm:$0xff]
    %v138 = vld [vmem:[#allocation12 + $0x10] sm:$0xff]
    %v139 = vld [vmem:[#allocation12 + $0x18] sm:$0xff]
    %v140 = vld [vmem:[%s8] sm:$0x1]
    %v141 = vlaneseq
    %v142 = vand.u32 %v141, 127
    %vm143 = vcmp.lt.s32.totalorder %v142, 4
    %vm144 = vcmp.eq.s32.totalorder %v142, 4
    %v145 = vld [vmem:[%s1] sm:$0x1]
    %v146 = vld [vmem:[#allocation6] sm:$0xff]
    %v147 = vld [vmem:[#allocation6 + $0x8] sm:$0xff]
    %v148 = vld [vmem:[#allocation6 + $0x10] sm:$0xff]
    %v149 = vld [vmem:[#allocation6 + $0x18] sm:$0xff]
    %v150 = vld [vmem:[#allocation3] sm:$0x1]
    %v151 = vmul.f32 %v132, %v146
    %v152 = vmul.f32 %v133, %v147
    %v153 = vmul.f32 %v134, %v148
    %v154 = vmul.f32 %v135, %v149
    %v155 = vadd.f32 %v128, %v151
    %v156 = vadd.f32 %v129, %v152
    %v157 = vadd.f32 %v130, %v153
    %v158 = vadd.f32 %v131, %v154
    %vm159 = vcmask 130048
    %v161 = vsel %vm159, %v150, 0
    %163 = vmatprep.subr.mxu0 0.0
    %164 = vmatpush1.msra.mxu0 %v125
    %165 = vmatprep.subr.mxu0 0.0
    %166 = vmatpush1.msra.mxu0 %v126
    %167 = vmatprep.subr.mxu0 0.0
    %168 = vmatpush1.msra.mxu0 0.0
    %169 = vmatprep.subr.mxu0 0.0
    %170 = vmatpush1.msra.mxu0 0.0
    %171 = vmatprep.subr.mxu0 0.0
    %172 = vmatpush1.msra.mxu0 0.0
    %173 = vmatprep.subr.mxu0 0.0
    %174 = vmatpush1.msra.mxu0 0.0
    %175 = vmatprep.subr.mxu0 0.0
    %176 = vmatpush1.msra.mxu0 0.0
    %177 = vmatprep.subr.mxu0 0.0
    %178 = vmatpush1.msra.mxu0 0.0
    %179 = vmatprep.subr.mxu0 0.0
    %180 = vmatpush1.msra.mxu0 0.0
    %181 = vmatprep.subr.mxu0 0.0
    %182 = vmatpush1.msra.mxu0 0.0
    %183 = vmatprep.subr.mxu0 0.0
    %184 = vmatpush1.msra.mxu0 0.0
    %185 = vmatprep.subr.mxu0 0.0
    %186 = vmatpush1.msra.mxu0 0.0
    %187 = vmatprep.subr.mxu0 0.0
    %188 = vmatpush1.msra.mxu0 0.0
    %189 = vmatprep.subr.mxu0 0.0
    %190 = vmatpush1.msra.mxu0 0.0
    %191 = vmatprep.subr.mxu0 0.0
    %192 = vmatpush1.msra.mxu0 0.0
    %193 = vmatprep.subr.mxu0 0.0
    %194 = vmatpush1.msra.mxu0 0.0
    %195 = vmatprep.subr.mxu0 0.0
    %196 = vmatpush1.msra.mxu0 0.0
    %197 = vmatprep.subr.mxu0 0.0
    %198 = vmatpush1.msra.mxu0 0.0
    %199 = vmatprep.subr.mxu0 0.0
    %200 = vmatpush1.msra.mxu0 0.0
    %201 = vmatprep.subr.mxu0 0.0
    %202 = vmatpush1.msra.mxu0 0.0
    %203 = vmatprep.subr.mxu0 0.0
    %204 = vmatpush1.msra.mxu0 0.0
    %205 = vmatprep.subr.mxu0 0.0
    %206 = vmatpush1.msra.mxu0 0.0
    %207 = vmatprep.subr.mxu0 0.0
    %208 = vmatpush1.msra.mxu0 0.0
    %209 = vmatprep.subr.mxu0 0.0
    %210 = vmatpush1.msra.mxu0 0.0
    %211 = vmatprep.subr.mxu0 0.0
    %212 = vmatpush1.msra.mxu0 0.0
    %213 = vmatprep.subr.mxu0 0.0
    %214 = vmatpush1.msra.mxu0 0.0
    %215 = vmatprep.subr.mxu0 0.0
    %216 = vmatpush1.msra.mxu0 0.0
    %217 = vmatprep.subr.mxu0 0.0
    %218 = vmatpush1.msra.mxu0 0.0
    %219 = vmatprep.subr.mxu0 0.0
    %220 = vmatpush1.msra.mxu0 0.0
    %221 = vmatprep.subr.mxu0 0.0
    %222 = vmatpush1.msra.mxu0 0.0
    %223 = vmatprep.subr.mxu0 0.0
    %224 = vmatpush1.msra.mxu0 0.0
    %225 = vmatprep.subr.mxu0 0.0
    %226 = vmatpush1.msra.mxu0 0.0
    %227 = vmatprep.mubr.f32.mxu0 0.0
    %228 = vmatmul.mubr.f32.gmra.mrb[0].mxu0 %v161
    %v229 = vpop.f32.mrb[0].mxu0
    %v230 = vadd.f32 %v127, %v229
    %v231 = vpop.f32.mrb[0].mxu0
    %232 = vdwg.mxu0
    %vm233 = vcmask 261120
    %v235 = vsel %vm233, %v145, 0
    %237 = vmatprep.subr.mxu0 0.0
    %238 = vmatpush1.msra.mxu0 %v155
    %239 = vmatprep.subr.mxu0 0.0
    %240 = vmatpush1.msra.mxu0 %v156
    %241 = vmatprep.subr.mxu0 0.0
    %242 = vmatpush1.msra.mxu0 %v157
    %243 = vmatprep.subr.mxu0 0.0
    %244 = vmatpush1.msra.mxu0 %v158
    %245 = vmatprep.subr.mxu0 0.0
    %246 = vmatpush1.msra.mxu0 0.0
    %247 = vmatprep.subr.mxu0 0.0
    %248 = vmatpush1.msra.mxu0 0.0
    %249 = vmatprep.subr.mxu0 0.0
    %250 = vmatpush1.msra.mxu0 0.0
    %251 = vmatprep.subr.mxu0 0.0
    %252 = vmatpush1.msra.mxu0 0.0
    %253 = vmatprep.subr.mxu0 0.0
    %254 = vmatpush1.msra.mxu0 0.0
    %255 = vmatprep.subr.mxu0 0.0
    %256 = vmatpush1.msra.mxu0 0.0
    %257 = vmatprep.subr.mxu0 0.0
    %258 = vmatpush1.msra.mxu0 0.0
    %259 = vmatprep.subr.mxu0 0.0
    %260 = vmatpush1.msra.mxu0 0.0
    %261 = vmatprep.subr.mxu0 0.0
    %262 = vmatpush1.msra.mxu0 0.0
    %263 = vmatprep.subr.mxu0 0.0
    %264 = vmatpush1.msra.mxu0 0.0
    %265 = vmatprep.subr.mxu0 0.0
    %266 = vmatpush1.msra.mxu0 0.0
    %267 = vmatprep.subr.mxu0 0.0
    %268 = vmatpush1.msra.mxu0 0.0
    %269 = vmatprep.subr.mxu0 0.0
    %270 = vmatpush1.msra.mxu0 0.0
    %271 = vmatprep.subr.mxu0 0.0
    %272 = vmatpush1.msra.mxu0 0.0
    %273 = vmatprep.subr.mxu0 0.0
    %274 = vmatpush1.msra.mxu0 0.0
    %275 = vmatprep.subr.mxu0 0.0
    %276 = vmatpush1.msra.mxu0 0.0
    %277 = vmatprep.subr.mxu0 0.0
    %278 = vmatpush1.msra.mxu0 0.0
    %279 = vmatprep.subr.mxu0 0.0
    %280 = vmatpush1.msra.mxu0 0.0
    %281 = vmatprep.subr.mxu0 0.0
    %282 = vmatpush1.msra.mxu0 0.0
    %283 = vmatprep.subr.mxu0 0.0
    %284 = vmatpush1.msra.mxu0 0.0
    %285 = vmatprep.subr.mxu0 0.0
    %286 = vmatpush1.msra.mxu0 0.0
    %287 = vmatprep.subr.mxu0 0.0
    %288 = vmatpush1.msra.mxu0 0.0
    %289 = vmatprep.subr.mxu0 0.0
    %290 = vmatpush1.msra.mxu0 0.0
    %291 = vmatprep.subr.mxu0 0.0
    %292 = vmatpush1.msra.mxu0 0.0
    %293 = vmatprep.subr.mxu0 0.0
    %294 = vmatpush1.msra.mxu0 0.0
    %295 = vmatprep.subr.mxu0 0.0
    %296 = vmatpush1.msra.mxu0 0.0
    %297 = vmatprep.subr.mxu0 0.0
    %298 = vmatpush1.msra.mxu0 0.0
    %299 = vmatprep.subr.mxu0 0.0
    %300 = vmatpush1.msra.mxu0 0.0
    %301 = vmatprep.mubr.f32.mxu0 0.0
    %302 = vmatmul.mubr.f32.gmra.mrb[0].mxu0 %v235
    %v303 = vpop.f32.mrb[0].mxu0
    %v304 = vadd.f32 0.0, %v303
    %v305 = vpop.f32.mrb[0].mxu0
    %306 = vdwg.mxu0
    %v307 = vadd.f32 %v230, %v304
    %v308 = vtanh.pop %v307
    %309 = vxpose.xlu0.b32.start [1/16] %v145, 128
    %310 = vxpose.xlu0.b32.cont [2/16] 0.0, 128
    %311 = vxpose.xlu0.b32.cont [3/16] 0.0, 128
    %312 = vxpose.xlu0.b32.cont [4/16] 0.0, 128
    %313 = vxpose.xlu0.b32.cont [5/16] 0.0, 128
    %314 = vxpose.xlu0.b32.cont [6/16] 0.0, 128
    %315 = vxpose.xlu0.b32.cont [7/16] 0.0, 128
    %316 = vxpose.xlu0.b32.cont [8/16] 0.0, 128
    %317 = vxpose.xlu0.b32.cont [9/16] 0.0, 128
    %318 = vxpose.xlu0.b32.cont [10/16] 0.0, 128
    %319 = vxpose.xlu0.b32.cont [11/16] 0.0, 128
    %320 = vxpose.xlu0.b32.cont [12/16] 0.0, 128
    %321 = vxpose.xlu0.b32.cont [13/16] 0.0, 128
    %322 = vxpose.xlu0.b32.cont [14/16] 0.0, 128
    %323 = vxpose.xlu0.b32.cont [15/16] 0.0, 128
    %324 = vxpose.xlu0.b32.end [16/16] 0.0, 128
    %v325 = vpop.trf.xlu0
    %v326 = vpop.trf.xlu0
    %v327 = vpop.trf.xlu0
    %v328 = vpop.trf.xlu0
    %v329 = vpop.trf.xlu0
    %v330 = vpop.trf.xlu0
    %v331 = vpop.trf.xlu0
    %v332 = vpop.trf.xlu0
    %v333 = vpop.trf.xlu0
    %v334 = vpop.trf.xlu0
    %v335 = vpop.trf.xlu0
    %v336 = vpop.trf.xlu0
    %v337 = vpop.trf.xlu0
    %v338 = vpop.trf.xlu0
    %v339 = vpop.trf.xlu0
    %v340 = vpop.trf.xlu0
    %v341 = vstv %s124
    %v342 = vmul.f32 %v341, %v146
    %v343 = vmul.f32 %v341, %v147
    %v344 = vmul.f32 %v341, %v148
    %v345 = vmul.f32 %v341, %v149
    %347 = vset.pattern.permute.xlu0 0
    %348 = vperm.xlu0 %347, %v325
    %v349 = vpop.permute.xlu0 %348
    %352 = vset.pattern.permute.xlu0 0
    %353 = vperm.xlu0 %352, %v326
    %v354 = vpop.permute.xlu0 %353
    %357 = vset.pattern.permute.xlu0 0
    %358 = vperm.xlu0 %357, %v327
    %v359 = vpop.permute.xlu0 %358
    %362 = vset.pattern.permute.xlu0 0
    %363 = vperm.xlu0 %362, %v328
    %v364 = vpop.permute.xlu0 %363
    %v366 = vlaneseq
    %v367 = vshrl.u32 %v366, 7
    %v368 = vsub.s32 0, %v367
    %v369 = vrot.slane %v308, %v368
    %v370 = vmul.f32 %v349, %v369
    %v371 = vmul.f32 %v354, %v369
    %v372 = vmul.f32 %v359, %v369
    %v373 = vmul.f32 %v364, %v369
    %v374 = vstv %s123
    %v375 = vmul.f32 %v374, %v370
    %v376 = vmul.f32 %v374, %v371
    %v377 = vmul.f32 %v374, %v372
    %v378 = vmul.f32 %v374, %v373
    %v379 = vadd.f32 %v342, %v375
    %v380 = vadd.f32 %v343, %v376
    %v381 = vadd.f32 %v344, %v377
    %v382 = vadd.f32 %v345, %v378
    %v384 = vsel %vm233, %v308, 0
    %386 = vmatprep.subr.mxu0 0.0
    %387 = vmatpush1.msra.mxu0 %v136
    %388 = vmatprep.subr.mxu0 0.0
    %389 = vmatpush1.msra.mxu0 %v137
    %390 = vmatprep.subr.mxu0 0.0
    %391 = vmatpush1.msra.mxu0 %v138
    %392 = vmatprep.subr.mxu0 0.0
    %393 = vmatpush1.msra.mxu0 %v139
    %394 = vmatprep.subr.mxu0 0.0
    %395 = vmatpush1.msra.mxu0 0.0
    %396 = vmatprep.subr.mxu0 0.0
    %397 = vmatpush1.msra.mxu0 0.0
    %398 = vmatprep.subr.mxu0 0.0
    %399 = vmatpush1.msra.mxu0 0.0
    %400 = vmatprep.subr.mxu0 0.0
    %401 = vmatpush1.msra.mxu0 0.0
    %402 = vmatprep.subr.mxu0 0.0
    %403 = vmatpush1.msra.mxu0 0.0
    %404 = vmatprep.subr.mxu0 0.0
    %405 = vmatpush1.msra.mxu0 0.0
    %406 = vmatprep.subr.mxu0 0.0
    %407 = vmatpush1.msra.mxu0 0.0
    %408 = vmatprep.subr.mxu0 0.0
    %409 = vmatpush1.msra.mxu0 0.0
    %410 = vmatprep.subr.mxu0 0.0
    %411 = vmatpush1.msra.mxu0 0.0
    %412 = vmatprep.subr.mxu0 0.0
    %413 = vmatpush1.msra.mxu0 0.0
    %414 = vmatprep.subr.mxu0 0.0
    %415 = vmatpush1.msra.mxu0 0.0
    %416 = vmatprep.subr.mxu0 0.0
    %417 = vmatpush1.msra.mxu0 0.0
    %418 = vmatprep.subr.mxu0 0.0
    %419 = vmatpush1.msra.mxu0 0.0
    %420 = vmatprep.subr.mxu0 0.0
    %421 = vmatpush1.msra.mxu0 0.0
    %422 = vmatprep.subr.mxu0 0.0
    %423 = vmatpush1.msra.mxu0 0.0
    %424 = vmatprep.subr.mxu0 0.0
    %425 = vmatpush1.msra.mxu0 0.0
    %426 = vmatprep.subr.mxu0 0.0
    %427 = vmatpush1.msra.mxu0 0.0
    %428 = vmatprep.subr.mxu0 0.0
    %429 = vmatpush1.msra.mxu0 0.0
    %430 = vmatprep.subr.mxu0 0.0
    %431 = vmatpush1.msra.mxu0 0.0
    %432 = vmatprep.subr.mxu0 0.0
    %433 = vmatpush1.msra.mxu0 0.0
    %434 = vmatprep.subr.mxu0 0.0
    %435 = vmatpush1.msra.mxu0 0.0
    %436 = vmatprep.subr.mxu0 0.0
    %437 = vmatpush1.msra.mxu0 0.0
    %438 = vmatprep.subr.mxu0 0.0
    %439 = vmatpush1.msra.mxu0 0.0
    %440 = vmatprep.subr.mxu0 0.0
    %441 = vmatpush1.msra.mxu0 0.0
    %442 = vmatprep.subr.mxu0 0.0
    %443 = vmatpush1.msra.mxu0 0.0
    %444 = vmatprep.subr.mxu0 0.0
    %445 = vmatpush1.msra.mxu0 0.0
    %446 = vmatprep.subr.mxu0 0.0
    %447 = vmatpush1.msra.mxu0 0.0
    %448 = vmatprep.subr.mxu0 0.0
    %449 = vmatpush1.msra.mxu0 0.0
    %450 = vmatprep.mubr.f32.mxu0 0.0
    %451 = vmatmul.mubr.f32.gmra.mrb[0].mxu0 %v384
    %v452 = vpop.f32.mrb[0].mxu0
    %v453 = vadd.f32 %v140, %v452
    %v454 = vpop.f32.mrb[0].mxu0
    %455 = vdwg.mxu0
    %v456 = vsel %vm143, %v453, -1e+30
    %vm457 = vcmask 1040384
    %v458 = vsel %vm457, %v456, -inf
    %459 = vmax.xlane.f32.xlu0 %v458
    %v460 = vpop.xlane.xlu0 %459
    %v461 = vsub.f32 %v456, %v460
    %v462 = vmul.f32 %v461, 1.442695
    %v463 = vpow.pop %v462
    %v464 = vsel %vm457, %v463, 0.0
    %465 = vadd.xlane.f32.xlu0 %v464
    %v466 = vpop.xlane.xlu0 %465
    %v467 = vrcp.pop %v466
    %v468 = vmul.f32 %v463, %v467
    %v469 = vsel %vm144, %v453, %v468
    %470 = vst [vmem:[#allocation14] sm:$0x1] %v469
    %s471 = scalar_lea.vmem [#allocation3], 1
    %v472 = vld [vmem:[%s471] sm:$0x1]
    %v473 = vmul.f32 %v132, %v379
    %v474 = vmul.f32 %v133, %v380
    %v475 = vmul.f32 %v134, %v381
    %v476 = vmul.f32 %v135, %v382
    %v477 = vadd.f32 %v128, %v473
    %v478 = vadd.f32 %v129, %v474
    %v479 = vadd.f32 %v130, %v475
    %v480 = vadd.f32 %v131, %v476
    %v482 = vsel %vm159, %v472, 0
    %484 = vmatprep.subr.mxu0 0.0
    %485 = vmatpush1.msra.mxu0 %v125
    %486 = vmatprep.subr.mxu0 0.0
    %487 = vmatpush1.msra.mxu0 %v126
    %488 = vmatprep.subr.mxu0 0.0
    %489 = vmatpush1.msra.mxu0 0.0
    %490 = vmatprep.subr.mxu0 0.0
    %491 = vmatpush1.msra.mxu0 0.0
    %492 = vmatprep.subr.mxu0 0.0
    %493 = vmatpush1.msra.mxu0 0.0
    %494 = vmatprep.subr.mxu0 0.0
    %495 = vmatpush1.msra.mxu0 0.0
    %496 = vmatprep.subr.mxu0 0.0
    %497 = vmatpush1.msra.mxu0 0.0
    %498 = vmatprep.subr.mxu0 0.0
    %499 = vmatpush1.msra.mxu0 0.0
    %500 = vmatprep.subr.mxu0 0.0
    %501 = vmatpush1.msra.mxu0 0.0
    %502 = vmatprep.subr.mxu0 0.0
    %503 = vmatpush1.msra.mxu0 0.0
    %504 = vmatprep.subr.mxu0 0.0
    %505 = vmatpush1.msra.mxu0 0.0
    %506 = vmatprep.subr.mxu0 0.0
    %507 = vmatpush1.msra.mxu0 0.0
    %508 = vmatprep.subr.mxu0 0.0
    %509 = vmatpush1.msra.mxu0 0.0
    %510 = vmatprep.subr.mxu0 0.0
    %511 = vmatpush1.msra.mxu0 0.0
    %512 = vmatprep.subr.mxu0 0.0
    %513 = vmatpush1.msra.mxu0 0.0
    %514 = vmatprep.subr.mxu0 0.0
    %515 = vmatpush1.msra.mxu0 0.0
    %516 = vmatprep.subr.mxu0 0.0
    %517 = vmatpush1.msra.mxu0 0.0
    %518 = vmatprep.subr.mxu0 0.0
    %519 = vmatpush1.msra.mxu0 0.0
    %520 = vmatprep.subr.mxu0 0.0
    %521 = vmatpush1.msra.mxu0 0.0
    %522 = vmatprep.subr.mxu0 0.0
    %523 = vmatpush1.msra.mxu0 0.0
    %524 = vmatprep.subr.mxu0 0.0
    %525 = vmatpush1.msra.mxu0 0.0
    %526 = vmatprep.subr.mxu0 0.0
    %527 = vmatpush1.msra.mxu0 0.0
    %528 = vmatprep.subr.mxu0 0.0
    %529 = vmatpush1.msra.mxu0 0.0
    %530 = vmatprep.subr.mxu0 0.0
    %531 = vmatpush1.msra.mxu0 0.0
    %532 = vmatprep.subr.mxu0 0.0
    %533 = vmatpush1.msra.mxu0 0.0
    %534 = vmatprep.subr.mxu0 0.0
    %535 = vmatpush1.msra.mxu0 0.0
    %536 = vmatprep.subr.mxu0 0.0
    %537 = vmatpush1.msra.mxu0 0.0
    %538 = vmatprep.subr.mxu0 0.0
    %539 = vmatpush1.msra.mxu0 0.0
    %540 = vmatprep.subr.mxu0 0.0
    %541 = vmatpush1.msra.mxu0 0.0
    %542 = vmatprep.subr.mxu0 0.0
    %543 = vmatpush1.msra.mxu0 0.0
    %544 = vmatprep.subr.mxu0 0.0
    %545 = vmatpush1.msra.mxu0 0.0
    %546 = vmatprep.subr.mxu0 0.0
    %547 = vmatpush1.msra.mxu0 0.0
    %548 = vmatprep.mubr.f32.mxu0 0.0
    %549 = vmatmul.mubr.f32.gmra.mrb[0].mxu0 %v482
    %v550 = vpop.f32.mrb[0].mxu0
    %v551 = vadd.f32 %v127, %v550
    %v552 = vpop.f32.mrb[0].mxu0
    %553 = vdwg.mxu0
    %554 = vmatprep.subr.mxu0 0.0
    %555 = vmatpush1.msra.mxu0 %v477
    %556 = vmatprep.subr.mxu0 0.0
    %557 = vmatpush1.msra.mxu0 %v478
    %558 = vmatprep.subr.mxu0 0.0
    %559 = vmatpush1.msra.mxu0 %v479
    %560 = vmatprep.subr.mxu0 0.0
    %561 = vmatpush1.msra.mxu0 %v480
    %562 = vmatprep.subr.mxu0 0.0
    %563 = vmatpush1.msra.mxu0 0.0
    %564 = vmatprep.subr.mxu0 0.0
    %565 = vmatpush1.msra.mxu0 0.0
    %566 = vmatprep.subr.mxu0 0.0
    %567 = vmatpush1.msra.mxu0 0.0
    %568 = vmatprep.subr.mxu0 0.0
    %569 = vmatpush1.msra.mxu0 0.0
    %570 = vmatprep.subr.mxu0 0.0
    %571 = vmatpush1.msra.mxu0 0.0
    %572 = vmatprep.subr.mxu0 0.0
    %573 = vmatpush1.msra.mxu0 0.0
    %574 = vmatprep.subr.mxu0 0.0
    %575 = vmatpush1.msra.mxu0 0.0
    %576 = vmatprep.subr.mxu0 0.0
    %577 = vmatpush1.msra.mxu0 0.0
    %578 = vmatprep.subr.mxu0 0.0
    %579 = vmatpush1.msra.mxu0 0.0
    %580 = vmatprep.subr.mxu0 0.0
    %581 = vmatpush1.msra.mxu0 0.0
    %582 = vmatprep.subr.mxu0 0.0
    %583 = vmatpush1.msra.mxu0 0.0
    %584 = vmatprep.subr.mxu0 0.0
    %585 = vmatpush1.msra.mxu0 0.0
    %586 = vmatprep.subr.mxu0 0.0
    %587 = vmatpush1.msra.mxu0 0.0
    %588 = vmatprep.subr.mxu0 0.0
    %589 = vmatpush1.msra.mxu0 0.0
    %590 = vmatprep.subr.mxu0 0.0
    %591 = vmatpush1.msra.mxu0 0.0
    %592 = vmatprep.subr.mxu0 0.0
    %593 = vmatpush1.msra.mxu0 0.0
    %594 = vmatprep.subr.mxu0 0.0
    %595 = vmatpush1.msra.mxu0 0.0
    %596 = vmatprep.subr.mxu0 0.0
    %597 = vmatpush1.msra.mxu0 0.0
    %598 = vmatprep.subr.mxu0 0.0
    %599 = vmatpush1.msra.mxu0 0.0
    %600 = vmatprep.subr.mxu0 0.0
    %601 = vmatpush1.msra.mxu0 0.0
    %602 = vmatprep.subr.mxu0 0.0
    %603 = vmatpush1.msra.mxu0 0.0
    %604 = vmatprep.subr.mxu0 0.0
    %605 = vmatpush1.msra.mxu0 0.0
    %606 = vmatprep.subr.mxu0 0.0
    %607 = vmatpush1.msra.mxu0 0.0
    %608 = vmatprep.subr.mxu0 0.0
    %609 = vmatpush1.msra.mxu0 0.0
    %610 = vmatprep.subr.mxu0 0.0
    %611 = vmatpush1.msra.mxu0 0.0
    %612 = vmatprep.subr.mxu0 0.0
    %613 = vmatpush1.msra.mxu0 0.0
    %614 = vmatprep.subr.mxu0 0.0
    %615 = vmatpush1.msra.mxu0 0.0
    %616 = vmatprep.subr.mxu0 0.0
    %617 = vmatpush1.msra.mxu0 0.0
    %618 = vmatprep.mubr.f32.mxu0 0.0
    %619 = vmatmul.mubr.f32.gmra.mrb[0].mxu0 %v384
    %v620 = vpop.f32.mrb[0].mxu0
    %v621 = vadd.f32 0.0, %v620
    %v622 = vpop.f32.mrb[0].mxu0
    %623 = vdwg.mxu0
    %v624 = vadd.f32 %v551, %v621
    %v625 = vtanh.pop %v624
    %626 = vxpose.xlu0.b32.start [1/16] %v308, 128
    %627 = vxpose.xlu0.b32.cont [2/16] 0.0, 128
    %628 = vxpose.xlu0.b32.cont [3/16] 0.0, 128
    %629 = vxpose.xlu0.b32.cont [4/16] 0.0, 128
    %630 = vxpose.xlu0.b32.cont [5/16] 0.0, 128
    %631 = vxpose.xlu0.b32.cont [6/16] 0.0, 128
    %632 = vxpose.xlu0.b32.cont [7/16] 0.0, 128
    %633 = vxpose.xlu0.b32.cont [8/16] 0.0, 128
    %634 = vxpose.xlu0.b32.cont [9/16] 0.0, 128
    %635 = vxpose.xlu0.b32.cont [10/16] 0.0, 128
    %636 = vxpose.xlu0.b32.cont [11/16] 0.0, 128
    %637 = vxpose.xlu0.b32.cont [12/16] 0.0, 128
    %638 = vxpose.xlu0.b32.cont [13/16] 0.0, 128
    %639 = vxpose.xlu0.b32.cont [14/16] 0.0, 128
    %640 = vxpose.xlu0.b32.cont [15/16] 0.0, 128
    %641 = vxpose.xlu0.b32.end [16/16] 0.0, 128
    %v642 = vpop.trf.xlu0
    %v643 = vpop.trf.xlu0
    %v644 = vpop.trf.xlu0
    %v645 = vpop.trf.xlu0
    %v646 = vpop.trf.xlu0
    %v647 = vpop.trf.xlu0
    %v648 = vpop.trf.xlu0
    %v649 = vpop.trf.xlu0
    %v650 = vpop.trf.xlu0
    %v651 = vpop.trf.xlu0
    %v652 = vpop.trf.xlu0
    %v653 = vpop.trf.xlu0
    %v654 = vpop.trf.xlu0
    %v655 = vpop.trf.xlu0
    %v656 = vpop.trf.xlu0
    %v657 = vpop.trf.xlu0
    %v658 = vmul.f32 %v341, %v379
    %v659 = vmul.f32 %v341, %v380
    %v660 = vmul.f32 %v341, %v381
    %v661 = vmul.f32 %v341, %v382
    %663 = vset.pattern.permute.xlu0 0
    %664 = vperm.xlu0 %663, %v642
    %v665 = vpop.permute.xlu0 %664
    %668 = vset.pattern.permute.xlu0 0
    %669 = vperm.xlu0 %668, %v643
    %v670 = vpop.permute.xlu0 %669
    %673 = vset.pattern.permute.xlu0 0
    %674 = vperm.xlu0 %673, %v644
    %v675 = vpop.permute.xlu0 %674
    %678 = vset.pattern.permute.xlu0 0
    %679 = vperm.xlu0 %678, %v645
    %v680 = vpop.permute.xlu0 %679
    %v682 = vlaneseq
    %v683 = vshrl.u32 %v682, 7
    %v684 = vsub.s32 0, %v683
    %v685 = vrot.slane %v625, %v684
    %v686 = vmul.f32 %v665, %v685
    %v687 = vmul.f32 %v670, %v685
    %v688 = vmul.f32 %v675, %v685
    %v689 = vmul.f32 %v680, %v685
    %v690 = vmul.f32 %v374, %v686
    %v691 = vmul.f32 %v374, %v687
    %v692 = vmul.f32 %v374, %v688
    %v693 = vmul.f32 %v374, %v689
    %v694 = vadd.f32 %v658, %v690
    %v695 = vadd.f32 %v659, %v691
    %v696 = vadd.f32 %v660, %v692
    %v697 = vadd.f32 %v661, %v693
    %v699 = vsel %vm233, %v625, 0
    %701 = vmatprep.subr.mxu0 0.0
    %702 = vmatpush1.msra.mxu0 %v136
    %703 = vmatprep.subr.mxu0 0.0
    %704 = vmatpush1.msra.mxu0 %v137
    %705 = vmatprep.subr.mxu0 0.0
    %706 = vmatpush1.msra.mxu0 %v138
    %707 = vmatprep.subr.mxu0 0.0
    %708 = vmatpush1.msra.mxu0 %v139
    %709 = vmatprep.subr.mxu0 0.0
    %710 = vmatpush1.msra.mxu0 0.0
    %711 = vmatprep.subr.mxu0 0.0
    %712 = vmatpush1.msra.mxu0 0.0
    %713 = vmatprep.subr.mxu0 0.0
    %714 = vmatpush1.msra.mxu0 0.0
    %715 = vmatprep.subr.mxu0 0.0
    %716 = vmatpush1.msra.mxu0 0.0
    %717 = vmatprep.subr.mxu0 0.0
    %718 = vmatpush1.msra.mxu0 0.0
    %719 = vmatprep.subr.mxu0 0.0
    %720 = vmatpush1.msra.mxu0 0.0
    %721 = vmatprep.subr.mxu0 0.0
    %722 = vmatpush1.msra.mxu0 0.0
    %723 = vmatprep.subr.mxu0 0.0
    %724 = vmatpush1.msra.mxu0 0.0
    %725 = vmatprep.subr.mxu0 0.0
    %726 = vmatpush1.msra.mxu0 0.0
    %727 = vmatprep.subr.mxu0 0.0
    %728 = vmatpush1.msra.mxu0 0.0
    %729 = vmatprep.subr.mxu0 0.0
    %730 = vmatpush1.msra.mxu0 0.0
    %731 = vmatprep.subr.mxu0 0.0
    %732 = vmatpush1.msra.mxu0 0.0
    %733 = vmatprep.subr.mxu0 0.0
    %734 = vmatpush1.msra.mxu0 0.0
    %735 = vmatprep.subr.mxu0 0.0
    %736 = vmatpush1.msra.mxu0 0.0
    %737 = vmatprep.subr.mxu0 0.0
    %738 = vmatpush1.msra.mxu0 0.0
    %739 = vmatprep.subr.mxu0 0.0
    %740 = vmatpush1.msra.mxu0 0.0
    %741 = vmatprep.subr.mxu0 0.0
    %742 = vmatpush1.msra.mxu0 0.0
    %743 = vmatprep.subr.mxu0 0.0
    %744 = vmatpush1.msra.mxu0 0.0
    %745 = vmatprep.subr.mxu0 0.0
    %746 = vmatpush1.msra.mxu0 0.0
    %747 = vmatprep.subr.mxu0 0.0
    %748 = vmatpush1.msra.mxu0 0.0
    %749 = vmatprep.subr.mxu0 0.0
    %750 = vmatpush1.msra.mxu0 0.0
    %751 = vmatprep.subr.mxu0 0.0
    %752 = vmatpush1.msra.mxu0 0.0
    %753 = vmatprep.subr.mxu0 0.0
    %754 = vmatpush1.msra.mxu0 0.0
    %755 = vmatprep.subr.mxu0 0.0
    %756 = vmatpush1.msra.mxu0 0.0
    %757 = vmatprep.subr.mxu0 0.0
    %758 = vmatpush1.msra.mxu0 0.0
    %759 = vmatprep.subr.mxu0 0.0
    %760 = vmatpush1.msra.mxu0 0.0
    %761 = vmatprep.subr.mxu0 0.0
    %762 = vmatpush1.msra.mxu0 0.0
    %763 = vmatprep.subr.mxu0 0.0
    %764 = vmatpush1.msra.mxu0 0.0
    %765 = vmatprep.mubr.f32.mxu0 0.0
    %766 = vmatmul.mubr.f32.gmra.mrb[0].mxu0 %v699
    %v767 = vpop.f32.mrb[0].mxu0
    %v768 = vadd.f32 %v140, %v767
    %v769 = vpop.f32.mrb[0].mxu0
    %770 = vdwg.mxu0
    %v771 = vsel %vm143, %v768, -1e+30
    %v772 = vsel %vm457, %v771, -inf
    %773 = vmax.xlane.f32.xlu0 %v772
    %v774 = vpop.xlane.xlu0 %773
    %v775 = vsub.f32 %v771, %v774
    %v776 = vmul.f32 %v775, 1.442695
    %v777 = vpow.pop %v776
    %v778 = vsel %vm457, %v777, 0.0
    %779 = vadd.xlane.f32.xlu0 %v778
    %v780 = vpop.xlane.xlu0 %779
    %v781 = vrcp.pop %v780
    %v782 = vmul.f32 %v777, %v781
    %v783 = vsel %vm144, %v768, %v782
    %s784 = scalar_lea.vmem [#allocation14], 1
    %785 = vst [vmem:[%s784] sm:$0x1] %v783
    %s786 = scalar_lea.vmem [#allocation3], 2
    %v787 = vld [vmem:[%s786] sm:$0x1]
    %v788 = vmul.f32 %v132, %v694
    %v789 = vmul.f32 %v133, %v695
    %v790 = vmul.f32 %v134, %v696
    %v791 = vmul.f32 %v135, %v697
    %v792 = vadd.f32 %v128, %v788
    %v793 = vadd.f32 %v129, %v789
    %v794 = vadd.f32 %v130, %v790
    %v795 = vadd.f32 %v131, %v791
    %v797 = vsel %vm159, %v787, 0
    %799 = vmatprep.subr.mxu0 0.0
    %800 = vmatpush1.msra.mxu0 %v125
    %801 = vmatprep.subr.mxu0 0.0
    %802 = vmatpush1.msra.mxu0 %v126
    %803 = vmatprep.subr.mxu0 0.0
    %804 = vmatpush1.msra.mxu0 0.0
    %805 = vmatprep.subr.mxu0 0.0
    %806 = vmatpush1.msra.mxu0 0.0
    %807 = vmatprep.subr.mxu0 0.0
    %808 = vmatpush1.msra.mxu0 0.0
    %809 = vmatprep.subr.mxu0 0.0
    %810 = vmatpush1.msra.mxu0 0.0
    %811 = vmatprep.subr.mxu0 0.0
    %812 = vmatpush1.msra.mxu0 0.0
    %813 = vmatprep.subr.mxu0 0.0
    %814 = vmatpush1.msra.mxu0 0.0
    %815 = vmatprep.subr.mxu0 0.0
    %816 = vmatpush1.msra.mxu0 0.0
    %817 = vmatprep.subr.mxu0 0.0
    %818 = vmatpush1.msra.mxu0 0.0
    %819 = vmatprep.subr.mxu0 0.0
    %820 = vmatpush1.msra.mxu0 0.0
    %821 = vmatprep.subr.mxu0 0.0
    %822 = vmatpush1.msra.mxu0 0.0
    %823 = vmatprep.subr.mxu0 0.0
    %824 = vmatpush1.msra.mxu0 0.0
    %825 = vmatprep.subr.mxu0 0.0
    %826 = vmatpush1.msra.mxu0 0.0
    %827 = vmatprep.subr.mxu0 0.0
    %828 = vmatpush1.msra.mxu0 0.0
    %829 = vmatprep.subr.mxu0 0.0
    %830 = vmatpush1.msra.mxu0 0.0
    %831 = vmatprep.subr.mxu0 0.0
    %832 = vmatpush1.msra.mxu0 0.0
    %833 = vmatprep.subr.mxu0 0.0
    %834 = vmatpush1.msra.mxu0 0.0
    %835 = vmatprep.subr.mxu0 0.0
    %836 = vmatpush1.msra.mxu0 0.0
    %837 = vmatprep.subr.mxu0 0.0
    %838 = vmatpush1.msra.mxu0 0.0
    %839 = vmatprep.subr.mxu0 0.0
    %840 = vmatpush1.msra.mxu0 0.0
    %841 = vmatprep.subr.mxu0 0.0
    %842 = vmatpush1.msra.mxu0 0.0
    %843 = vmatprep.subr.mxu0 0.0
    %844 = vmatpush1.msra.mxu0 0.0
    %845 = vmatprep.subr.mxu0 0.0
    %846 = vmatpush1.msra.mxu0 0.0
    %847 = vmatprep.subr.mxu0 0.0
    %848 = vmatpush1.msra.mxu0 0.0
    %849 = vmatprep.subr.mxu0 0.0
    %850 = vmatpush1.msra.mxu0 0.0
    %851 = vmatprep.subr.mxu0 0.0
    %852 = vmatpush1.msra.mxu0 0.0
    %853 = vmatprep.subr.mxu0 0.0
    %854 = vmatpush1.msra.mxu0 0.0
    %855 = vmatprep.subr.mxu0 0.0
    %856 = vmatpush1.msra.mxu0 0.0
    %857 = vmatprep.subr.mxu0 0.0
    %858 = vmatpush1.msra.mxu0 0.0
    %859 = vmatprep.subr.mxu0 0.0
    %860 = vmatpush1.msra.mxu0 0.0
    %861 = vmatprep.subr.mxu0 0.0
    %862 = vmatpush1.msra.mxu0 0.0
    %863 = vmatprep.mubr.f32.mxu0 0.0
    %864 = vmatmul.mubr.f32.gmra.mrb[0].mxu0 %v797
    %v865 = vpop.f32.mrb[0].mxu0
    %v866 = vadd.f32 %v127, %v865
    %v867 = vpop.f32.mrb[0].mxu0
    %868 = vdwg.mxu0
    %869 = vmatprep.subr.mxu0 0.0
    %870 = vmatpush1.msra.mxu0 %v792
    %871 = vmatprep.subr.mxu0 0.0
    %872 = vmatpush1.msra.mxu0 %v793
    %873 = vmatprep.subr.mxu0 0.0
    %874 = vmatpush1.msra.mxu0 %v794
    %875 = vmatprep.subr.mxu0 0.0
    %876 = vmatpush1.msra.mxu0 %v795
    %877 = vmatprep.subr.mxu0 0.0
    %878 = vmatpush1.msra.mxu0 0.0
    %879 = vmatprep.subr.mxu0 0.0
    %880 = vmatpush1.msra.mxu0 0.0
    %881 = vmatprep.subr.mxu0 0.0
    %882 = vmatpush1.msra.mxu0 0.0
    %883 = vmatprep.subr.mxu0 0.0
    %884 = vmatpush1.msra.mxu0 0.0
    %885 = vmatprep.subr.mxu0 0.0
    %886 = vmatpush1.msra.mxu0 0.0
    %887 = vmatprep.subr.mxu0 0.0
    %888 = vmatpush1.msra.mxu0 0.0
    %889 = vmatprep.subr.mxu0 0.0
    %890 = vmatpush1.msra.mxu0 0.0
    %891 = vmatprep.subr.mxu0 0.0
    %892 = vmatpush1.msra.mxu0 0.0
    %893 = vmatprep.subr.mxu0 0.0
    %894 = vmatpush1.msra.mxu0 0.0
    %895 = vmatprep.subr.mxu0 0.0
    %896 = vmatpush1.msra.mxu0 0.0
    %897 = vmatprep.subr.mxu0 0.0
    %898 = vmatpush1.msra.mxu0 0.0
    %899 = vmatprep.subr.mxu0 0.0
    %900 = vmatpush1.msra.mxu0 0.0
    %901 = vmatprep.subr.mxu0 0.0
    %902 = vmatpush1.msra.mxu0 0.0
    %903 = vmatprep.subr.mxu0 0.0
    %904 = vmatpush1.msra.mxu0 0.0
    %905 = vmatprep.subr.mxu0 0.0
    %906 = vmatpush1.msra.mxu0 0.0
    %907 = vmatprep.subr.mxu0 0.0
    %908 = vmatpush1.msra.mxu0 0.0
    %909 = vmatprep.subr.mxu0 0.0
    %910 = vmatpush1.msra.mxu0 0.0
    %911 = vmatprep.subr.mxu0 0.0
    %912 = vmatpush1.msra.mxu0 0.0
    %913 = vmatprep.subr.mxu0 0.0
    %914 = vmatpush1.msra.mxu0 0.0
    %915 = vmatprep.subr.mxu0 0.0
    %916 = vmatpush1.msra.mxu0 0.0
    %917 = vmatprep.subr.mxu0 0.0
    %918 = vmatpush1.msra.mxu0 0.0
    %919 = vmatprep.subr.mxu0 0.0
    %920 = vmatpush1.msra.mxu0 0.0
    %921 = vmatprep.subr.mxu0 0.0
    %922 = vmatpush1.msra.mxu0 0.0
    %923 = vmatprep.subr.mxu0 0.0
    %924 = vmatpush1.msra.mxu0 0.0
    %925 = vmatprep.subr.mxu0 0.0
    %926 = vmatpush1.msra.mxu0 0.0
    %927 = vmatprep.subr.mxu0 0.0
    %928 = vmatpush1.msra.mxu0 0.0
    %929 = vmatprep.subr.mxu0 0.0
    %930 = vmatpush1.msra.mxu0 0.0
    %931 = vmatprep.subr.mxu0 0.0
    %932 = vmatpush1.msra.mxu0 0.0
    %933 = vmatprep.mubr.f32.mxu0 0.0
    %934 = vmatmul.mubr.f32.gmra.mrb[0].mxu0 %v699
    %v935 = vpop.f32.mrb[0].mxu0
    %v936 = vadd.f32 0.0, %v935
    %v937 = vpop.f32.mrb[0].mxu0
    %938 = vdwg.mxu0
    %v939 = vadd.f32 %v866, %v936
    %v940 = vtanh.pop %v939
    %941 = vxpose.xlu0.b32.start [1/16] %v625, 128
    %942 = vxpose.xlu0.b32.cont [2/16] 0.0, 128
    %943 = vxpose.xlu0.b32.cont [3/16] 0.0, 128
    %944 = vxpose.xlu0.b32.cont [4/16] 0.0, 128
    %945 = vxpose.xlu0.b32.cont [5/16] 0.0, 128
    %946 = vxpose.xlu0.b32.cont [6/16] 0.0, 128
    %947 = vxpose.xlu0.b32.cont [7/16] 0.0, 128
    %948 = vxpose.xlu0.b32.cont [8/16] 0.0, 128
    %949 = vxpose.xlu0.b32.cont [9/16] 0.0, 128
    %950 = vxpose.xlu0.b32.cont [10/16] 0.0, 128
    %951 = vxpose.xlu0.b32.cont [11/16] 0.0, 128
    %952 = vxpose.xlu0.b32.cont [12/16] 0.0, 128
    %953 = vxpose.xlu0.b32.cont [13/16] 0.0, 128
    %954 = vxpose.xlu0.b32.cont [14/16] 0.0, 128
    %955 = vxpose.xlu0.b32.cont [15/16] 0.0, 128
    %956 = vxpose.xlu0.b32.end [16/16] 0.0, 128
    %v957 = vpop.trf.xlu0
    %v958 = vpop.trf.xlu0
    %v959 = vpop.trf.xlu0
    %v960 = vpop.trf.xlu0
    %v961 = vpop.trf.xlu0
    %v962 = vpop.trf.xlu0
    %v963 = vpop.trf.xlu0
    %v964 = vpop.trf.xlu0
    %v965 = vpop.trf.xlu0
    %v966 = vpop.trf.xlu0
    %v967 = vpop.trf.xlu0
    %v968 = vpop.trf.xlu0
    %v969 = vpop.trf.xlu0
    %v970 = vpop.trf.xlu0
    %v971 = vpop.trf.xlu0
    %v972 = vpop.trf.xlu0
    %v973 = vmul.f32 %v341, %v694
    %v974 = vmul.f32 %v341, %v695
    %v975 = vmul.f32 %v341, %v696
    %v976 = vmul.f32 %v341, %v697
    %978 = vset.pattern.permute.xlu0 0
    %979 = vperm.xlu0 %978, %v957
    %v980 = vpop.permute.xlu0 %979
    %983 = vset.pattern.permute.xlu0 0
    %984 = vperm.xlu0 %983, %v958
    %v985 = vpop.permute.xlu0 %984
    %988 = vset.pattern.permute.xlu0 0
    %989 = vperm.xlu0 %988, %v959
    %v990 = vpop.permute.xlu0 %989
    %993 = vset.pattern.permute.xlu0 0
    %994 = vperm.xlu0 %993, %v960
    %v995 = vpop.permute.xlu0 %994
    %v997 = vlaneseq
    %v998 = vshrl.u32 %v997, 7
    %v999 = vsub.s32 0, %v998
    %v1000 = vrot.slane %v940, %v999
    %v1001 = vmul.f32 %v980, %v1000
    %v1002 = vmul.f32 %v985, %v1000
    %v1003 = vmul.f32 %v990, %v1000
    %v1004 = vmul.f32 %v995, %v1000
    %v1005 = vmul.f32 %v374, %v1001
    %v1006 = vmul.f32 %v374, %v1002
    %v1007 = vmul.f32 %v374, %v1003
    %v1008 = vmul.f32 %v374, %v1004
    %v1009 = vadd.f32 %v973, %v1005
    %v1010 = vadd.f32 %v974, %v1006
    %v1011 = vadd.f32 %v975, %v1007
    %v1012 = vadd.f32 %v976, %v1008
    %v1014 = vsel %vm233, %v940, 0
    %1016 = vmatprep.subr.mxu0 0.0
    %1017 = vmatpush1.msra.mxu0 %v136
    %1018 = vmatprep.subr.mxu0 0.0
    %1019 = vmatpush1.msra.mxu0 %v137
    %1020 = vmatprep.subr.mxu0 0.0
    %1021 = vmatpush1.msra.mxu0 %v138
    %1022 = vmatprep.subr.mxu0 0.0
    %1023 = vmatpush1.msra.mxu0 %v139
    %1024 = vmatprep.subr.mxu0 0.0
    %1025 = vmatpush1.msra.mxu0 0.0
    %1026 = vmatprep.subr.mxu0 0.0
    %1027 = vmatpush1.msra.mxu0 0.0
    %1028 = vmatprep.subr.mxu0 0.0
    %1029 = vmatpush1.msra.mxu0 0.0
    %1030 = vmatprep.subr.mxu0 0.0
    %1031 = vmatpush1.msra.mxu0 0.0
    %1032 = vmatprep.subr.mxu0 0.0
    %1033 = vmatpush1.msra.mxu0 0.0
    %1034 = vmatprep.subr.mxu0 0.0
    %1035 = vmatpush1.msra.mxu0 0.0
    %1036 = vmatprep.subr.mxu0 0.0
    %1037 = vmatpush1.msra.mxu0 0.0
    %1038 = vmatprep.subr.mxu0 0.0
    %1039 = vmatpush1.msra.mxu0 0.0
    %1040 = vmatprep.subr.mxu0 0.0
    %1041 = vmatpush1.msra.mxu0 0.0
    %1042 = vmatprep.subr.mxu0 0.0
    %1043 = vmatpush1.msra.mxu0 0.0
    %1044 = vmatprep.subr.mxu0 0.0
    %1045 = vmatpush1.msra.mxu0 0.0
    %1046 = vmatprep.subr.mxu0 0.0
    %1047 = vmatpush1.msra.mxu0 0.0
    %1048 = vmatprep.subr.mxu0 0.0
    %1049 = vmatpush1.msra.mxu0 0.0
    %1050 = vmatprep.subr.mxu0 0.0
    %1051 = vmatpush1.msra.mxu0 0.0
    %1052 = vmatprep.subr.mxu0 0.0
    %1053 = vmatpush1.msra.mxu0 0.0
    %1054 = vmatprep.subr.mxu0 0.0
    %1055 = vmatpush1.msra.mxu0 0.0
    %1056 = vmatprep.subr.mxu0 0.0
    %1057 = vmatpush1.msra.mxu0 0.0
    %1058 = vmatprep.subr.mxu0 0.0
    %1059 = vmatpush1.msra.mxu0 0.0
    %1060 = vmatprep.subr.mxu0 0.0
    %1061 = vmatpush1.msra.mxu0 0.0
    %1062 = vmatprep.subr.mxu0 0.0
    %1063 = vmatpush1.msra.mxu0 0.0
    %1064 = vmatprep.subr.mxu0 0.0
    %1065 = vmatpush1.msra.mxu0 0.0
    %1066 = vmatprep.subr.mxu0 0.0
    %1067 = vmatpush1.msra.mxu0 0.0
    %1068 = vmatprep.subr.mxu0 0.0
    %1069 = vmatpush1.msra.mxu0 0.0
    %1070 = vmatprep.subr.mxu0 0.0
    %1071 = vmatpush1.msra.mxu0 0.0
    %1072 = vmatprep.subr.mxu0 0.0
    %1073 = vmatpush1.msra.mxu0 0.0
    %1074 = vmatprep.subr.mxu0 0.0
    %1075 = vmatpush1.msra.mxu0 0.0
    %1076 = vmatprep.subr.mxu0 0.0
    %1077 = vmatpush1.msra.mxu0 0.0
    %1078 = vmatprep.subr.mxu0 0.0
    %1079 = vmatpush1.msra.mxu0 0.0
    %1080 = vmatprep.mubr.f32.mxu0 0.0
    %1081 = vmatmul.mubr.f32.gmra.mrb[0].mxu0 %v1014
    %v1082 = vpop.f32.mrb[0].mxu0
    %v1083 = vadd.f32 %v140, %v1082
    %v1084 = vpop.f32.mrb[0].mxu0
    %1085 = vdwg.mxu0
    %v1086 = vsel %vm143, %v1083, -1e+30
    %v1087 = vsel %vm457, %v1086, -inf
    %1088 = vmax.xlane.f32.xlu0 %v1087
    %v1089 = vpop.xlane.xlu0 %1088
    %v1090 = vsub.f32 %v1086, %v1089
    %v1091 = vmul.f32 %v1090, 1.442695
    %v1092 = vpow.pop %v1091
    %v1093 = vsel %vm457, %v1092, 0.0
    %1094 = vadd.xlane.f32.xlu0 %v1093
    %v1095 = vpop.xlane.xlu0 %1094
    %v1096 = vrcp.pop %v1095
    %v1097 = vmul.f32 %v1092, %v1096
    %v1098 = vsel %vm144, %v1083, %v1097
    %s1099 = scalar_lea.vmem [#allocation14], 2
    %1100 = vst [vmem:[%s1099] sm:$0x1] %v1098
    %s1101 = scalar_lea.vmem [#allocation3], 3
    %v1102 = vld [vmem:[%s1101] sm:$0x1]
    %v1103 = vmul.f32 %v132, %v1009
    %v1104 = vmul.f32 %v133, %v1010
    %v1105 = vmul.f32 %v134, %v1011
    %v1106 = vmul.f32 %v135, %v1012
    %v1107 = vadd.f32 %v128, %v1103
    %v1108 = vadd.f32 %v129, %v1104
    %v1109 = vadd.f32 %v130, %v1105
    %v1110 = vadd.f32 %v131, %v1106
    %v1112 = vsel %vm159, %v1102, 0
    %1114 = vmatprep.subr.mxu0 0.0
    %1115 = vmatpush1.msra.mxu0 %v125
    %1116 = vmatprep.subr.mxu0 0.0
    %1117 = vmatpush1.msra.mxu0 %v126
    %1118 = vmatprep.subr.mxu0 0.0
    %1119 = vmatpush1.msra.mxu0 0.0
    %1120 = vmatprep.subr.mxu0 0.0
    %1121 = vmatpush1.msra.mxu0 0.0
    %1122 = vmatprep.subr.mxu0 0.0
    %1123 = vmatpush1.msra.mxu0 0.0
    %1124 = vmatprep.subr.mxu0 0.0
    %1125 = vmatpush1.msra.mxu0 0.0
    %1126 = vmatprep.subr.mxu0 0.0
    %1127 = vmatpush1.msra.mxu0 0.0
    %1128 = vmatprep.subr.mxu0 0.0
    %1129 = vmatpush1.msra.mxu0 0.0
    %1130 = vmatprep.subr.mxu0 0.0
    %1131 = vmatpush1.msra.mxu0 0.0
    %1132 = vmatprep.subr.mxu0 0.0
    %1133 = vmatpush1.msra.mxu0 0.0
    %1134 = vmatprep.subr.mxu0 0.0
    %1135 = vmatpush1.msra.mxu0 0.0
    %1136 = vmatprep.subr.mxu0 0.0
    %1137 = vmatpush1.msra.mxu0 0.0
    %1138 = vmatprep.subr.mxu0 0.0
    %1139 = vmatpush1.msra.mxu0 0.0
    %1140 = vmatprep.subr.mxu0 0.0
    %1141 = vmatpush1.msra.mxu0 0.0
    %1142 = vmatprep.subr.mxu0 0.0
    %1143 = vmatpush1.msra.mxu0 0.0
    %1144 = vmatprep.subr.mxu0 0.0
    %1145 = vmatpush1.msra.mxu0 0.0
    %1146 = vmatprep.subr.mxu0 0.0
    %1147 = vmatpush1.msra.mxu0 0.0
    %1148 = vmatprep.subr.mxu0 0.0
    %1149 = vmatpush1.msra.mxu0 0.0
    %1150 = vmatprep.subr.mxu0 0.0
    %1151 = vmatpush1.msra.mxu0 0.0
    %1152 = vmatprep.subr.mxu0 0.0
    %1153 = vmatpush1.msra.mxu0 0.0
    %1154 = vmatprep.subr.mxu0 0.0
    %1155 = vmatpush1.msra.mxu0 0.0
    %1156 = vmatprep.subr.mxu0 0.0
    %1157 = vmatpush1.msra.mxu0 0.0
    %1158 = vmatprep.subr.mxu0 0.0
    %1159 = vmatpush1.msra.mxu0 0.0
    %1160 = vmatprep.subr.mxu0 0.0
    %1161 = vmatpush1.msra.mxu0 0.0
    %1162 = vmatprep.subr.mxu0 0.0
    %1163 = vmatpush1.msra.mxu0 0.0
    %1164 = vmatprep.subr.mxu0 0.0
    %1165 = vmatpush1.msra.mxu0 0.0
    %1166 = vmatprep.subr.mxu0 0.0
    %1167 = vmatpush1.msra.mxu0 0.0
    %1168 = vmatprep.subr.mxu0 0.0
    %1169 = vmatpush1.msra.mxu0 0.0
    %1170 = vmatprep.subr.mxu0 0.0
    %1171 = vmatpush1.msra.mxu0 0.0
    %1172 = vmatprep.subr.mxu0 0.0
    %1173 = vmatpush1.msra.mxu0 0.0
    %1174 = vmatprep.subr.mxu0 0.0
    %1175 = vmatpush1.msra.mxu0 0.0
    %1176 = vmatprep.subr.mxu0 0.0
    %1177 = vmatpush1.msra.mxu0 0.0
    %1178 = vmatprep.mubr.f32.mxu0 0.0
    %1179 = vmatmul.mubr.f32.gmra.mrb[0].mxu0 %v1112
    %v1180 = vpop.f32.mrb[0].mxu0
    %v1181 = vadd.f32 %v127, %v1180
    %v1182 = vpop.f32.mrb[0].mxu0
    %1183 = vdwg.mxu0
    %1184 = vmatprep.subr.mxu0 0.0
    %1185 = vmatpush1.msra.mxu0 %v1107
    %1186 = vmatprep.subr.mxu0 0.0
    %1187 = vmatpush1.msra.mxu0 %v1108
    %1188 = vmatprep.subr.mxu0 0.0
    %1189 = vmatpush1.msra.mxu0 %v1109
    %1190 = vmatprep.subr.mxu0 0.0
    %1191 = vmatpush1.msra.mxu0 %v1110
    %1192 = vmatprep.subr.mxu0 0.0
    %1193 = vmatpush1.msra.mxu0 0.0
    %1194 = vmatprep.subr.mxu0 0.0
    %1195 = vmatpush1.msra.mxu0 0.0
    %1196 = vmatprep.subr.mxu0 0.0
    %1197 = vmatpush1.msra.mxu0 0.0
    %1198 = vmatprep.subr.mxu0 0.0
    %1199 = vmatpush1.msra.mxu0 0.0
    %1200 = vmatprep.subr.mxu0 0.0
    %1201 = vmatpush1.msra.mxu0 0.0
    %1202 = vmatprep.subr.mxu0 0.0
    %1203 = vmatpush1.msra.mxu0 0.0
    %1204 = vmatprep.subr.mxu0 0.0
    %1205 = vmatpush1.msra.mxu0 0.0
    %1206 = vmatprep.subr.mxu0 0.0
    %1207 = vmatpush1.msra.mxu0 0.0
    %1208 = vmatprep.subr.mxu0 0.0
    %1209 = vmatpush1.msra.mxu0 0.0
    %1210 = vmatprep.subr.mxu0 0.0
    %1211 = vmatpush1.msra.mxu0 0.0
    %1212 = vmatprep.subr.mxu0 0.0
    %1213 = vmatpush1.msra.mxu0 0.0
    %1214 = vmatprep.subr.mxu0 0.0
    %1215 = vmatpush1.msra.mxu0 0.0
    %1216 = vmatprep.subr.mxu0 0.0
    %1217 = vmatpush1.msra.mxu0 0.0
    %1218 = vmatprep.subr.mxu0 0.0
    %1219 = vmatpush1.msra.mxu0 0.0
    %1220 = vmatprep.subr.mxu0 0.0
    %1221 = vmatpush1.msra.mxu0 0.0
    %1222 = vmatprep.subr.mxu0 0.0
    %1223 = vmatpush1.msra.mxu0 0.0
    %1224 = vmatprep.subr.mxu0 0.0
    %1225 = vmatpush1.msra.mxu0 0.0
    %1226 = vmatprep.subr.mxu0 0.0
    %1227 = vmatpush1.msra.mxu0 0.0
    %1228 = vmatprep.subr.mxu0 0.0
    %1229 = vmatpush1.msra.mxu0 0.0
    %1230 = vmatprep.subr.mxu0 0.0
    %1231 = vmatpush1.msra.mxu0 0.0
    %1232 = vmatprep.subr.mxu0 0.0
    %1233 = vmatpush1.msra.mxu0 0.0
    %1234 = vmatprep.subr.mxu0 0.0
    %1235 = vmatpush1.msra.mxu0 0.0
    %1236 = vmatprep.subr.mxu0 0.0
    %1237 = vmatpush1.msra.mxu0 0.0
    %1238 = vmatprep.subr.mxu0 0.0
    %1239 = vmatpush1.msra.mxu0 0.0
    %1240 = vmatprep.subr.mxu0 0.0
    %1241 = vmatpush1.msra.mxu0 0.0
    %1242 = vmatprep.subr.mxu0 0.0
    %1243 = vmatpush1.msra.mxu0 0.0
    %1244 = vmatprep.subr.mxu0 0.0
    %1245 = vmatpush1.msra.mxu0 0.0
    %1246 = vmatprep.subr.mxu0 0.0
    %1247 = vmatpush1.msra.mxu0 0.0
    %1248 = vmatprep.mubr.f32.mxu0 0.0
    %1249 = vmatmul.mubr.f32.gmra.mrb[0].mxu0 %v1014
    %v1250 = vpop.f32.mrb[0].mxu0
    %v1251 = vadd.f32 0.0, %v1250
    %v1252 = vpop.f32.mrb[0].mxu0
    %1253 = vdwg.mxu0
    %v1254 = vadd.f32 %v1181, %v1251
    %v1255 = vtanh.pop %v1254
    %1256 = vxpose.xlu0.b32.start [1/16] %v940, 128
    %1257 = vxpose.xlu0.b32.cont [2/16] 0.0, 128
    %1258 = vxpose.xlu0.b32.cont [3/16] 0.0, 128
    %1259 = vxpose.xlu0.b32.cont [4/16] 0.0, 128
    %1260 = vxpose.xlu0.b32.cont [5/16] 0.0, 128
    %1261 = vxpose.xlu0.b32.cont [6/16] 0.0, 128
    %1262 = vxpose.xlu0.b32.cont [7/16] 0.0, 128
    %1263 = vxpose.xlu0.b32.cont [8/16] 0.0, 128
    %1264 = vxpose.xlu0.b32.cont [9/16] 0.0, 128
    %1265 = vxpose.xlu0.b32.cont [10/16] 0.0, 128
    %1266 = vxpose.xlu0.b32.cont [11/16] 0.0, 128
    %1267 = vxpose.xlu0.b32.cont [12/16] 0.0, 128
    %1268 = vxpose.xlu0.b32.cont [13/16] 0.0, 128
    %1269 = vxpose.xlu0.b32.cont [14/16] 0.0, 128
    %1270 = vxpose.xlu0.b32.cont [15/16] 0.0, 128
    %1271 = vxpose.xlu0.b32.end [16/16] 0.0, 128
    %v1272 = vpop.trf.xlu0
    %v1273 = vpop.trf.xlu0
    %v1274 = vpop.trf.xlu0
    %v1275 = vpop.trf.xlu0
    %v1276 = vpop.trf.xlu0
    %v1277 = vpop.trf.xlu0
    %v1278 = vpop.trf.xlu0
    %v1279 = vpop.trf.xlu0
    %v1280 = vpop.trf.xlu0
    %v1281 = vpop.trf.xlu0
    %v1282 = vpop.trf.xlu0
    %v1283 = vpop.trf.xlu0
    %v1284 = vpop.trf.xlu0
    %v1285 = vpop.trf.xlu0
    %v1286 = vpop.trf.xlu0
    %v1287 = vpop.trf.xlu0
    %v1288 = vmul.f32 %v341, %v1009
    %v1289 = vmul.f32 %v341, %v1010
    %v1290 = vmul.f32 %v341, %v1011
    %v1291 = vmul.f32 %v341, %v1012
    %1293 = vset.pattern.permute.xlu0 0
    %1294 = vperm.xlu0 %1293, %v1272
    %v1295 = vpop.permute.xlu0 %1294
    %1298 = vset.pattern.permute.xlu0 0
    %1299 = vperm.xlu0 %1298, %v1273
    %v1300 = vpop.permute.xlu0 %1299
    %1303 = vset.pattern.permute.xlu0 0
    %1304 = vperm.xlu0 %1303, %v1274
    %v1305 = vpop.permute.xlu0 %1304
    %1308 = vset.pattern.permute.xlu0 0
    %1309 = vperm.xlu0 %1308, %v1275
    %v1310 = vpop.permute.xlu0 %1309
    %v1312 = vlaneseq
    %v1313 = vshrl.u32 %v1312, 7
    %v1314 = vsub.s32 0, %v1313
    %v1315 = vrot.slane %v1255, %v1314
    %v1316 = vmul.f32 %v1295, %v1315
    %v1317 = vmul.f32 %v1300, %v1315
    %v1318 = vmul.f32 %v1305, %v1315
    %v1319 = vmul.f32 %v1310, %v1315
    %v1320 = vmul.f32 %v374, %v1316
    %v1321 = vmul.f32 %v374, %v1317
    %v1322 = vmul.f32 %v374, %v1318
    %v1323 = vmul.f32 %v374, %v1319
    %v1324 = vadd.f32 %v1288, %v1320
    %v1325 = vadd.f32 %v1289, %v1321
    %v1326 = vadd.f32 %v1290, %v1322
    %v1327 = vadd.f32 %v1291, %v1323
    %v1329 = vsel %vm233, %v1255, 0
    %1331 = vmatprep.subr.mxu0 0.0
    %1332 = vmatpush1.msra.mxu0 %v136
    %1333 = vmatprep.subr.mxu0 0.0
    %1334 = vmatpush1.msra.mxu0 %v137
    %1335 = vmatprep.subr.mxu0 0.0
    %1336 = vmatpush1.msra.mxu0 %v138
    %1337 = vmatprep.subr.mxu0 0.0
    %1338 = vmatpush1.msra.mxu0 %v139
    %1339 = vmatprep.subr.mxu0 0.0
    %1340 = vmatpush1.msra.mxu0 0.0
    %1341 = vmatprep.subr.mxu0 0.0
    %1342 = vmatpush1.msra.mxu0 0.0
    %1343 = vmatprep.subr.mxu0 0.0
    %1344 = vmatpush1.msra.mxu0 0.0
    %1345 = vmatprep.subr.mxu0 0.0
    %1346 = vmatpush1.msra.mxu0 0.0
    %1347 = vmatprep.subr.mxu0 0.0
    %1348 = vmatpush1.msra.mxu0 0.0
    %1349 = vmatprep.subr.mxu0 0.0
    %1350 = vmatpush1.msra.mxu0 0.0
    %1351 = vmatprep.subr.mxu0 0.0
    %1352 = vmatpush1.msra.mxu0 0.0
    %1353 = vmatprep.subr.mxu0 0.0
    %1354 = vmatpush1.msra.mxu0 0.0
    %1355 = vmatprep.subr.mxu0 0.0
    %1356 = vmatpush1.msra.mxu0 0.0
    %1357 = vmatprep.subr.mxu0 0.0
    %1358 = vmatpush1.msra.mxu0 0.0
    %1359 = vmatprep.subr.mxu0 0.0
    %1360 = vmatpush1.msra.mxu0 0.0
    %1361 = vmatprep.subr.mxu0 0.0
    %1362 = vmatpush1.msra.mxu0 0.0
    %1363 = vmatprep.subr.mxu0 0.0
    %1364 = vmatpush1.msra.mxu0 0.0
    %1365 = vmatprep.subr.mxu0 0.0
    %1366 = vmatpush1.msra.mxu0 0.0
    %1367 = vmatprep.subr.mxu0 0.0
    %1368 = vmatpush1.msra.mxu0 0.0
    %1369 = vmatprep.subr.mxu0 0.0
    %1370 = vmatpush1.msra.mxu0 0.0
    %1371 = vmatprep.subr.mxu0 0.0
    %1372 = vmatpush1.msra.mxu0 0.0
    %1373 = vmatprep.subr.mxu0 0.0
    %1374 = vmatpush1.msra.mxu0 0.0
    %1375 = vmatprep.subr.mxu0 0.0
    %1376 = vmatpush1.msra.mxu0 0.0
    %1377 = vmatprep.subr.mxu0 0.0
    %1378 = vmatpush1.msra.mxu0 0.0
    %1379 = vmatprep.subr.mxu0 0.0
    %1380 = vmatpush1.msra.mxu0 0.0
    %1381 = vmatprep.subr.mxu0 0.0
    %1382 = vmatpush1.msra.mxu0 0.0
    %1383 = vmatprep.subr.mxu0 0.0
    %1384 = vmatpush1.msra.mxu0 0.0
    %1385 = vmatprep.subr.mxu0 0.0
    %1386 = vmatpush1.msra.mxu0 0.0
    %1387 = vmatprep.subr.mxu0 0.0
    %1388 = vmatpush1.msra.mxu0 0.0
    %1389 = vmatprep.subr.mxu0 0.0
    %1390 = vmatpush1.msra.mxu0 0.0
    %1391 = vmatprep.subr.mxu0 0.0
    %1392 = vmatpush1.msra.mxu0 0.0
    %1393 = vmatprep.subr.mxu0 0.0
    %1394 = vmatpush1.msra.mxu0 0.0
    %1395 = vmatprep.mubr.f32.mxu0 0.0
    %1396 = vmatmul.mubr.f32.gmra.mrb[0].mxu0 %v1329
    %v1397 = vpop.f32.mrb[0].mxu0
    %v1398 = vadd.f32 %v140, %v1397
    %v1399 = vpop.f32.mrb[0].mxu0
    %1400 = vdwg.mxu0
    %v1401 = vsel %vm143, %v1398, -1e+30
    %v1402 = vsel %vm457, %v1401, -inf
    %1403 = vmax.xlane.f32.xlu0 %v1402
    %v1404 = vpop.xlane.xlu0 %1403
    %v1405 = vsub.f32 %v1401, %v1404
    %v1406 = vmul.f32 %v1405, 1.442695
    %v1407 = vpow.pop %v1406
    %v1408 = vsel %vm457, %v1407, 0.0
    %1409 = vadd.xlane.f32.xlu0 %v1408
    %v1410 = vpop.xlane.xlu0 %1409
    %v1411 = vrcp.pop %v1410
    %v1412 = vmul.f32 %v1407, %v1411
    %v1413 = vsel %vm144, %v1398, %v1412
    %s1414 = scalar_lea.vmem [#allocation14], 3
    %1415 = vst [vmem:[%s1414] sm:$0x1] %v1413
    %s1416 = scalar_lea.vmem [#allocation3], 4
    %v1417 = vld [vmem:[%s1416] sm:$0x1]
    %v1418 = vmul.f32 %v132, %v1324
    %v1419 = vmul.f32 %v133, %v1325
    %v1420 = vmul.f32 %v134, %v1326
    %v1421 = vmul.f32 %v135, %v1327
    %v1422 = vadd.f32 %v128, %v1418
    %v1423 = vadd.f32 %v129, %v1419
    %v1424 = vadd.f32 %v130, %v1420
    %v1425 = vadd.f32 %v131, %v1421
    %v1427 = vsel %vm159, %v1417, 0
    %1429 = vmatprep.subr.mxu0 0.0
    %1430 = vmatpush1.msra.mxu0 %v125
    %1431 = vmatprep.subr.mxu0 0.0
    %1432 = vmatpush1.msra.mxu0 %v126
    %1433 = vmatprep.subr.mxu0 0.0
    %1434 = vmatpush1.msra.mxu0 0.0
    %1435 = vmatprep.subr.mxu0 0.0
    %1436 = vmatpush1.msra.mxu0 0.0
    %1437 = vmatprep.subr.mxu0 0.0
    %1438 = vmatpush1.msra.mxu0 0.0
    %1439 = vmatprep.subr.mxu0 0.0
    %1440 = vmatpush1.msra.mxu0 0.0
    %1441 = vmatprep.subr.mxu0 0.0
    %1442 = vmatpush1.msra.mxu0 0.0
    %1443 = vmatprep.subr.mxu0 0.0
    %1444 = vmatpush1.msra.mxu0 0.0
    %1445 = vmatprep.subr.mxu0 0.0
    %1446 = vmatpush1.msra.mxu0 0.0
    %1447 = vmatprep.subr.mxu0 0.0
    %1448 = vmatpush1.msra.mxu0 0.0
    %1449 = vmatprep.subr.mxu0 0.0
    %1450 = vmatpush1.msra.mxu0 0.0
    %1451 = vmatprep.subr.mxu0 0.0
    %1452 = vmatpush1.msra.mxu0 0.0
    %1453 = vmatprep.subr.mxu0 0.0
    %1454 = vmatpush1.msra.mxu0 0.0
    %1455 = vmatprep.subr.mxu0 0.0
    %1456 = vmatpush1.msra.mxu0 0.0
    %1457 = vmatprep.subr.mxu0 0.0
    %1458 = vmatpush1.msra.mxu0 0.0
    %1459 = vmatprep.subr.mxu0 0.0
    %1460 = vmatpush1.msra.mxu0 0.0
    %1461 = vmatprep.subr.mxu0 0.0
    %1462 = vmatpush1.msra.mxu0 0.0
    %1463 = vmatprep.subr.mxu0 0.0
    %1464 = vmatpush1.msra.mxu0 0.0
    %1465 = vmatprep.subr.mxu0 0.0
    %1466 = vmatpush1.msra.mxu0 0.0
    %1467 = vmatprep.subr.mxu0 0.0
    %1468 = vmatpush1.msra.mxu0 0.0
    %1469 = vmatprep.subr.mxu0 0.0
    %1470 = vmatpush1.msra.mxu0 0.0
    %1471 = vmatprep.subr.mxu0 0.0
    %1472 = vmatpush1.msra.mxu0 0.0
    %1473 = vmatprep.subr.mxu0 0.0
    %1474 = vmatpush1.msra.mxu0 0.0
    %1475 = vmatprep.subr.mxu0 0.0
    %1476 = vmatpush1.msra.mxu0 0.0
    %1477 = vmatprep.subr.mxu0 0.0
    %1478 = vmatpush1.msra.mxu0 0.0
    %1479 = vmatprep.subr.mxu0 0.0
    %1480 = vmatpush1.msra.mxu0 0.0
    %1481 = vmatprep.subr.mxu0 0.0
    %1482 = vmatpush1.msra.mxu0 0.0
    %1483 = vmatprep.subr.mxu0 0.0
    %1484 = vmatpush1.msra.mxu0 0.0
    %1485 = vmatprep.subr.mxu0 0.0
    %1486 = vmatpush1.msra.mxu0 0.0
    %1487 = vmatprep.subr.mxu0 0.0
    %1488 = vmatpush1.msra.mxu0 0.0
    %1489 = vmatprep.subr.mxu0 0.0
    %1490 = vmatpush1.msra.mxu0 0.0
    %1491 = vmatprep.subr.mxu0 0.0
    %1492 = vmatpush1.msra.mxu0 0.0
    %1493 = vmatprep.mubr.f32.mxu0 0.0
    %1494 = vmatmul.mubr.f32.gmra.mrb[0].mxu0 %v1427
    %v1495 = vpop.f32.mrb[0].mxu0
    %v1496 = vadd.f32 %v127, %v1495
    %v1497 = vpop.f32.mrb[0].mxu0
    %1498 = vdwg.mxu0
    %1499 = vmatprep.subr.mxu0 0.0
    %1500 = vmatpush1.msra.mxu0 %v1422
    %1501 = vmatprep.subr.mxu0 0.0
    %1502 = vmatpush1.msra.mxu0 %v1423
    %1503 = vmatprep.subr.mxu0 0.0
    %1504 = vmatpush1.msra.mxu0 %v1424
    %1505 = vmatprep.subr.mxu0 0.0
    %1506 = vmatpush1.msra.mxu0 %v1425
    %1507 = vmatprep.subr.mxu0 0.0
    %1508 = vmatpush1.msra.mxu0 0.0
    %1509 = vmatprep.subr.mxu0 0.0
    %1510 = vmatpush1.msra.mxu0 0.0
    %1511 = vmatprep.subr.mxu0 0.0
    %1512 = vmatpush1.msra.mxu0 0.0
    %1513 = vmatprep.subr.mxu0 0.0
    %1514 = vmatpush1.msra.mxu0 0.0
    %1515 = vmatprep.subr.mxu0 0.0
    %1516 = vmatpush1.msra.mxu0 0.0
    %1517 = vmatprep.subr.mxu0 0.0
    %1518 = vmatpush1.msra.mxu0 0.0
    %1519 = vmatprep.subr.mxu0 0.0
    %1520 = vmatpush1.msra.mxu0 0.0
    %1521 = vmatprep.subr.mxu0 0.0
    %1522 = vmatpush1.msra.mxu0 0.0
    %1523 = vmatprep.subr.mxu0 0.0
    %1524 = vmatpush1.msra.mxu0 0.0
    %1525 = vmatprep.subr.mxu0 0.0
    %1526 = vmatpush1.msra.mxu0 0.0
    %1527 = vmatprep.subr.mxu0 0.0
    %1528 = vmatpush1.msra.mxu0 0.0
    %1529 = vmatprep.subr.mxu0 0.0
    %1530 = vmatpush1.msra.mxu0 0.0
    %1531 = vmatprep.subr.mxu0 0.0
    %1532 = vmatpush1.msra.mxu0 0.0
    %1533 = vmatprep.subr.mxu0 0.0
    %1534 = vmatpush1.msra.mxu0 0.0
    %1535 = vmatprep.subr.mxu0 0.0
    %1536 = vmatpush1.msra.mxu0 0.0
    %1537 = vmatprep.subr.mxu0 0.0
    %1538 = vmatpush1.msra.mxu0 0.0
    %1539 = vmatprep.subr.mxu0 0.0
    %1540 = vmatpush1.msra.mxu0 0.0
    %1541 = vmatprep.subr.mxu0 0.0
    %1542 = vmatpush1.msra.mxu0 0.0
    %1543 = vmatprep.subr.mxu0 0.0
    %1544 = vmatpush1.msra.mxu0 0.0
    %1545 = vmatprep.subr.mxu0 0.0
    %1546 = vmatpush1.msra.mxu0 0.0
    %1547 = vmatprep.subr.mxu0 0.0
    %1548 = vmatpush1.msra.mxu0 0.0
    %1549 = vmatprep.subr.mxu0 0.0
    %1550 = vmatpush1.msra.mxu0 0.0
    %1551 = vmatprep.subr.mxu0 0.0
    %1552 = vmatpush1.msra.mxu0 0.0
    %1553 = vmatprep.subr.mxu0 0.0
    %1554 = vmatpush1.msra.mxu0 0.0
    %1555 = vmatprep.subr.mxu0 0.0
    %1556 = vmatpush1.msra.mxu0 0.0
    %1557 = vmatprep.subr.mxu0 0.0
    %1558 = vmatpush1.msra.mxu0 0.0
    %1559 = vmatprep.subr.mxu0 0.0
    %1560 = vmatpush1.msra.mxu0 0.0
    %1561 = vmatprep.subr.mxu0 0.0
    %1562 = vmatpush1.msra.mxu0 0.0
    %1563 = vmatprep.mubr.f32.mxu0 0.0
    %1564 = vmatmul.mubr.f32.gmra.mrb[0].mxu0 %v1329
    %v1565 = vpop.f32.mrb[0].mxu0
    %v1566 = vadd.f32 0.0, %v1565
    %v1567 = vpop.f32.mrb[0].mxu0
    %1568 = vdwg.mxu0
    %v1569 = vadd.f32 %v1496, %v1566
    %v1570 = vtanh.pop %v1569
    %1571 = vxpose.xlu0.b32.start [1/16] %v1255, 128
    %1572 = vxpose.xlu0.b32.cont [2/16] 0.0, 128
    %1573 = vxpose.xlu0.b32.cont [3/16] 0.0, 128
    %1574 = vxpose.xlu0.b32.cont [4/16] 0.0, 128
    %1575 = vxpose.xlu0.b32.cont [5/16] 0.0, 128
    %1576 = vxpose.xlu0.b32.cont [6/16] 0.0, 128
    %1577 = vxpose.xlu0.b32.cont [7/16] 0.0, 128
    %1578 = vxpose.xlu0.b32.cont [8/16] 0.0, 128
    %1579 = vxpose.xlu0.b32.cont [9/16] 0.0, 128
    %1580 = vxpose.xlu0.b32.cont [10/16] 0.0, 128
    %1581 = vxpose.xlu0.b32.cont [11/16] 0.0, 128
    %1582 = vxpose.xlu0.b32.cont [12/16] 0.0, 128
    %1583 = vxpose.xlu0.b32.cont [13/16] 0.0, 128
    %1584 = vxpose.xlu0.b32.cont [14/16] 0.0, 128
    %1585 = vxpose.xlu0.b32.cont [15/16] 0.0, 128
    %1586 = vxpose.xlu0.b32.end [16/16] 0.0, 128
    %v1587 = vpop.trf.xlu0
    %v1588 = vpop.trf.xlu0
    %v1589 = vpop.trf.xlu0
    %v1590 = vpop.trf.xlu0
    %v1591 = vpop.trf.xlu0
    %v1592 = vpop.trf.xlu0
    %v1593 = vpop.trf.xlu0
    %v1594 = vpop.trf.xlu0
    %v1595 = vpop.trf.xlu0
    %v1596 = vpop.trf.xlu0
    %v1597 = vpop.trf.xlu0
    %v1598 = vpop.trf.xlu0
    %v1599 = vpop.trf.xlu0
    %v1600 = vpop.trf.xlu0
    %v1601 = vpop.trf.xlu0
    %v1602 = vpop.trf.xlu0
    %v1603 = vmul.f32 %v341, %v1324
    %v1604 = vmul.f32 %v341, %v1325
    %v1605 = vmul.f32 %v341, %v1326
    %v1606 = vmul.f32 %v341, %v1327
    %1608 = vset.pattern.permute.xlu0 0
    %1609 = vperm.xlu0 %1608, %v1587
    %v1610 = vpop.permute.xlu0 %1609
    %1613 = vset.pattern.permute.xlu0 0
    %1614 = vperm.xlu0 %1613, %v1588
    %v1615 = vpop.permute.xlu0 %1614
    %1618 = vset.pattern.permute.xlu0 0
    %1619 = vperm.xlu0 %1618, %v1589
    %v1620 = vpop.permute.xlu0 %1619
    %1623 = vset.pattern.permute.xlu0 0
    %1624 = vperm.xlu0 %1623, %v1590
    %v1625 = vpop.permute.xlu0 %1624
    %v1627 = vlaneseq
    %v1628 = vshrl.u32 %v1627, 7
    %v1629 = vsub.s32 0, %v1628
    %v1630 = vrot.slane %v1570, %v1629
    %v1631 = vmul.f32 %v1610, %v1630
    %v1632 = vmul.f32 %v1615, %v1630
    %v1633 = vmul.f32 %v1620, %v1630
    %v1634 = vmul.f32 %v1625, %v1630
    %v1635 = vmul.f32 %v374, %v1631
    %v1636 = vmul.f32 %v374, %v1632
    %v1637 = vmul.f32 %v374, %v1633
    %v1638 = vmul.f32 %v374, %v1634
    %v1639 = vadd.f32 %v1603, %v1635
    %v1640 = vadd.f32 %v1604, %v1636
    %v1641 = vadd.f32 %v1605, %v1637
    %v1642 = vadd.f32 %v1606, %v1638
    %v1644 = vsel %vm233, %v1570, 0
    %1646 = vmatprep.subr.mxu0 0.0
    %1647 = vmatpush1.msra.mxu0 %v136
    %1648 = vmatprep.subr.mxu0 0.0
    %1649 = vmatpush1.msra.mxu0 %v137
    %1650 = vmatprep.subr.mxu0 0.0
    %1651 = vmatpush1.msra.mxu0 %v138
    %1652 = vmatprep.subr.mxu0 0.0
    %1653 = vmatpush1.msra.mxu0 %v139
    %1654 = vmatprep.subr.mxu0 0.0
    %1655 = vmatpush1.msra.mxu0 0.0
    %1656 = vmatprep.subr.mxu0 0.0
    %1657 = vmatpush1.msra.mxu0 0.0
    %1658 = vmatprep.subr.mxu0 0.0
    %1659 = vmatpush1.msra.mxu0 0.0
    %1660 = vmatprep.subr.mxu0 0.0
    %1661 = vmatpush1.msra.mxu0 0.0
    %1662 = vmatprep.subr.mxu0 0.0
    %1663 = vmatpush1.msra.mxu0 0.0
    %1664 = vmatprep.subr.mxu0 0.0
    %1665 = vmatpush1.msra.mxu0 0.0
    %1666 = vmatprep.subr.mxu0 0.0
    %1667 = vmatpush1.msra.mxu0 0.0
    %1668 = vmatprep.subr.mxu0 0.0
    %1669 = vmatpush1.msra.mxu0 0.0
    %1670 = vmatprep.subr.mxu0 0.0
    %1671 = vmatpush1.msra.mxu0 0.0
    %1672 = vmatprep.subr.mxu0 0.0
    %1673 = vmatpush1.msra.mxu0 0.0
    %1674 = vmatprep.subr.mxu0 0.0
    %1675 = vmatpush1.msra.mxu0 0.0
    %1676 = vmatprep.subr.mxu0 0.0
    %1677 = vmatpush1.msra.mxu0 0.0
    %1678 = vmatprep.subr.mxu0 0.0
    %1679 = vmatpush1.msra.mxu0 0.0
    %1680 = vmatprep.subr.mxu0 0.0
    %1681 = vmatpush1.msra.mxu0 0.0
    %1682 = vmatprep.subr.mxu0 0.0
    %1683 = vmatpush1.msra.mxu0 0.0
    %1684 = vmatprep.subr.mxu0 0.0
    %1685 = vmatpush1.msra.mxu0 0.0
    %1686 = vmatprep.subr.mxu0 0.0
    %1687 = vmatpush1.msra.mxu0 0.0
    %1688 = vmatprep.subr.mxu0 0.0
    %1689 = vmatpush1.msra.mxu0 0.0
    %1690 = vmatprep.subr.mxu0 0.0
    %1691 = vmatpush1.msra.mxu0 0.0
    %1692 = vmatprep.subr.mxu0 0.0
    %1693 = vmatpush1.msra.mxu0 0.0
    %1694 = vmatprep.subr.mxu0 0.0
    %1695 = vmatpush1.msra.mxu0 0.0
    %1696 = vmatprep.subr.mxu0 0.0
    %1697 = vmatpush1.msra.mxu0 0.0
    %1698 = vmatprep.subr.mxu0 0.0
    %1699 = vmatpush1.msra.mxu0 0.0
    %1700 = vmatprep.subr.mxu0 0.0
    %1701 = vmatpush1.msra.mxu0 0.0
    %1702 = vmatprep.subr.mxu0 0.0
    %1703 = vmatpush1.msra.mxu0 0.0
    %1704 = vmatprep.subr.mxu0 0.0
    %1705 = vmatpush1.msra.mxu0 0.0
    %1706 = vmatprep.subr.mxu0 0.0
    %1707 = vmatpush1.msra.mxu0 0.0
    %1708 = vmatprep.subr.mxu0 0.0
    %1709 = vmatpush1.msra.mxu0 0.0
    %1710 = vmatprep.mubr.f32.mxu0 0.0
    %1711 = vmatmul.mubr.f32.gmra.mrb[0].mxu0 %v1644
    %v1712 = vpop.f32.mrb[0].mxu0
    %v1713 = vadd.f32 %v140, %v1712
    %v1714 = vpop.f32.mrb[0].mxu0
    %1715 = vdwg.mxu0
    %v1716 = vsel %vm143, %v1713, -1e+30
    %v1717 = vsel %vm457, %v1716, -inf
    %1718 = vmax.xlane.f32.xlu0 %v1717
    %v1719 = vpop.xlane.xlu0 %1718
    %v1720 = vsub.f32 %v1716, %v1719
    %v1721 = vmul.f32 %v1720, 1.442695
    %v1722 = vpow.pop %v1721
    %v1723 = vsel %vm457, %v1722, 0.0
    %1724 = vadd.xlane.f32.xlu0 %v1723
    %v1725 = vpop.xlane.xlu0 %1724
    %v1726 = vrcp.pop %v1725
    %v1727 = vmul.f32 %v1722, %v1726
    %v1728 = vsel %vm144, %v1713, %v1727
    %s1729 = scalar_lea.vmem [#allocation14], 4
    %1730 = vst [vmem:[%s1729] sm:$0x1] %v1728
    %s1731 = scalar_lea.vmem [#allocation3], 5
    %v1732 = vld [vmem:[%s1731] sm:$0x1]
    %v1733 = vmul.f32 %v132, %v1639
    %v1734 = vmul.f32 %v133, %v1640
    %v1735 = vmul.f32 %v134, %v1641
    %v1736 = vmul.f32 %v135, %v1642
    %v1737 = vadd.f32 %v128, %v1733
    %v1738 = vadd.f32 %v129, %v1734
    %v1739 = vadd.f32 %v130, %v1735
    %v1740 = vadd.f32 %v131, %v1736
    %v1742 = vsel %vm159, %v1732, 0
    %1744 = vmatprep.subr.mxu0 0.0
    %1745 = vmatpush1.msra.mxu0 %v125
    %1746 = vmatprep.subr.mxu0 0.0
    %1747 = vmatpush1.msra.mxu0 %v126
    %1748 = vmatprep.subr.mxu0 0.0
    %1749 = vmatpush1.msra.mxu0 0.0
    %1750 = vmatprep.subr.mxu0 0.0
    %1751 = vmatpush1.msra.mxu0 0.0
    %1752 = vmatprep.subr.mxu0 0.0
    %1753 = vmatpush1.msra.mxu0 0.0
    %1754 = vmatprep.subr.mxu0 0.0
    %1755 = vmatpush1.msra.mxu0 0.0
    %1756 = vmatprep.subr.mxu0 0.0
    %1757 = vmatpush1.msra.mxu0 0.0
    %1758 = vmatprep.subr.mxu0 0.0
    %1759 = vmatpush1.msra.mxu0 0.0
    %1760 = vmatprep.subr.mxu0 0.0
    %1761 = vmatpush1.msra.mxu0 0.0
    %1762 = vmatprep.subr.mxu0 0.0
    %1763 = vmatpush1.msra.mxu0 0.0
    %1764 = vmatprep.subr.mxu0 0.0
    %1765 = vmatpush1.msra.mxu0 0.0
    %1766 = vmatprep.subr.mxu0 0.0
    %1767 = vmatpush1.msra.mxu0 0.0
    %1768 = vmatprep.subr.mxu0 0.0
    %1769 = vmatpush1.msra.mxu0 0.0
    %1770 = vmatprep.subr.mxu0 0.0
    %1771 = vmatpush1.msra.mxu0 0.0
    %1772 = vmatprep.subr.mxu0 0.0
    %1773 = vmatpush1.msra.mxu0 0.0
    %1774 = vmatprep.subr.mxu0 0.0
    %1775 = vmatpush1.msra.mxu0 0.0
    %1776 = vmatprep.subr.mxu0 0.0
    %1777 = vmatpush1.msra.mxu0 0.0
    %1778 = vmatprep.subr.mxu0 0.0
    %1779 = vmatpush1.msra.mxu0 0.0
    %1780 = vmatprep.subr.mxu0 0.0
    %1781 = vmatpush1.msra.mxu0 0.0
    %1782 = vmatprep.subr.mxu0 0.0
    %1783 = vmatpush1.msra.mxu0 0.0
    %1784 = vmatprep.subr.mxu0 0.0
    %1785 = vmatpush1.msra.mxu0 0.0
    %1786 = vmatprep.subr.mxu0 0.0
    %1787 = vmatpush1.msra.mxu0 0.0
    %1788 = vmatprep.subr.mxu0 0.0
    %1789 = vmatpush1.msra.mxu0 0.0
    %1790 = vmatprep.subr.mxu0 0.0
    %1791 = vmatpush1.msra.mxu0 0.0
    %1792 = vmatprep.subr.mxu0 0.0
    %1793 = vmatpush1.msra.mxu0 0.0
    %1794 = vmatprep.subr.mxu0 0.0
    %1795 = vmatpush1.msra.mxu0 0.0
    %1796 = vmatprep.subr.mxu0 0.0
    %1797 = vmatpush1.msra.mxu0 0.0
    %1798 = vmatprep.subr.mxu0 0.0
    %1799 = vmatpush1.msra.mxu0 0.0
    %1800 = vmatprep.subr.mxu0 0.0
    %1801 = vmatpush1.msra.mxu0 0.0
    %1802 = vmatprep.subr.mxu0 0.0
    %1803 = vmatpush1.msra.mxu0 0.0
    %1804 = vmatprep.subr.mxu0 0.0
    %1805 = vmatpush1.msra.mxu0 0.0
    %1806 = vmatprep.subr.mxu0 0.0
    %1807 = vmatpush1.msra.mxu0 0.0
    %1808 = vmatprep.mubr.f32.mxu0 0.0
    %1809 = vmatmul.mubr.f32.gmra.mrb[0].mxu0 %v1742
    %v1810 = vpop.f32.mrb[0].mxu0
    %v1811 = vadd.f32 %v127, %v1810
    %v1812 = vpop.f32.mrb[0].mxu0
    %1813 = vdwg.mxu0
    %1814 = vmatprep.subr.mxu0 0.0
    %1815 = vmatpush1.msra.mxu0 %v1737
    %1816 = vmatprep.subr.mxu0 0.0
    %1817 = vmatpush1.msra.mxu0 %v1738
    %1818 = vmatprep.subr.mxu0 0.0
    %1819 = vmatpush1.msra.mxu0 %v1739
    %1820 = vmatprep.subr.mxu0 0.0
    %1821 = vmatpush1.msra.mxu0 %v1740
    %1822 = vmatprep.subr.mxu0 0.0
    %1823 = vmatpush1.msra.mxu0 0.0
    %1824 = vmatprep.subr.mxu0 0.0
    %1825 = vmatpush1.msra.mxu0 0.0
    %1826 = vmatprep.subr.mxu0 0.0
    %1827 = vmatpush1.msra.mxu0 0.0
    %1828 = vmatprep.subr.mxu0 0.0
    %1829 = vmatpush1.msra.mxu0 0.0
    %1830 = vmatprep.subr.mxu0 0.0
    %1831 = vmatpush1.msra.mxu0 0.0
    %1832 = vmatprep.subr.mxu0 0.0
    %1833 = vmatpush1.msra.mxu0 0.0
    %1834 = vmatprep.subr.mxu0 0.0
    %1835 = vmatpush1.msra.mxu0 0.0
    %1836 = vmatprep.subr.mxu0 0.0
    %1837 = vmatpush1.msra.mxu0 0.0
    %1838 = vmatprep.subr.mxu0 0.0
    %1839 = vmatpush1.msra.mxu0 0.0
    %1840 = vmatprep.subr.mxu0 0.0
    %1841 = vmatpush1.msra.mxu0 0.0
    %1842 = vmatprep.subr.mxu0 0.0
    %1843 = vmatpush1.msra.mxu0 0.0
    %1844 = vmatprep.subr.mxu0 0.0
    %1845 = vmatpush1.msra.mxu0 0.0
    %1846 = vmatprep.subr.mxu0 0.0
    %1847 = vmatpush1.msra.mxu0 0.0
    %1848 = vmatprep.subr.mxu0 0.0
    %1849 = vmatpush1.msra.mxu0 0.0
    %1850 = vmatprep.subr.mxu0 0.0
    %1851 = vmatpush1.msra.mxu0 0.0
    %1852 = vmatprep.subr.mxu0 0.0
    %1853 = vmatpush1.msra.mxu0 0.0
    %1854 = vmatprep.subr.mxu0 0.0
    %1855 = vmatpush1.msra.mxu0 0.0
    %1856 = vmatprep.subr.mxu0 0.0
    %1857 = vmatpush1.msra.mxu0 0.0
    %1858 = vmatprep.subr.mxu0 0.0
    %1859 = vmatpush1.msra.mxu0 0.0
    %1860 = vmatprep.subr.mxu0 0.0
    %1861 = vmatpush1.msra.mxu0 0.0
    %1862 = vmatprep.subr.mxu0 0.0
    %1863 = vmatpush1.msra.mxu0 0.0
    %1864 = vmatprep.subr.mxu0 0.0
    %1865 = vmatpush1.msra.mxu0 0.0
    %1866 = vmatprep.subr.mxu0 0.0
    %1867 = vmatpush1.msra.mxu0 0.0
    %1868 = vmatprep.subr.mxu0 0.0
    %1869 = vmatpush1.msra.mxu0 0.0
    %1870 = vmatprep.subr.mxu0 0.0
    %1871 = vmatpush1.msra.mxu0 0.0
    %1872 = vmatprep.subr.mxu0 0.0
    %1873 = vmatpush1.msra.mxu0 0.0
    %1874 = vmatprep.subr.mxu0 0.0
    %1875 = vmatpush1.msra.mxu0 0.0
    %1876 = vmatprep.subr.mxu0 0.0
    %1877 = vmatpush1.msra.mxu0 0.0
    %1878 = vmatprep.mubr.f32.mxu0 0.0
    %1879 = vmatmul.mubr.f32.gmra.mrb[0].mxu0 %v1644
    %v1880 = vpop.f32.mrb[0].mxu0
    %v1881 = vadd.f32 0.0, %v1880
    %v1882 = vpop.f32.mrb[0].mxu0
    %1883 = vdwg.mxu0
    %v1884 = vadd.f32 %v1811, %v1881
    %v1885 = vtanh.pop %v1884
    %1886 = vxpose.xlu0.b32.start [1/16] %v1570, 128
    %1887 = vxpose.xlu0.b32.cont [2/16] 0.0, 128
    %1888 = vxpose.xlu0.b32.cont [3/16] 0.0, 128
    %1889 = vxpose.xlu0.b32.cont [4/16] 0.0, 128
    %1890 = vxpose.xlu0.b32.cont [5/16] 0.0, 128
    %1891 = vxpose.xlu0.b32.cont [6/16] 0.0, 128
    %1892 = vxpose.xlu0.b32.cont [7/16] 0.0, 128
    %1893 = vxpose.xlu0.b32.cont [8/16] 0.0, 128
    %1894 = vxpose.xlu0.b32.cont [9/16] 0.0, 128
    %1895 = vxpose.xlu0.b32.cont [10/16] 0.0, 128
    %1896 = vxpose.xlu0.b32.cont [11/16] 0.0, 128
    %1897 = vxpose.xlu0.b32.cont [12/16] 0.0, 128
    %1898 = vxpose.xlu0.b32.cont [13/16] 0.0, 128
    %1899 = vxpose.xlu0.b32.cont [14/16] 0.0, 128
    %1900 = vxpose.xlu0.b32.cont [15/16] 0.0, 128
    %1901 = vxpose.xlu0.b32.end [16/16] 0.0, 128
    %v1902 = vpop.trf.xlu0
    %v1903 = vpop.trf.xlu0
    %v1904 = vpop.trf.xlu0
    %v1905 = vpop.trf.xlu0
    %v1906 = vpop.trf.xlu0
    %v1907 = vpop.trf.xlu0
    %v1908 = vpop.trf.xlu0
    %v1909 = vpop.trf.xlu0
    %v1910 = vpop.trf.xlu0
    %v1911 = vpop.trf.xlu0
    %v1912 = vpop.trf.xlu0
    %v1913 = vpop.trf.xlu0
    %v1914 = vpop.trf.xlu0
    %v1915 = vpop.trf.xlu0
    %v1916 = vpop.trf.xlu0
    %v1917 = vpop.trf.xlu0
    %v1918 = vmul.f32 %v341, %v1639
    %v1919 = vmul.f32 %v341, %v1640
    %v1920 = vmul.f32 %v341, %v1641
    %v1921 = vmul.f32 %v341, %v1642
    %1923 = vset.pattern.permute.xlu0 0
    %1924 = vperm.xlu0 %1923, %v1902
    %v1925 = vpop.permute.xlu0 %1924
    %1928 = vset.pattern.permute.xlu0 0
    %1929 = vperm.xlu0 %1928, %v1903
    %v1930 = vpop.permute.xlu0 %1929
    %1933 = vset.pattern.permute.xlu0 0
    %1934 = vperm.xlu0 %1933, %v1904
    %v1935 = vpop.permute.xlu0 %1934
    %1938 = vset.pattern.permute.xlu0 0
    %1939 = vperm.xlu0 %1938, %v1905
    %v1940 = vpop.permute.xlu0 %1939
    %v1942 = vlaneseq
    %v1943 = vshrl.u32 %v1942, 7
    %v1944 = vsub.s32 0, %v1943
    %v1945 = vrot.slane %v1885, %v1944
    %v1946 = vmul.f32 %v1925, %v1945
    %v1947 = vmul.f32 %v1930, %v1945
    %v1948 = vmul.f32 %v1935, %v1945
    %v1949 = vmul.f32 %v1940, %v1945
    %v1950 = vmul.f32 %v374, %v1946
    %v1951 = vmul.f32 %v374, %v1947
    %v1952 = vmul.f32 %v374, %v1948
    %v1953 = vmul.f32 %v374, %v1949
    %v1954 = vadd.f32 %v1918, %v1950
    %v1955 = vadd.f32 %v1919, %v1951
    %v1956 = vadd.f32 %v1920, %v1952
    %v1957 = vadd.f32 %v1921, %v1953
    %v1959 = vsel %vm233, %v1885, 0
    %1961 = vmatprep.subr.mxu0 0.0
    %1962 = vmatpush1.msra.mxu0 %v136
    %1963 = vmatprep.subr.mxu0 0.0
    %1964 = vmatpush1.msra.mxu0 %v137
    %1965 = vmatprep.subr.mxu0 0.0
    %1966 = vmatpush1.msra.mxu0 %v138
    %1967 = vmatprep.subr.mxu0 0.0
    %1968 = vmatpush1.msra.mxu0 %v139
    %1969 = vmatprep.subr.mxu0 0.0
    %1970 = vmatpush1.msra.mxu0 0.0
    %1971 = vmatprep.subr.mxu0 0.0
    %1972 = vmatpush1.msra.mxu0 0.0
    %1973 = vmatprep.subr.mxu0 0.0
    %1974 = vmatpush1.msra.mxu0 0.0
    %1975 = vmatprep.subr.mxu0 0.0
    %1976 = vmatpush1.msra.mxu0 0.0
    %1977 = vmatprep.subr.mxu0 0.0
    %1978 = vmatpush1.msra.mxu0 0.0
    %1979 = vmatprep.subr.mxu0 0.0
    %1980 = vmatpush1.msra.mxu0 0.0
    %1981 = vmatprep.subr.mxu0 0.0
    %1982 = vmatpush1.msra.mxu0 0.0
    %1983 = vmatprep.subr.mxu0 0.0
    %1984 = vmatpush1.msra.mxu0 0.0
    %1985 = vmatprep.subr.mxu0 0.0
    %1986 = vmatpush1.msra.mxu0 0.0
    %1987 = vmatprep.subr.mxu0 0.0
    %1988 = vmatpush1.msra.mxu0 0.0
    %1989 = vmatprep.subr.mxu0 0.0
    %1990 = vmatpush1.msra.mxu0 0.0
    %1991 = vmatprep.subr.mxu0 0.0
    %1992 = vmatpush1.msra.mxu0 0.0
    %1993 = vmatprep.subr.mxu0 0.0
    %1994 = vmatpush1.msra.mxu0 0.0
    %1995 = vmatprep.subr.mxu0 0.0
    %1996 = vmatpush1.msra.mxu0 0.0
    %1997 = vmatprep.subr.mxu0 0.0
    %1998 = vmatpush1.msra.mxu0 0.0
    %1999 = vmatprep.subr.mxu0 0.0
    %2000 = vmatpush1.msra.mxu0 0.0
    %2001 = vmatprep.subr.mxu0 0.0
    %2002 = vmatpush1.msra.mxu0 0.0
    %2003 = vmatprep.subr.mxu0 0.0
    %2004 = vmatpush1.msra.mxu0 0.0
    %2005 = vmatprep.subr.mxu0 0.0
    %2006 = vmatpush1.msra.mxu0 0.0
    %2007 = vmatprep.subr.mxu0 0.0
    %2008 = vmatpush1.msra.mxu0 0.0
    %2009 = vmatprep.subr.mxu0 0.0
    %2010 = vmatpush1.msra.mxu0 0.0
    %2011 = vmatprep.subr.mxu0 0.0
    %2012 = vmatpush1.msra.mxu0 0.0
    %2013 = vmatprep.subr.mxu0 0.0
    %2014 = vmatpush1.msra.mxu0 0.0
    %2015 = vmatprep.subr.mxu0 0.0
    %2016 = vmatpush1.msra.mxu0 0.0
    %2017 = vmatprep.subr.mxu0 0.0
    %2018 = vmatpush1.msra.mxu0 0.0
    %2019 = vmatprep.subr.mxu0 0.0
    %2020 = vmatpush1.msra.mxu0 0.0
    %2021 = vmatprep.subr.mxu0 0.0
    %2022 = vmatpush1.msra.mxu0 0.0
    %2023 = vmatprep.subr.mxu0 0.0
    %2024 = vmatpush1.msra.mxu0 0.0
    %2025 = vmatprep.mubr.f32.mxu0 0.0
    %2026 = vmatmul.mubr.f32.gmra.mrb[0].mxu0 %v1959
    %v2027 = vpop.f32.mrb[0].mxu0
    %v2028 = vadd.f32 %v140, %v2027
    %v2029 = vpop.f32.mrb[0].mxu0
    %2030 = vdwg.mxu0
    %v2031 = vsel %vm143, %v2028, -1e+30
    %v2032 = vsel %vm457, %v2031, -inf
    %2033 = vmax.xlane.f32.xlu0 %v2032
    %v2034 = vpop.xlane.xlu0 %2033
    %v2035 = vsub.f32 %v2031, %v2034
    %v2036 = vmul.f32 %v2035, 1.442695
    %v2037 = vpow.pop %v2036
    %v2038 = vsel %vm457, %v2037, 0.0
    %2039 = vadd.xlane.f32.xlu0 %v2038
    %v2040 = vpop.xlane.xlu0 %2039
    %v2041 = vrcp.pop %v2040
    %v2042 = vmul.f32 %v2037, %v2041
    %v2043 = vsel %vm144, %v2028, %v2042
    %s2044 = scalar_lea.vmem [#allocation14], 5
    %2045 = vst [vmem:[%s2044] sm:$0x1] %v2043
    %s2046 = scalar_lea.vmem [#allocation3], 6
    %v2047 = vld [vmem:[%s2046] sm:$0x1]
    %v2048 = vmul.f32 %v132, %v1954
    %v2049 = vmul.f32 %v133, %v1955
    %v2050 = vmul.f32 %v134, %v1956
    %v2051 = vmul.f32 %v135, %v1957
    %v2052 = vadd.f32 %v128, %v2048
    %v2053 = vadd.f32 %v129, %v2049
    %v2054 = vadd.f32 %v130, %v2050
    %v2055 = vadd.f32 %v131, %v2051
    %v2057 = vsel %vm159, %v2047, 0
    %2059 = vmatprep.subr.mxu0 0.0
    %2060 = vmatpush1.msra.mxu0 %v125
    %2061 = vmatprep.subr.mxu0 0.0
    %2062 = vmatpush1.msra.mxu0 %v126
    %2063 = vmatprep.subr.mxu0 0.0
    %2064 = vmatpush1.msra.mxu0 0.0
    %2065 = vmatprep.subr.mxu0 0.0
    %2066 = vmatpush1.msra.mxu0 0.0
    %2067 = vmatprep.subr.mxu0 0.0
    %2068 = vmatpush1.msra.mxu0 0.0
    %2069 = vmatprep.subr.mxu0 0.0
    %2070 = vmatpush1.msra.mxu0 0.0
    %2071 = vmatprep.subr.mxu0 0.0
    %2072 = vmatpush1.msra.mxu0 0.0
    %2073 = vmatprep.subr.mxu0 0.0
    %2074 = vmatpush1.msra.mxu0 0.0
    %2075 = vmatprep.subr.mxu0 0.0
    %2076 = vmatpush1.msra.mxu0 0.0
    %2077 = vmatprep.subr.mxu0 0.0
    %2078 = vmatpush1.msra.mxu0 0.0
    %2079 = vmatprep.subr.mxu0 0.0
    %2080 = vmatpush1.msra.mxu0 0.0
    %2081 = vmatprep.subr.mxu0 0.0
    %2082 = vmatpush1.msra.mxu0 0.0
    %2083 = vmatprep.subr.mxu0 0.0
    %2084 = vmatpush1.msra.mxu0 0.0
    %2085 = vmatprep.subr.mxu0 0.0
    %2086 = vmatpush1.msra.mxu0 0.0
    %2087 = vmatprep.subr.mxu0 0.0
    %2088 = vmatpush1.msra.mxu0 0.0
    %2089 = vmatprep.subr.mxu0 0.0
    %2090 = vmatpush1.msra.mxu0 0.0
    %2091 = vmatprep.subr.mxu0 0.0
    %2092 = vmatpush1.msra.mxu0 0.0
    %2093 = vmatprep.subr.mxu0 0.0
    %2094 = vmatpush1.msra.mxu0 0.0
    %2095 = vmatprep.subr.mxu0 0.0
    %2096 = vmatpush1.msra.mxu0 0.0
    %2097 = vmatprep.subr.mxu0 0.0
    %2098 = vmatpush1.msra.mxu0 0.0
    %2099 = vmatprep.subr.mxu0 0.0
    %2100 = vmatpush1.msra.mxu0 0.0
    %2101 = vmatprep.subr.mxu0 0.0
    %2102 = vmatpush1.msra.mxu0 0.0
    %2103 = vmatprep.subr.mxu0 0.0
    %2104 = vmatpush1.msra.mxu0 0.0
    %2105 = vmatprep.subr.mxu0 0.0
    %2106 = vmatpush1.msra.mxu0 0.0
    %2107 = vmatprep.subr.mxu0 0.0
    %2108 = vmatpush1.msra.mxu0 0.0
    %2109 = vmatprep.subr.mxu0 0.0
    %2110 = vmatpush1.msra.mxu0 0.0
    %2111 = vmatprep.subr.mxu0 0.0
    %2112 = vmatpush1.msra.mxu0 0.0
    %2113 = vmatprep.subr.mxu0 0.0
    %2114 = vmatpush1.msra.mxu0 0.0
    %2115 = vmatprep.subr.mxu0 0.0
    %2116 = vmatpush1.msra.mxu0 0.0
    %2117 = vmatprep.subr.mxu0 0.0
    %2118 = vmatpush1.msra.mxu0 0.0
    %2119 = vmatprep.subr.mxu0 0.0
    %2120 = vmatpush1.msra.mxu0 0.0
    %2121 = vmatprep.subr.mxu0 0.0
    %2122 = vmatpush1.msra.mxu0 0.0
    %2123 = vmatprep.mubr.f32.mxu0 0.0
    %2124 = vmatmul.mubr.f32.gmra.mrb[0].mxu0 %v2057
    %v2125 = vpop.f32.mrb[0].mxu0
    %v2126 = vadd.f32 %v127, %v2125
    %v2127 = vpop.f32.mrb[0].mxu0
    %2128 = vdwg.mxu0
    %2129 = vmatprep.subr.mxu0 0.0
    %2130 = vmatpush1.msra.mxu0 %v2052
    %2131 = vmatprep.subr.mxu0 0.0
    %2132 = vmatpush1.msra.mxu0 %v2053
    %2133 = vmatprep.subr.mxu0 0.0
    %2134 = vmatpush1.msra.mxu0 %v2054
    %2135 = vmatprep.subr.mxu0 0.0
    %2136 = vmatpush1.msra.mxu0 %v2055
    %2137 = vmatprep.subr.mxu0 0.0
    %2138 = vmatpush1.msra.mxu0 0.0
    %2139 = vmatprep.subr.mxu0 0.0
    %2140 = vmatpush1.msra.mxu0 0.0
    %2141 = vmatprep.subr.mxu0 0.0
    %2142 = vmatpush1.msra.mxu0 0.0
    %2143 = vmatprep.subr.mxu0 0.0
    %2144 = vmatpush1.msra.mxu0 0.0
    %2145 = vmatprep.subr.mxu0 0.0
    %2146 = vmatpush1.msra.mxu0 0.0
    %2147 = vmatprep.subr.mxu0 0.0
    %2148 = vmatpush1.msra.mxu0 0.0
    %2149 = vmatprep.subr.mxu0 0.0
    %2150 = vmatpush1.msra.mxu0 0.0
    %2151 = vmatprep.subr.mxu0 0.0
    %2152 = vmatpush1.msra.mxu0 0.0
    %2153 = vmatprep.subr.mxu0 0.0
    %2154 = vmatpush1.msra.mxu0 0.0
    %2155 = vmatprep.subr.mxu0 0.0
    %2156 = vmatpush1.msra.mxu0 0.0
    %2157 = vmatprep.subr.mxu0 0.0
    %2158 = vmatpush1.msra.mxu0 0.0
    %2159 = vmatprep.subr.mxu0 0.0
    %2160 = vmatpush1.msra.mxu0 0.0
    %2161 = vmatprep.subr.mxu0 0.0
    %2162 = vmatpush1.msra.mxu0 0.0
    %2163 = vmatprep.subr.mxu0 0.0
    %2164 = vmatpush1.msra.mxu0 0.0
    %2165 = vmatprep.subr.mxu0 0.0
    %2166 = vmatpush1.msra.mxu0 0.0
    %2167 = vmatprep.subr.mxu0 0.0
    %2168 = vmatpush1.msra.mxu0 0.0
    %2169 = vmatprep.subr.mxu0 0.0
    %2170 = vmatpush1.msra.mxu0 0.0
    %2171 = vmatprep.subr.mxu0 0.0
    %2172 = vmatpush1.msra.mxu0 0.0
    %2173 = vmatprep.subr.mxu0 0.0
    %2174 = vmatpush1.msra.mxu0 0.0
    %2175 = vmatprep.subr.mxu0 0.0
    %2176 = vmatpush1.msra.mxu0 0.0
    %2177 = vmatprep.subr.mxu0 0.0
    %2178 = vmatpush1.msra.mxu0 0.0
    %2179 = vmatprep.subr.mxu0 0.0
    %2180 = vmatpush1.msra.mxu0 0.0
    %2181 = vmatprep.subr.mxu0 0.0
    %2182 = vmatpush1.msra.mxu0 0.0
    %2183 = vmatprep.subr.mxu0 0.0
    %2184 = vmatpush1.msra.mxu0 0.0
    %2185 = vmatprep.subr.mxu0 0.0
    %2186 = vmatpush1.msra.mxu0 0.0
    %2187 = vmatprep.subr.mxu0 0.0
    %2188 = vmatpush1.msra.mxu0 0.0
    %2189 = vmatprep.subr.mxu0 0.0
    %2190 = vmatpush1.msra.mxu0 0.0
    %2191 = vmatprep.subr.mxu0 0.0
    %2192 = vmatpush1.msra.mxu0 0.0
    %2193 = vmatprep.mubr.f32.mxu0 0.0
    %2194 = vmatmul.mubr.f32.gmra.mrb[0].mxu0 %v1959
    %v2195 = vpop.f32.mrb[0].mxu0
    %v2196 = vadd.f32 0.0, %v2195
    %v2197 = vpop.f32.mrb[0].mxu0
    %2198 = vdwg.mxu0
    %v2199 = vadd.f32 %v2126, %v2196
    %v2200 = vtanh.pop %v2199
    %2201 = vxpose.xlu0.b32.start [1/16] %v1885, 128
    %2202 = vxpose.xlu0.b32.cont [2/16] 0.0, 128
    %2203 = vxpose.xlu0.b32.cont [3/16] 0.0, 128
    %2204 = vxpose.xlu0.b32.cont [4/16] 0.0, 128
    %2205 = vxpose.xlu0.b32.cont [5/16] 0.0, 128
    %2206 = vxpose.xlu0.b32.cont [6/16] 0.0, 128
    %2207 = vxpose.xlu0.b32.cont [7/16] 0.0, 128
    %2208 = vxpose.xlu0.b32.cont [8/16] 0.0, 128
    %2209 = vxpose.xlu0.b32.cont [9/16] 0.0, 128
    %2210 = vxpose.xlu0.b32.cont [10/16] 0.0, 128
    %2211 = vxpose.xlu0.b32.cont [11/16] 0.0, 128
    %2212 = vxpose.xlu0.b32.cont [12/16] 0.0, 128
    %2213 = vxpose.xlu0.b32.cont [13/16] 0.0, 128
    %2214 = vxpose.xlu0.b32.cont [14/16] 0.0, 128
    %2215 = vxpose.xlu0.b32.cont [15/16] 0.0, 128
    %2216 = vxpose.xlu0.b32.end [16/16] 0.0, 128
    %v2217 = vpop.trf.xlu0
    %v2218 = vpop.trf.xlu0
    %v2219 = vpop.trf.xlu0
    %v2220 = vpop.trf.xlu0
    %v2221 = vpop.trf.xlu0
    %v2222 = vpop.trf.xlu0
    %v2223 = vpop.trf.xlu0
    %v2224 = vpop.trf.xlu0
    %v2225 = vpop.trf.xlu0
    %v2226 = vpop.trf.xlu0
    %v2227 = vpop.trf.xlu0
    %v2228 = vpop.trf.xlu0
    %v2229 = vpop.trf.xlu0
    %v2230 = vpop.trf.xlu0
    %v2231 = vpop.trf.xlu0
    %v2232 = vpop.trf.xlu0
    %v2233 = vmul.f32 %v341, %v1954
    %v2234 = vmul.f32 %v341, %v1955
    %v2235 = vmul.f32 %v341, %v1956
    %v2236 = vmul.f32 %v341, %v1957
    %2238 = vset.pattern.permute.xlu0 0
    %2239 = vperm.xlu0 %2238, %v2217
    %v2240 = vpop.permute.xlu0 %2239
    %2243 = vset.pattern.permute.xlu0 0
    %2244 = vperm.xlu0 %2243, %v2218
    %v2245 = vpop.permute.xlu0 %2244
    %2248 = vset.pattern.permute.xlu0 0
    %2249 = vperm.xlu0 %2248, %v2219
    %v2250 = vpop.permute.xlu0 %2249
    %2253 = vset.pattern.permute.xlu0 0
    %2254 = vperm.xlu0 %2253, %v2220
    %v2255 = vpop.permute.xlu0 %2254
    %v2257 = vlaneseq
    %v2258 = vshrl.u32 %v2257, 7
    %v2259 = vsub.s32 0, %v2258
    %v2260 = vrot.slane %v2200, %v2259
    %v2261 = vmul.f32 %v2240, %v2260
    %v2262 = vmul.f32 %v2245, %v2260
    %v2263 = vmul.f32 %v2250, %v2260
    %v2264 = vmul.f32 %v2255, %v2260
    %v2265 = vmul.f32 %v374, %v2261
    %v2266 = vmul.f32 %v374, %v2262
    %v2267 = vmul.f32 %v374, %v2263
    %v2268 = vmul.f32 %v374, %v2264
    %v2269 = vadd.f32 %v2233, %v2265
    %v2270 = vadd.f32 %v2234, %v2266
    %v2271 = vadd.f32 %v2235, %v2267
    %v2272 = vadd.f32 %v2236, %v2268
    %v2274 = vsel %vm233, %v2200, 0
    %2276 = vmatprep.subr.mxu0 0.0
    %2277 = vmatpush1.msra.mxu0 %v136
    %2278 = vmatprep.subr.mxu0 0.0
    %2279 = vmatpush1.msra.mxu0 %v137
    %2280 = vmatprep.subr.mxu0 0.0
    %2281 = vmatpush1.msra.mxu0 %v138
    %2282 = vmatprep.subr.mxu0 0.0
    %2283 = vmatpush1.msra.mxu0 %v139
    %2284 = vmatprep.subr.mxu0 0.0
    %2285 = vmatpush1.msra.mxu0 0.0
    %2286 = vmatprep.subr.mxu0 0.0
    %2287 = vmatpush1.msra.mxu0 0.0
    %2288 = vmatprep.subr.mxu0 0.0
    %2289 = vmatpush1.msra.mxu0 0.0
    %2290 = vmatprep.subr.mxu0 0.0
    %2291 = vmatpush1.msra.mxu0 0.0
    %2292 = vmatprep.subr.mxu0 0.0
    %2293 = vmatpush1.msra.mxu0 0.0
    %2294 = vmatprep.subr.mxu0 0.0
    %2295 = vmatpush1.msra.mxu0 0.0
    %2296 = vmatprep.subr.mxu0 0.0
    %2297 = vmatpush1.msra.mxu0 0.0
    %2298 = vmatprep.subr.mxu0 0.0
    %2299 = vmatpush1.msra.mxu0 0.0
    %2300 = vmatprep.subr.mxu0 0.0
    %2301 = vmatpush1.msra.mxu0 0.0
    %2302 = vmatprep.subr.mxu0 0.0
    %2303 = vmatpush1.msra.mxu0 0.0
    %2304 = vmatprep.subr.mxu0 0.0
    %2305 = vmatpush1.msra.mxu0 0.0
    %2306 = vmatprep.subr.mxu0 0.0
    %2307 = vmatpush1.msra.mxu0 0.0
    %2308 = vmatprep.subr.mxu0 0.0
    %2309 = vmatpush1.msra.mxu0 0.0
    %2310 = vmatprep.subr.mxu0 0.0
    %2311 = vmatpush1.msra.mxu0 0.0
    %2312 = vmatprep.subr.mxu0 0.0
    %2313 = vmatpush1.msra.mxu0 0.0
    %2314 = vmatprep.subr.mxu0 0.0
    %2315 = vmatpush1.msra.mxu0 0.0
    %2316 = vmatprep.subr.mxu0 0.0
    %2317 = vmatpush1.msra.mxu0 0.0
    %2318 = vmatprep.subr.mxu0 0.0
    %2319 = vmatpush1.msra.mxu0 0.0
    %2320 = vmatprep.subr.mxu0 0.0
    %2321 = vmatpush1.msra.mxu0 0.0
    %2322 = vmatprep.subr.mxu0 0.0
    %2323 = vmatpush1.msra.mxu0 0.0
    %2324 = vmatprep.subr.mxu0 0.0
    %2325 = vmatpush1.msra.mxu0 0.0
    %2326 = vmatprep.subr.mxu0 0.0
    %2327 = vmatpush1.msra.mxu0 0.0
    %2328 = vmatprep.subr.mxu0 0.0
    %2329 = vmatpush1.msra.mxu0 0.0
    %2330 = vmatprep.subr.mxu0 0.0
    %2331 = vmatpush1.msra.mxu0 0.0
    %2332 = vmatprep.subr.mxu0 0.0
    %2333 = vmatpush1.msra.mxu0 0.0
    %2334 = vmatprep.subr.mxu0 0.0
    %2335 = vmatpush1.msra.mxu0 0.0
    %2336 = vmatprep.subr.mxu0 0.0
    %2337 = vmatpush1.msra.mxu0 0.0
    %2338 = vmatprep.subr.mxu0 0.0
    %2339 = vmatpush1.msra.mxu0 0.0
    %2340 = vmatprep.mubr.f32.mxu0 0.0
    %2341 = vmatmul.mubr.f32.gmra.mrb[0].mxu0 %v2274
    %v2342 = vpop.f32.mrb[0].mxu0
    %v2343 = vadd.f32 %v140, %v2342
    %v2344 = vpop.f32.mrb[0].mxu0
    %2345 = vdwg.mxu0
    %v2346 = vsel %vm143, %v2343, -1e+30
    %v2347 = vsel %vm457, %v2346, -inf
    %2348 = vmax.xlane.f32.xlu0 %v2347
    %v2349 = vpop.xlane.xlu0 %2348
    %v2350 = vsub.f32 %v2346, %v2349
    %v2351 = vmul.f32 %v2350, 1.442695
    %v2352 = vpow.pop %v2351
    %v2353 = vsel %vm457, %v2352, 0.0
    %2354 = vadd.xlane.f32.xlu0 %v2353
    %v2355 = vpop.xlane.xlu0 %2354
    %v2356 = vrcp.pop %v2355
    %v2357 = vmul.f32 %v2352, %v2356
    %v2358 = vsel %vm144, %v2343, %v2357
    %s2359 = scalar_lea.vmem [#allocation14], 6
    %2360 = vst [vmem:[%s2359] sm:$0x1] %v2358
    %s2361 = scalar_lea.vmem [#allocation3], 7
    %v2362 = vld [vmem:[%s2361] sm:$0x1]
    %v2363 = vmul.f32 %v132, %v2269
    %v2364 = vmul.f32 %v133, %v2270
    %v2365 = vmul.f32 %v134, %v2271
    %v2366 = vmul.f32 %v135, %v2272
    %v2367 = vadd.f32 %v128, %v2363
    %v2368 = vadd.f32 %v129, %v2364
    %v2369 = vadd.f32 %v130, %v2365
    %v2370 = vadd.f32 %v131, %v2366
    %v2372 = vsel %vm159, %v2362, 0
    %2374 = vmatprep.subr.mxu0 0.0
    %2375 = vmatpush1.msra.mxu0 %v125
    %2376 = vmatprep.subr.mxu0 0.0
    %2377 = vmatpush1.msra.mxu0 %v126
    %2378 = vmatprep.subr.mxu0 0.0
    %2379 = vmatpush1.msra.mxu0 0.0
    %2380 = vmatprep.subr.mxu0 0.0
    %2381 = vmatpush1.msra.mxu0 0.0
    %2382 = vmatprep.subr.mxu0 0.0
    %2383 = vmatpush1.msra.mxu0 0.0
    %2384 = vmatprep.subr.mxu0 0.0
    %2385 = vmatpush1.msra.mxu0 0.0
    %2386 = vmatprep.subr.mxu0 0.0
    %2387 = vmatpush1.msra.mxu0 0.0
    %2388 = vmatprep.subr.mxu0 0.0
    %2389 = vmatpush1.msra.mxu0 0.0
    %2390 = vmatprep.subr.mxu0 0.0
    %2391 = vmatpush1.msra.mxu0 0.0
    %2392 = vmatprep.subr.mxu0 0.0
    %2393 = vmatpush1.msra.mxu0 0.0
    %2394 = vmatprep.subr.mxu0 0.0
    %2395 = vmatpush1.msra.mxu0 0.0
    %2396 = vmatprep.subr.mxu0 0.0
    %2397 = vmatpush1.msra.mxu0 0.0
    %2398 = vmatprep.subr.mxu0 0.0
    %2399 = vmatpush1.msra.mxu0 0.0
    %2400 = vmatprep.subr.mxu0 0.0
    %2401 = vmatpush1.msra.mxu0 0.0
    %2402 = vmatprep.subr.mxu0 0.0
    %2403 = vmatpush1.msra.mxu0 0.0
    %2404 = vmatprep.subr.mxu0 0.0
    %2405 = vmatpush1.msra.mxu0 0.0
    %2406 = vmatprep.subr.mxu0 0.0
    %2407 = vmatpush1.msra.mxu0 0.0
    %2408 = vmatprep.subr.mxu0 0.0
    %2409 = vmatpush1.msra.mxu0 0.0
    %2410 = vmatprep.subr.mxu0 0.0
    %2411 = vmatpush1.msra.mxu0 0.0
    %2412 = vmatprep.subr.mxu0 0.0
    %2413 = vmatpush1.msra.mxu0 0.0
    %2414 = vmatprep.subr.mxu0 0.0
    %2415 = vmatpush1.msra.mxu0 0.0
    %2416 = vmatprep.subr.mxu0 0.0
    %2417 = vmatpush1.msra.mxu0 0.0
    %2418 = vmatprep.subr.mxu0 0.0
    %2419 = vmatpush1.msra.mxu0 0.0
    %2420 = vmatprep.subr.mxu0 0.0
    %2421 = vmatpush1.msra.mxu0 0.0
    %2422 = vmatprep.subr.mxu0 0.0
    %2423 = vmatpush1.msra.mxu0 0.0
    %2424 = vmatprep.subr.mxu0 0.0
    %2425 = vmatpush1.msra.mxu0 0.0
    %2426 = vmatprep.subr.mxu0 0.0
    %2427 = vmatpush1.msra.mxu0 0.0
    %2428 = vmatprep.subr.mxu0 0.0
    %2429 = vmatpush1.msra.mxu0 0.0
    %2430 = vmatprep.subr.mxu0 0.0
    %2431 = vmatpush1.msra.mxu0 0.0
    %2432 = vmatprep.subr.mxu0 0.0
    %2433 = vmatpush1.msra.mxu0 0.0
    %2434 = vmatprep.subr.mxu0 0.0
    %2435 = vmatpush1.msra.mxu0 0.0
    %2436 = vmatprep.subr.mxu0 0.0
    %2437 = vmatpush1.msra.mxu0 0.0
    %2438 = vmatprep.mubr.f32.mxu0 0.0
    %2439 = vmatmul.mubr.f32.gmra.mrb[0].mxu0 %v2372
    %v2440 = vpop.f32.mrb[0].mxu0
    %v2441 = vadd.f32 %v127, %v2440
    %v2442 = vpop.f32.mrb[0].mxu0
    %2443 = vdwg.mxu0
    %2444 = vmatprep.subr.mxu0 0.0
    %2445 = vmatpush1.msra.mxu0 %v2367
    %2446 = vmatprep.subr.mxu0 0.0
    %2447 = vmatpush1.msra.mxu0 %v2368
    %2448 = vmatprep.subr.mxu0 0.0
    %2449 = vmatpush1.msra.mxu0 %v2369
    %2450 = vmatprep.subr.mxu0 0.0
    %2451 = vmatpush1.msra.mxu0 %v2370
    %2452 = vmatprep.subr.mxu0 0.0
    %2453 = vmatpush1.msra.mxu0 0.0
    %2454 = vmatprep.subr.mxu0 0.0
    %2455 = vmatpush1.msra.mxu0 0.0
    %2456 = vmatprep.subr.mxu0 0.0
    %2457 = vmatpush1.msra.mxu0 0.0
    %2458 = vmatprep.subr.mxu0 0.0
    %2459 = vmatpush1.msra.mxu0 0.0
    %2460 = vmatprep.subr.mxu0 0.0
    %2461 = vmatpush1.msra.mxu0 0.0
    %2462 = vmatprep.subr.mxu0 0.0
    %2463 = vmatpush1.msra.mxu0 0.0
    %2464 = vmatprep.subr.mxu0 0.0
    %2465 = vmatpush1.msra.mxu0 0.0
    %2466 = vmatprep.subr.mxu0 0.0
    %2467 = vmatpush1.msra.mxu0 0.0
    %2468 = vmatprep.subr.mxu0 0.0
    %2469 = vmatpush1.msra.mxu0 0.0
    %2470 = vmatprep.subr.mxu0 0.0
    %2471 = vmatpush1.msra.mxu0 0.0
    %2472 = vmatprep.subr.mxu0 0.0
    %2473 = vmatpush1.msra.mxu0 0.0
    %2474 = vmatprep.subr.mxu0 0.0
    %2475 = vmatpush1.msra.mxu0 0.0
    %2476 = vmatprep.subr.mxu0 0.0
    %2477 = vmatpush1.msra.mxu0 0.0
    %2478 = vmatprep.subr.mxu0 0.0
    %2479 = vmatpush1.msra.mxu0 0.0
    %2480 = vmatprep.subr.mxu0 0.0
    %2481 = vmatpush1.msra.mxu0 0.0
    %2482 = vmatprep.subr.mxu0 0.0
    %2483 = vmatpush1.msra.mxu0 0.0
    %2484 = vmatprep.subr.mxu0 0.0
    %2485 = vmatpush1.msra.mxu0 0.0
    %2486 = vmatprep.subr.mxu0 0.0
    %2487 = vmatpush1.msra.mxu0 0.0
    %2488 = vmatprep.subr.mxu0 0.0
    %2489 = vmatpush1.msra.mxu0 0.0
    %2490 = vmatprep.subr.mxu0 0.0
    %2491 = vmatpush1.msra.mxu0 0.0
    %2492 = vmatprep.subr.mxu0 0.0
    %2493 = vmatpush1.msra.mxu0 0.0
    %2494 = vmatprep.subr.mxu0 0.0
    %2495 = vmatpush1.msra.mxu0 0.0
    %2496 = vmatprep.subr.mxu0 0.0
    %2497 = vmatpush1.msra.mxu0 0.0
    %2498 = vmatprep.subr.mxu0 0.0
    %2499 = vmatpush1.msra.mxu0 0.0
    %2500 = vmatprep.subr.mxu0 0.0
    %2501 = vmatpush1.msra.mxu0 0.0
    %2502 = vmatprep.subr.mxu0 0.0
    %2503 = vmatpush1.msra.mxu0 0.0
    %2504 = vmatprep.subr.mxu0 0.0
    %2505 = vmatpush1.msra.mxu0 0.0
    %2506 = vmatprep.subr.mxu0 0.0
    %2507 = vmatpush1.msra.mxu0 0.0
    %2508 = vmatprep.mubr.f32.mxu0 0.0
    %2509 = vmatmul.mubr.f32.gmra.mrb[0].mxu0 %v2274
    %v2510 = vpop.f32.mrb[0].mxu0
    %v2511 = vadd.f32 0.0, %v2510
    %v2512 = vpop.f32.mrb[0].mxu0
    %2513 = vdwg.mxu0
    %v2514 = vadd.f32 %v2441, %v2511
    %v2515 = vtanh.pop %v2514
    %2516 = vxpose.xlu0.b32.start [1/16] %v2200, 128
    %2517 = vxpose.xlu0.b32.cont [2/16] 0.0, 128
    %2518 = vxpose.xlu0.b32.cont [3/16] 0.0, 128
    %2519 = vxpose.xlu0.b32.cont [4/16] 0.0, 128
    %2520 = vxpose.xlu0.b32.cont [5/16] 0.0, 128
    %2521 = vxpose.xlu0.b32.cont [6/16] 0.0, 128
    %2522 = vxpose.xlu0.b32.cont [7/16] 0.0, 128
    %2523 = vxpose.xlu0.b32.cont [8/16] 0.0, 128
    %2524 = vxpose.xlu0.b32.cont [9/16] 0.0, 128
    %2525 = vxpose.xlu0.b32.cont [10/16] 0.0, 128
    %2526 = vxpose.xlu0.b32.cont [11/16] 0.0, 128
    %2527 = vxpose.xlu0.b32.cont [12/16] 0.0, 128
    %2528 = vxpose.xlu0.b32.cont [13/16] 0.0, 128
    %2529 = vxpose.xlu0.b32.cont [14/16] 0.0, 128
    %2530 = vxpose.xlu0.b32.cont [15/16] 0.0, 128
    %2531 = vxpose.xlu0.b32.end [16/16] 0.0, 128
    %v2532 = vpop.trf.xlu0
    %v2533 = vpop.trf.xlu0
    %v2534 = vpop.trf.xlu0
    %v2535 = vpop.trf.xlu0
    %v2536 = vpop.trf.xlu0
    %v2537 = vpop.trf.xlu0
    %v2538 = vpop.trf.xlu0
    %v2539 = vpop.trf.xlu0
    %v2540 = vpop.trf.xlu0
    %v2541 = vpop.trf.xlu0
    %v2542 = vpop.trf.xlu0
    %v2543 = vpop.trf.xlu0
    %v2544 = vpop.trf.xlu0
    %v2545 = vpop.trf.xlu0
    %v2546 = vpop.trf.xlu0
    %v2547 = vpop.trf.xlu0
    %v2548 = vmul.f32 %v341, %v2269
    %v2549 = vmul.f32 %v341, %v2270
    %v2550 = vmul.f32 %v341, %v2271
    %v2551 = vmul.f32 %v341, %v2272
    %2553 = vset.pattern.permute.xlu0 0
    %2554 = vperm.xlu0 %2553, %v2532
    %v2555 = vpop.permute.xlu0 %2554
    %2558 = vset.pattern.permute.xlu0 0
    %2559 = vperm.xlu0 %2558, %v2533
    %v2560 = vpop.permute.xlu0 %2559
    %2563 = vset.pattern.permute.xlu0 0
    %2564 = vperm.xlu0 %2563, %v2534
    %v2565 = vpop.permute.xlu0 %2564
    %2568 = vset.pattern.permute.xlu0 0
    %2569 = vperm.xlu0 %2568, %v2535
    %v2570 = vpop.permute.xlu0 %2569
    %v2572 = vlaneseq
    %v2573 = vshrl.u32 %v2572, 7
    %v2574 = vsub.s32 0, %v2573
    %v2575 = vrot.slane %v2515, %v2574
    %v2576 = vmul.f32 %v2555, %v2575
    %v2577 = vmul.f32 %v2560, %v2575
    %v2578 = vmul.f32 %v2565, %v2575
    %v2579 = vmul.f32 %v2570, %v2575
    %v2580 = vmul.f32 %v374, %v2576
    %v2581 = vmul.f32 %v374, %v2577
    %v2582 = vmul.f32 %v374, %v2578
    %v2583 = vmul.f32 %v374, %v2579
    %v2584 = vadd.f32 %v2548, %v2580
    %v2585 = vadd.f32 %v2549, %v2581
    %v2586 = vadd.f32 %v2550, %v2582
    %v2587 = vadd.f32 %v2551, %v2583
    %v2589 = vsel %vm233, %v2515, 0
    %2591 = vmatprep.subr.mxu0 0.0
    %2592 = vmatpush1.msra.mxu0 %v136
    %2593 = vmatprep.subr.mxu0 0.0
    %2594 = vmatpush1.msra.mxu0 %v137
    %2595 = vmatprep.subr.mxu0 0.0
    %2596 = vmatpush1.msra.mxu0 %v138
    %2597 = vmatprep.subr.mxu0 0.0
    %2598 = vmatpush1.msra.mxu0 %v139
    %2599 = vmatprep.subr.mxu0 0.0
    %2600 = vmatpush1.msra.mxu0 0.0
    %2601 = vmatprep.subr.mxu0 0.0
    %2602 = vmatpush1.msra.mxu0 0.0
    %2603 = vmatprep.subr.mxu0 0.0
    %2604 = vmatpush1.msra.mxu0 0.0
    %2605 = vmatprep.subr.mxu0 0.0
    %2606 = vmatpush1.msra.mxu0 0.0
    %2607 = vmatprep.subr.mxu0 0.0
    %2608 = vmatpush1.msra.mxu0 0.0
    %2609 = vmatprep.subr.mxu0 0.0
    %2610 = vmatpush1.msra.mxu0 0.0
    %2611 = vmatprep.subr.mxu0 0.0
    %2612 = vmatpush1.msra.mxu0 0.0
    %2613 = vmatprep.subr.mxu0 0.0
    %2614 = vmatpush1.msra.mxu0 0.0
    %2615 = vmatprep.subr.mxu0 0.0
    %2616 = vmatpush1.msra.mxu0 0.0
    %2617 = vmatprep.subr.mxu0 0.0
    %2618 = vmatpush1.msra.mxu0 0.0
    %2619 = vmatprep.subr.mxu0 0.0
    %2620 = vmatpush1.msra.mxu0 0.0
    %2621 = vmatprep.subr.mxu0 0.0
    %2622 = vmatpush1.msra.mxu0 0.0
    %2623 = vmatprep.subr.mxu0 0.0
    %2624 = vmatpush1.msra.mxu0 0.0
    %2625 = vmatprep.subr.mxu0 0.0
    %2626 = vmatpush1.msra.mxu0 0.0
    %2627 = vmatprep.subr.mxu0 0.0
    %2628 = vmatpush1.msra.mxu0 0.0
    %2629 = vmatprep.subr.mxu0 0.0
    %2630 = vmatpush1.msra.mxu0 0.0
    %2631 = vmatprep.subr.mxu0 0.0
    %2632 = vmatpush1.msra.mxu0 0.0
    %2633 = vmatprep.subr.mxu0 0.0
    %2634 = vmatpush1.msra.mxu0 0.0
    %2635 = vmatprep.subr.mxu0 0.0
    %2636 = vmatpush1.msra.mxu0 0.0
    %2637 = vmatprep.subr.mxu0 0.0
    %2638 = vmatpush1.msra.mxu0 0.0
    %2639 = vmatprep.subr.mxu0 0.0
    %2640 = vmatpush1.msra.mxu0 0.0
    %2641 = vmatprep.subr.mxu0 0.0
    %2642 = vmatpush1.msra.mxu0 0.0
    %2643 = vmatprep.subr.mxu0 0.0
    %2644 = vmatpush1.msra.mxu0 0.0
    %2645 = vmatprep.subr.mxu0 0.0
    %2646 = vmatpush1.msra.mxu0 0.0
    %2647 = vmatprep.subr.mxu0 0.0
    %2648 = vmatpush1.msra.mxu0 0.0
    %2649 = vmatprep.subr.mxu0 0.0
    %2650 = vmatpush1.msra.mxu0 0.0
    %2651 = vmatprep.subr.mxu0 0.0
    %2652 = vmatpush1.msra.mxu0 0.0
    %2653 = vmatprep.subr.mxu0 0.0
    %2654 = vmatpush1.msra.mxu0 0.0
    %2655 = vmatprep.mubr.f32.mxu0 0.0
    %2656 = vmatmul.mubr.f32.gmra.mrb[0].mxu0 %v2589
    %v2657 = vpop.f32.mrb[0].mxu0
    %v2658 = vadd.f32 %v140, %v2657
    %v2659 = vpop.f32.mrb[0].mxu0
    %2660 = vdwg.mxu0
    %v2661 = vsel %vm143, %v2658, -1e+30
    %v2662 = vsel %vm457, %v2661, -inf
    %2663 = vmax.xlane.f32.xlu0 %v2662
    %v2664 = vpop.xlane.xlu0 %2663
    %v2665 = vsub.f32 %v2661, %v2664
    %v2666 = vmul.f32 %v2665, 1.442695
    %v2667 = vpow.pop %v2666
    %v2668 = vsel %vm457, %v2667, 0.0
    %2669 = vadd.xlane.f32.xlu0 %v2668
    %v2670 = vpop.xlane.xlu0 %2669
    %v2671 = vrcp.pop %v2670
    %v2672 = vmul.f32 %v2667, %v2671
    %v2673 = vsel %vm144, %v2658, %v2672
    %s2674 = scalar_lea.vmem [#allocation14], 7
    %2675 = vst [vmem:[%s2674] sm:$0x1] %v2673
    %vm2676 = vcmask 253952
    %2677 = vst.msk [vmem:[#allocation15] sm:$0x1] %vm2676, %v2515
    %2678 = vst.msk [vmem:[#allocation17] sm:$0xff] %vm233, %v2584
    %2679 = vst.msk [vmem:[#allocation17 + $0x8] sm:$0xff] %vm233, %v2585
    %2680 = vst.msk [vmem:[#allocation17 + $0x10] sm:$0xff] %vm233, %v2586
    %2681 = vst.msk [vmem:[#allocation17 + $0x18] sm:$0xff] %vm233, %v2587
    // Predicated region
    $region66: #{tpu_custom_call.1} parent=1 // pred_check
      _
    $region67: #{tpu_custom_call.1} parent=1 // pred_check_branch
      %2683 = sbr.rel (0) target = $region69
    $region68: #{tpu_custom_call.1} parent=1 // pred_region
      %s2685 = ssub.s32 128, 128
      %2686 = vsyncadd [#allocation5], %s2685
      %s2687 = sshll.u32 [#allocation14], 4
      %s2688 = int_to_ptr.vmem [resolvable:$true] %s2687
      %2693 = dma.vmem_to_hbm [thread:$0]  %s2688, 128, %s10, [#allocation5], 16, 16, 1
    $region69: #{tpu_custom_call.1} parent=1 // pred_fallthru
      _
    // Predicated region
    $region70: #{tpu_custom_call.1} parent=1 // pred_check
      _
    $region71: #{tpu_custom_call.1} parent=1 // pred_check_branch
      %2695 = sbr.rel (0) target = $region73
    $region72: #{tpu_custom_call.1} parent=1 // pred_region
      %s2697 = ssub.s32 16, 16
      %2698 = vsyncadd [#allocation16], %s2697
      %s2700 = sshll.u32 [#allocation15], 4
      %s2701 = int_to_ptr.vmem [resolvable:$true] %s2700
      %2703 = dma.vmem_to_hbm [thread:$0]  %s2701, 16, %s11, [#allocation16]
    $region73: #{tpu_custom_call.1} parent=1 // pred_fallthru
      _
    // Predicated region
    $region74: #{tpu_custom_call.1} parent=1 // pred_check
      _
    $region75: #{tpu_custom_call.1} parent=1 // pred_check_branch
      %2705 = sbr.rel (0) target = $region77
    $region76: #{tpu_custom_call.1} parent=1 // pred_region
      %s2707 = ssub.s32 512, 512
      %2708 = vsyncadd [#allocation16], %s2707
      %s2709 = sshll.u32 [#allocation17], 4
      %s2710 = int_to_ptr.vmem [resolvable:$true] %s2709
      %2715 = dma.vmem_to_hbm [thread:$0]  %s2710, 512, %s12, [#allocation16], 128, 128, 8
    $region77: #{tpu_custom_call.1} parent=1 // pred_fallthru
      _
    // Predicated region
    $region78: #{tpu_custom_call.1} parent=1 // pred_check
      _
    $region79: #{tpu_custom_call.1} parent=1 // pred_check_branch
      %2717 = sbr.rel (0) target = $region81
    $region80: #{tpu_custom_call.1} parent=1 // pred_region
      %2718 = dma.done [#allocation5], 128
    $region81: #{tpu_custom_call.1} parent=1 // pred_fallthru
      _
    // Predicated region
    $region82: #{tpu_custom_call.1} parent=1 // pred_check
      _
    $region83: #{tpu_custom_call.1} parent=1 // pred_check_branch
      %2720 = sbr.rel (0) target = $region85
    $region84: #{tpu_custom_call.1} parent=1 // pred_region
      %2721 = dma.done [#allocation16], 16
    $region85: #{tpu_custom_call.1} parent=1 // pred_fallthru
      _
    // Predicated region
    $region86: #{tpu_custom_call.1} parent=1 // pred_check
      _
    $region87: #{tpu_custom_call.1} parent=1 // pred_check_branch
      %2723 = sbr.rel (0) target = $region89
    $region88: #{tpu_custom_call.1} parent=1 // pred_region
      %2724 = dma.done [#allocation16], 512
    $region89: #{tpu_custom_call.1} parent=1 // pred_fallthru
      _
    %2725 = vsyncpa [#allocation4], 1
    %2726 = vsyncpa [#allocation7], 1
    %2727 = vsyncpa [#allocation10], 1
    %2728 = vsyncpa [#allocation13], 1
    %2729 = vsyncpa [#allocation5], 1
    %2730 = vsyncpa [#allocation16], 1

</llo_original>
